<compile_context>
chip_gen: v7x
topology: tpu7x:2x2x1
jax: 0.10.0
libtpu: 0.0.40
codegen_flags: <defaults>
</compile_context>

<pallas_src>
import jax
import jax.numpy as jnp
from jax.experimental import pallas as pl
from jax.experimental.pallas import tpu as pltpu

KH = KW = 16                 # conv kernel size
C_OUT = 32                   # conv output channels
H = W = 28                   # implied input spatial size (28-16+1=13, 32*13*13=5408)
OH = OW = H - KH + 1         # 13
N_PATCH = OH * OW            # 169
P_PAD = 176                  # 169 padded up to a multiple of 8 (sublane tile)
N_FLAT = C_OUT * N_PATCH     # 5408
NOUT_PAD = 128               # linear output padded to one full lane tile

# Set to jnp.bfloat16 on v6e/v7x for higher MXU throughput (accumulation stays
# f32 via preferred_element_type); relax the verification tolerance if you do.
COMPUTE_DTYPE = jnp.float32


# ----------------------------- fused Pallas kernel ------------------------- #

def fused_forward_kernel(pt_ref, cw_ref, cb_ref, lw_ref, lb_ref, o_ref):
    # pt_ref: (1, 256, P_PAD)   im2col patches of one sample, (k, p) layout
    # cw_ref: (32, 256)         conv weight, row c = flattened (kh, kw) filter
    # cb_ref: (32, 1)           conv bias (broadcast over patch positions)
    # lw_ref: (32, P_PAD, 128)  linear weight  W3[c, p, o] = lin_w[o, c*169 + p]
    # lb_ref: (1, 128)          linear bias (zero-padded to 128)
    # o_ref : (1, 1, 128)       padded logits for this sample
    patches_t = pt_ref[0]                                      # (256, P_PAD)

    # Conv2d(1, 32, k=16) as one MXU matmul + bias + ReLU, kept entirely in VMEM.
    h = jnp.dot(cw_ref[...], patches_t,
                preferred_element_type=jnp.float32)            # (32, P_PAD)
    h = jnp.maximum(h + cb_ref[...], 0.0)
    # Padded patch columns (p >= 169) hold relu(bias) != 0, but their linear
    # weight rows are zero, so they contribute nothing below.

    # Flatten + Linear: contract over (c, p) without reshaping the activation,
    # as a channel-batched MXU matmul (32, 1, P_PAD) x (32, P_PAD, 128).
    h = h.astype(lw_ref.dtype)
    acc = jnp.einsum("cqp,cpo->cqo", h[:, None, :], lw_ref[...],
                     preferred_element_type=jnp.float32)       # (32, 1, 128)
    o_ref[0] = jnp.sum(acc, axis=0) + lb_ref[...]              # (1, 128)


def fused_forward(patches_t, conv_w2d, conv_b_col, lin_w3, lin_b_row):
    n = patches_t.shape[0]
    return pl.pallas_call(
        fused_forward_kernel,
        out_shape=jax.ShapeDtypeStruct((n, 1, NOUT_PAD), jnp.float32),
        grid=(n,),
        in_specs=[
            pl.BlockSpec((1, KH * KW, P_PAD), lambda s: (s, 0, 0)),
            pl.BlockSpec((C_OUT, KH * KW), lambda s: (0, 0)),
            pl.BlockSpec((C_OUT, 1), lambda s: (0, 0)),
            pl.BlockSpec((C_OUT, P_PAD, NOUT_PAD), lambda s: (0, 0, 0)),
            pl.BlockSpec((1, NOUT_PAD), lambda s: (0, 0)),
        ],
        out_specs=pl.BlockSpec((1, 1, NOUT_PAD), lambda s: (s, 0, 0)),
        compiler_params=pltpu.CompilerParams(
            dimension_semantics=("parallel",),      # shard batch across TCs (v7x)
            vmem_limit_bytes=32 * 1024 * 1024,      # explicit, fits all of v5e/v6e/v7x
        ),
    )(patches_t, conv_w2d, conv_b_col, lin_w3, lin_b_row)


# ------------------------------ wrapper / params ---------------------------- #

def forward(x, params, n_output):
    conv_w2d, conv_b_col, lin_w3, lin_b_row = params
    n = x.shape[0]

    # im2col via a single XLA op: (N, 1, 28, 28) -> (N, 256, 13, 13); feature
    # index is kh*16 + kw, matching conv_w.reshape(32, 256) column order.
    pt = jax.lax.conv_general_dilated_patches(
        x, filter_shape=(KH, KW), window_strides=(1, 1), padding="VALID",
        dimension_numbers=("NCHW", "OIHW", "NCHW"))
    pt = pt.reshape(n, KH * KW, N_PATCH)
    pt = jnp.pad(pt, ((0, 0), (0, 0), (0, P_PAD - N_PATCH)))    # (N, 256, 176)
    # TODO(synk): forming the patches inside the kernel from the raw 28x28 image
    # (3 KiB/sample) would avoid materializing this ~176 KiB/sample tensor in HBM.

    if COMPUTE_DTYPE != jnp.float32:
        pt = pt.astype(COMPUTE_DTYPE)
        conv_w2d = conv_w2d.astype(COMPUTE_DTYPE)
        lin_w3 = lin_w3.astype(COMPUTE_DTYPE)

    out = fused_forward(pt, conv_w2d, conv_b_col, lin_w3, lin_b_row)  # (N, 1, 128)
    return out.reshape(n, NOUT_PAD)[:, :n_output]


def init_params(key, n_output):
    assert n_output <= NOUT_PAD
    k1, k2, k3, k4 = jax.random.split(key, 4)
    # PyTorch-style uniform init bounds (deterministic, synthetic).
    b_conv = 1.0 / jnp.sqrt(jnp.float32(KH * KW))
    conv_w = jax.random.uniform(k1, (C_OUT, 1, KH, KW), jnp.float32, -b_conv, b_conv)
    conv_b = jax.random.uniform(k2, (C_OUT,), jnp.float32, -b_conv, b_conv)
    b_lin = 1.0 / jnp.sqrt(jnp.float32(N_FLAT))
    lin_w = jax.random.uniform(k3, (n_output, N_FLAT), jnp.float32, -b_lin, b_lin)
    lin_b = jax.random.uniform(k4, (n_output,), jnp.float32, -b_lin, b_lin)

    # ---- pre-packed kernel parameters (all re-layouts hoisted out of forward) ----
    conv_w2d = conv_w.reshape(C_OUT, KH * KW)                   # (32, 256)
    conv_b_col = conv_b.reshape(C_OUT, 1)                       # (32, 1)
    # PyTorch flatten index is c*169 + p  ->  W3[c, p, o] = lin_w[o, c*169 + p],
    # zero-padded to p < 176 and o < 128 (padded rows/cols are exactly zero).
    lin_w3 = lin_w.reshape(n_output, C_OUT, N_PATCH).transpose(1, 2, 0)
    lin_w3 = jnp.pad(lin_w3, ((0, 0), (0, P_PAD - N_PATCH), (0, NOUT_PAD - n_output)))
    lin_b_row = jnp.pad(lin_b, (0, NOUT_PAD - n_output)).reshape(1, NOUT_PAD)

    packed = (conv_w2d, conv_b_col, lin_w3, lin_b_row)
    torch_like = (conv_w, conv_b, lin_w, lin_b)
    return packed, torch_like


def reference_forward(x, conv_w, conv_b, lin_w, lin_b):
    # Pure-JAX reference matching PyTorch semantics (NCHW conv + flatten + linear).
    y = jax.lax.conv_general_dilated(
        x, conv_w, window_strides=(1, 1), padding="VALID",
        dimension_numbers=("NCHW", "OIHW", "NCHW"))
    y = jnp.maximum(y + conv_b.reshape(1, C_OUT, 1, 1), 0.0)
    y = y.reshape(x.shape[0], -1)                               # (N, 5408), c-major
    return y @ lin_w.T + lin_b


if __name__ == "__main__":
    n_output = 10  # nHidden / nInput are unused by the reference forward pass

    key = jax.random.PRNGKey(0)
    kx, kp = jax.random.split(key)
    x = jax.random.normal(kx, (2, 1, H, W), jnp.float32)        # small batch = 2

    packed, torch_params = init_params(kp, n_output)

    fwd = jax.jit(forward, static_argnums=(2,))
    logits = jax.block_until_ready(fwd(x, packed, n_output))

    ref = reference_forward(x, *torch_params)
    assert logits.shape == (2, n_output)
    err = float(jnp.max(jnp.abs(logits - ref)))
    assert err < 2e-3, f"mismatch vs reference: max abs err {err}"

    print("KERNEL_OK")
</pallas_src>

<mosaic_0001>
module attributes {stable_mosaic.version = 11 : i64} {
  func.func @fused_forward_kernel(%arg0: i32, %arg1: memref<1x256x176xf32, #tpu.memory_space<vmem>>, %arg2: memref<32x256xf32, #tpu.memory_space<vmem>>, %arg3: memref<32x1xf32, #tpu.memory_space<vmem>>, %arg4: memref<32x176x128xf32, #tpu.memory_space<vmem>>, %arg5: memref<1x128xf32, #tpu.memory_space<vmem>>, %arg6: memref<1x1x128xf32, #tpu.memory_space<vmem>>) attributes {dimension_semantics = [#tpu.dimension_semantics<parallel>], iteration_bounds = array<i64: 2>, scalar_prefetch = 0 : i64, scratch_operands = 0 : i64, tpu.core_type = #tpu.core_type<tc>, window_params = [{transform_indices = @transform_0, window_bounds = array<i64: 1, 256, 176>}, {pipeline_mode = #tpu.pipeline_mode<synchronous>, transform_indices = @transform_1, window_bounds = array<i64: 32, 256>}, {pipeline_mode = #tpu.pipeline_mode<synchronous>, transform_indices = @transform_2, window_bounds = array<i64: 32, 1>}, {pipeline_mode = #tpu.pipeline_mode<synchronous>, transform_indices = @transform_3, window_bounds = array<i64: 32, 176, 128>}, {pipeline_mode = #tpu.pipeline_mode<synchronous>, transform_indices = @transform_4, window_bounds = array<i64: 1, 128>}, {transform_indices = @transform_5, window_bounds = array<i64: 1, 1, 128>}]} {
    %c0 = arith.constant 0 : index
    %c0_0 = arith.constant 0 : index
    %c0_1 = arith.constant 0 : index
    %0 = vector.load %arg1[%c0, %c0_0, %c0_1] : memref<1x256x176xf32, #tpu.memory_space<vmem>>, vector<1x256x176xf32>
    %1 = vector.shape_cast %0 : vector<1x256x176xf32> to vector<256x176xf32>
    %c0_2 = arith.constant 0 : index
    %c0_3 = arith.constant 0 : index
    %2 = vector.load %arg2[%c0_2, %c0_3] : memref<32x256xf32, #tpu.memory_space<vmem>>, vector<32x256xf32>
    %cst = arith.constant dense<0.000000e+00> : vector<32x176xf32>
    %3 = tpu.matmul %2, %1, %cst {dimension_numbers = #tpu.dot_dimension_numbers<[1], [0], [0], [1], [0, 0, 1, 1], [], []>} : vector<32x256xf32>, vector<256x176xf32>, vector<32x176xf32> -> vector<32x176xf32>
    %c0_4 = arith.constant 0 : index
    %c0_5 = arith.constant 0 : index
    %4 = vector.load %arg3[%c0_4, %c0_5] : memref<32x1xf32, #tpu.memory_space<vmem>>, vector<32x1xf32>
    %5 = vector.broadcast %4 : vector<32x1xf32> to vector<32x176xf32>
    %6 = arith.addf %3, %5 : vector<32x176xf32>
    %cst_6 = arith.constant 0.000000e+00 : f32
    %7 = vector.broadcast %cst_6 : f32 to vector<32x176xf32>
    %8 = arith.maximumf %6, %7 : vector<32x176xf32>
    %9 = vector.shape_cast %8 : vector<32x176xf32> to vector<32x1x176xf32>
    %c0_7 = arith.constant 0 : index
    %c0_8 = arith.constant 0 : index
    %c0_9 = arith.constant 0 : index
    %10 = vector.load %arg4[%c0_7, %c0_8, %c0_9] : memref<32x176x128xf32, #tpu.memory_space<vmem>>, vector<32x176x128xf32>
    "tpu.trace_start"() <{level = 10 : i32, message = "cqp,cpo->cqo"}> : () -> ()
    %cst_10 = arith.constant dense<0.000000e+00> : vector<32x1x128xf32>
    %11 = tpu.matmul %9, %10, %cst_10 {dimension_numbers = #tpu.dot_dimension_numbers<[2], [1], [1], [2], [0, 0, 0, 1, 1, 2], [0], [0]>} : vector<32x1x176xf32>, vector<32x176x128xf32>, vector<32x1x128xf32> -> vector<32x1x128xf32>
    "tpu.trace_stop"() : () -> ()
    %cst_11 = arith.constant dense<0.000000e+00> : vector<1x128xf32>
    %12 = vector.multi_reduction <add>, %11, %cst_11 [0] : vector<32x1x128xf32> to vector<1x128xf32>
    %c0_12 = arith.constant 0 : index
    %c0_13 = arith.constant 0 : index
    %13 = vector.load %arg5[%c0_12, %c0_13] : memref<1x128xf32, #tpu.memory_space<vmem>>, vector<1x128xf32>
    %14 = arith.addf %12, %13 : vector<1x128xf32>
    %c0_14 = arith.constant 0 : index
    %c0_15 = arith.constant 0 : index
    %c0_16 = arith.constant 0 : index
    %15 = vector.load %arg6[%c0_14, %c0_15, %c0_16] : memref<1x1x128xf32, #tpu.memory_space<vmem>>, vector<1x1x128xf32>
    %16 = vector.shape_cast %15 : vector<1x1x128xf32> to vector<1x128xf32>
    %17 = vector.shape_cast %14 : vector<1x128xf32> to vector<1x1x128xf32>
    tpu.vector_store %arg6[%c0_14, %c0_15, %c0_16], %17 {strides = array<i32>} : memref<1x1x128xf32, #tpu.memory_space<vmem>>, vector<1x1x128xf32>,
    return
  }
  func.func @transform_0(%arg0: i32) -> (i32, i32, i32) {
    %c0_i32 = arith.constant 0 : i32
    %c0_i32_0 = arith.constant 0 : i32
    %c0_i32_1 = arith.constant 0 : i32
    return %arg0, %c0_i32, %c0_i32_0 : i32, i32, i32
  }
  func.func @transform_1(%arg0: i32) -> (i32, i32) {
    %c0_i32 = arith.constant 0 : i32
    %c0_i32_0 = arith.constant 0 : i32
    %c0_i32_1 = arith.constant 0 : i32
    return %c0_i32, %c0_i32_0 : i32, i32
  }
  func.func @transform_2(%arg0: i32) -> (i32, i32) {
    %c0_i32 = arith.constant 0 : i32
    %c0_i32_0 = arith.constant 0 : i32
    %c0_i32_1 = arith.constant 0 : i32
    return %c0_i32, %c0_i32_0 : i32, i32
  }
  func.func @transform_3(%arg0: i32) -> (i32, i32, i32) {
    %c0_i32 = arith.constant 0 : i32
    %c0_i32_0 = arith.constant 0 : i32
    %c0_i32_1 = arith.constant 0 : i32
    %c0_i32_2 = arith.constant 0 : i32
    return %c0_i32, %c0_i32_0, %c0_i32_1 : i32, i32, i32
  }
  func.func @transform_4(%arg0: i32) -> (i32, i32) {
    %c0_i32 = arith.constant 0 : i32
    %c0_i32_0 = arith.constant 0 : i32
    %c0_i32_1 = arith.constant 0 : i32
    return %c0_i32, %c0_i32_0 : i32, i32
  }
  func.func @transform_5(%arg0: i32) -> (i32, i32, i32) {
    %c0_i32 = arith.constant 0 : i32
    %c0_i32_0 = arith.constant 0 : i32
    %c0_i32_1 = arith.constant 0 : i32
    return %arg0, %c0_i32, %c0_i32_0 : i32, i32, i32
  }
}

</mosaic_0001>

<llo_original>
// kernel: forward.1
$region0: #{forward.1}
  #allocation0 [shape = 'u32[]', space=smem, size = 0x4, offset = 0x4, fixed_abs, tag = 'smem constant byte address 0x4 - core index']
  #allocation1 [shape = 'u32[144,128]{1,0:T(1,128)}', space=vmem, size = 0x12000, scoped, tag = 'internal scratch']
  %s0 = inlined_call_operand.vmem [shape: f32[2,256,176], index: 0, kind: input, shape index: {}]
  %s1 = inlined_call_operand.vmem [shape: f32[32,256], index: 1, kind: input, shape index: {}]
  %s2 = inlined_call_operand.vmem [shape: f32[32,1], index: 2, kind: input, shape index: {}]
  %s3 = inlined_call_operand.vmem [shape: f32[32,176,128], index: 3, kind: input, shape index: {}]
  %s4 = inlined_call_operand.vmem [shape: f32[1,128], index: 4, kind: input, shape index: {}]
  %s5 = inlined_call_operand.hbm [shape: f32[2,1,128], index: 5, kind: output, shape index: {}]
  %s6 = sld [smem:[#allocation0]]
  $region53: #{forward.1} parent=0
    _
  %s8 = ssub.s32 1, %s6
  %s9 = scalar_select 0, %s8, %s6
  $region1: #{forward.1} parent=0
    #allocation2 [shape = 'u8[1024]{0}', space=vmem, size = 0x400, scoped, tag = 'output window, operand 0']
    #allocation3 [shape = 's32[2]{0}', space=sflag, size = 0x8, scoped, tag = 'scoped memory for forward.1']
    %10 = vsyncpa [#allocation3], 0
    %s11 = scalar_lea.sflag [#allocation3], 1
    %12 = vsyncpa %s11, 0
    loop: start=0, step=1, limit=4
    $region2: #{forward.1} parent=1 // loop_pre_header
      _
    $region3: #{forward.1} parent=1 // loop_header
      %s14 = sphi 0, %s18
      %p15 = scmp.ge.s32.totalorder %s14, 4
      %s24 = sphi 0, %s26
      %s27 = sphi 0, %s24
      %s28 = sphi 0, %s27
      %s44 = sphi 0, %s28
      %s48 = sphi 0, %s48
      %s50 = sphi 0, %s48
      %s51 = sphi 0, %s50
      %s65 = sphi 0, %s51
      %s69 = sphi 0, %s69
      %s71 = sphi 0, %s69
      %s72 = sphi 0, %s71
      %s86 = sphi 0, %s72
      %s90 = sphi 0, %s90
      %s92 = sphi 0, %s90
      %s93 = sphi 0, %s92
      %s107 = sphi 0, %s93
      %s111 = sphi 0, %s111
      %s113 = sphi 0, %s111
      %s114 = sphi 0, %s113
      %s128 = sphi 0, %s114
      %s134 = sphi 0, %s136
      %s137 = sphi 0, %s134
      %s138 = sphi 0, %s137
      %s154 = sphi 0, %s138
    $region4: #{forward.1} parent=1 // loop_header_branch
      %17 = sbr.rel (%p15) target = $region8
    $region5: #{forward.1} parent=1 // loop_body
      %s19 = ssub.s32 %s14, 1
      %s20 = ssub.s32 %s14, 2
      %s21 = sadd.s32 %s14, 1
      %s22 = ssub.s32 %s14, %s21
      %p23 = scmp.eq.s32.totalorder %s22, 0
      %s25 = sadd.s32 %s24, 1
      %s26 = scalar_select %p23, %s24, %s25
      %p29 = pneg %p23
      %p30 = scmp.eq.s32.totalorder %s14, 1
      %p31 = por %p29, %p30
      %p32 = scmp.ne.s32.totalorder %s24, %s27
      %p33 = scmp.eq.s32.totalorder %s14, 0
      %p34 = por %p32, %p33
      %p35 = scmp.ne.s32.totalorder %s24, %s27
      %p36 = scmp.eq.s32.totalorder %s19, 1
      %p37 = por %p35, %p36
      %p38 = scmp.ne.s32.totalorder %s27, %s28
      %p39 = scmp.eq.s32.totalorder %s19, 0
      %p40 = por %p38, %p39
      %p41 = scmp.ne.s32.totalorder %s27, %s28
      %p42 = scmp.eq.s32.totalorder %s20, 1
      %p43 = por %p41, %p42
      %p45 = scmp.ne.s32.totalorder %s28, %s44
      %p46 = scmp.eq.s32.totalorder %s20, 0
      %p47 = por %p45, %p46
      %s49 = sadd.s32 %s48, 1
      %p52 = scmp.eq.s32.totalorder %s14, 1
      %p53 = scmp.ne.s32.totalorder %s48, %s50
      %p54 = scmp.eq.s32.totalorder %s14, 0
      %p55 = por %p53, %p54
      %p56 = scmp.ne.s32.totalorder %s48, %s50
      %p57 = scmp.eq.s32.totalorder %s19, 1
      %p58 = por %p56, %p57
      %p59 = scmp.ne.s32.totalorder %s50, %s51
      %p60 = scmp.eq.s32.totalorder %s19, 0
      %p61 = por %p59, %p60
      %p62 = scmp.ne.s32.totalorder %s50, %s51
      %p63 = scmp.eq.s32.totalorder %s20, 1
      %p64 = por %p62, %p63
      %p66 = scmp.ne.s32.totalorder %s51, %s65
      %p67 = scmp.eq.s32.totalorder %s20, 0
      %p68 = por %p66, %p67
      %s70 = sadd.s32 %s69, 1
      %p73 = scmp.eq.s32.totalorder %s14, 1
      %p74 = scmp.ne.s32.totalorder %s69, %s71
      %p75 = scmp.eq.s32.totalorder %s14, 0
      %p76 = por %p74, %p75
      %p77 = scmp.ne.s32.totalorder %s69, %s71
      %p78 = scmp.eq.s32.totalorder %s19, 1
      %p79 = por %p77, %p78
      %p80 = scmp.ne.s32.totalorder %s71, %s72
      %p81 = scmp.eq.s32.totalorder %s19, 0
      %p82 = por %p80, %p81
      %p83 = scmp.ne.s32.totalorder %s71, %s72
      %p84 = scmp.eq.s32.totalorder %s20, 1
      %p85 = por %p83, %p84
      %p87 = scmp.ne.s32.totalorder %s72, %s86
      %p88 = scmp.eq.s32.totalorder %s20, 0
      %p89 = por %p87, %p88
      %s91 = sadd.s32 %s90, 1
      %p94 = scmp.eq.s32.totalorder %s14, 1
      %p95 = scmp.ne.s32.totalorder %s90, %s92
      %p96 = scmp.eq.s32.totalorder %s14, 0
      %p97 = por %p95, %p96
      %p98 = scmp.ne.s32.totalorder %s90, %s92
      %p99 = scmp.eq.s32.totalorder %s19, 1
      %p100 = por %p98, %p99
      %p101 = scmp.ne.s32.totalorder %s92, %s93
      %p102 = scmp.eq.s32.totalorder %s19, 0
      %p103 = por %p101, %p102
      %p104 = scmp.ne.s32.totalorder %s92, %s93
      %p105 = scmp.eq.s32.totalorder %s20, 1
      %p106 = por %p104, %p105
      %p108 = scmp.ne.s32.totalorder %s93, %s107
      %p109 = scmp.eq.s32.totalorder %s20, 0
      %p110 = por %p108, %p109
      %s112 = sadd.s32 %s111, 1
      %p115 = scmp.eq.s32.totalorder %s14, 1
      %p116 = scmp.ne.s32.totalorder %s111, %s113
      %p117 = scmp.eq.s32.totalorder %s14, 0
      %p118 = por %p116, %p117
      %p119 = scmp.ne.s32.totalorder %s111, %s113
      %p120 = scmp.eq.s32.totalorder %s19, 1
      %p121 = por %p119, %p120
      %p122 = scmp.ne.s32.totalorder %s113, %s114
      %p123 = scmp.eq.s32.totalorder %s19, 0
      %p124 = por %p122, %p123
      %p125 = scmp.ne.s32.totalorder %s113, %s114
      %p126 = scmp.eq.s32.totalorder %s20, 1
      %p127 = por %p125, %p126
      %p129 = scmp.ne.s32.totalorder %s114, %s128
      %p130 = scmp.eq.s32.totalorder %s20, 0
      %p131 = por %p129, %p130
      %s132 = ssub.s32 %s14, %s21
      %p133 = scmp.eq.s32.totalorder %s132, 0
      %s135 = sadd.s32 %s134, 1
      %s136 = scalar_select %p133, %s134, %s135
      %p139 = pneg %p133
      %p140 = scmp.eq.s32.totalorder %s14, 1
      %p141 = por %p139, %p140
      %p142 = scmp.ne.s32.totalorder %s134, %s137
      %p143 = scmp.eq.s32.totalorder %s14, 0
      %p144 = por %p142, %p143
      %p145 = scmp.ne.s32.totalorder %s134, %s137
      %p146 = scmp.eq.s32.totalorder %s19, 1
      %p147 = por %p145, %p146
      %p148 = scmp.ne.s32.totalorder %s137, %s138
      %p149 = scmp.eq.s32.totalorder %s19, 0
      %p150 = por %p148, %p149
      %p151 = scmp.ne.s32.totalorder %s137, %s138
      %p152 = scmp.eq.s32.totalorder %s20, 1
      %p153 = por %p151, %p152
      %p155 = scmp.ne.s32.totalorder %s138, %s154
      %p156 = scmp.eq.s32.totalorder %s20, 0
      %p157 = por %p155, %p156
      %p158 = scmp.le.s32.totalorder 1, %s14
      %p159 = scmp.lt.s32.totalorder %s14, 3
      %p160 = pnand %p158, %p159
      %p161 = pneg %p160
      // Predicated region
      $region9: #{forward.1} parent=5 // pred_check
        _
      $region10: #{forward.1} parent=5 // pred_check_branch
        %163 = sbr.rel (%p160) target = $region12
      $region11: #{forward.1} parent=5 // pred_region
        %s164 = ssub.s32 %s14, 1
        // Predicated region
        $region13: #{forward.1} parent=11 // pred_check
          %p165 = pneg %p61
        $region14: #{forward.1} parent=11 // pred_check_branch
          %167 = sbr.rel (%p165) target = $region16
        $region15: #{forward.1} parent=11 // pred_region
          _
        $region16: #{forward.1} parent=11 // pred_fallthru
          _
        // Predicated region
        $region17: #{forward.1} parent=11 // pred_check
          %p168 = pneg %p82
        $region18: #{forward.1} parent=11 // pred_check_branch
          %170 = sbr.rel (%p168) target = $region20
        $region19: #{forward.1} parent=11 // pred_region
          _
        $region20: #{forward.1} parent=11 // pred_fallthru
          _
        // Predicated region
        $region21: #{forward.1} parent=11 // pred_check
          %p171 = pneg %p103
        $region22: #{forward.1} parent=11 // pred_check_branch
          %173 = sbr.rel (%p171) target = $region24
        $region23: #{forward.1} parent=11 // pred_region
          _
        $region24: #{forward.1} parent=11 // pred_fallthru
          _
        // Predicated region
        $region25: #{forward.1} parent=11 // pred_check
          %p174 = pneg %p124
        $region26: #{forward.1} parent=11 // pred_check_branch
          %176 = sbr.rel (%p174) target = $region28
        $region27: #{forward.1} parent=11 // pred_region
          _
        $region28: #{forward.1} parent=11 // pred_fallthru
          _
      $region12: #{forward.1} parent=5 // pred_fallthru
        _
      %p177 = scmp.lt.s32.totalorder %s14, 2
      // Predicated region
      $region29: #{forward.1} parent=5 // pred_check
        %p178 = pneg %p177
      $region30: #{forward.1} parent=5 // pred_check_branch
        %180 = sbr.rel (%p178) target = $region32
      $region31: #{forward.1} parent=5 // pred_region
        // Predicated region
        $region33: #{forward.1} parent=31 // pred_check
          %p181 = pneg %p34
        $region34: #{forward.1} parent=31 // pred_check_branch
          %183 = sbr.rel (%p181) target = $region36
        $region35: #{forward.1} parent=31 // pred_region
          %p184 = scmp.lt.s32.totalorder %s14, 1
          %s185 = scalar_select %p184, %s14, 1
          %s186 = smul.addr %s185, 64
          %s187 = smul.addr %s186, 8
          %s188 = scalar_lea.vmem %s0, %s187
        $region36: #{forward.1} parent=31 // pred_fallthru
          _
      $region32: #{forward.1} parent=5 // pred_fallthru
        _
      %p189 = scmp.le.s32.totalorder 1, %s14
      %p190 = scmp.lt.s32.totalorder %s14, 3
      %p191 = pnand %p189, %p190
      %p192 = pneg %p191
      // Predicated region
      $region37: #{forward.1} parent=5 // pred_check
        _
      $region38: #{forward.1} parent=5 // pred_check_branch
        %194 = sbr.rel (%p191) target = $region40
      $region39: #{forward.1} parent=5 // pred_region
        %s195 = ssub.s32 %s14, 1
        %p196 = scmp.lt.s32.totalorder %s19, 1
        %s197 = scalar_select %p196, %s19, 1
        %s198 = smul.addr %s197, 64
        %s199 = smul.addr %s198, 8
        %s200 = scalar_lea.vmem %s0, %s199
        %p201 = pneg %p40
        %p202 = pneg %p37
        %p203 = pneg %p61
        %p204 = pneg %p58
        %p205 = pneg %p82
        %p206 = pneg %p79
        %p207 = pneg %p103
        %p208 = pneg %p100
        %p209 = pneg %p124
        %p210 = pneg %p121
        %p211 = pneg %p150
        %p212 = pneg %p147
        %s213 = sand.u32 %s137, 1
        %s214 = scalar_lea.sflag [#allocation3], %s213
        %s215 = sand.u32 %s137, 1
        %s216 = scalar_lea.vmem [#allocation2], %s215
        %p217 = scmp.lt.s32.totalorder %s19, 1
        %s218 = scalar_select %p217, %s19, 1
        %s219 = smul.addr %s218, 64
        %s220 = smul.addr %s219, 8
        %s221 = scalar_lea.vmem %s0, %s220
        %v222 = vld [vmem:[%s221] sm:$0xff]
        %v223 = vld [vmem:[%s221 + $0x8] sm:$0xff]
        %v224 = vld [vmem:[%s221 + $0x10] sm:$0xff]
        %v225 = vld [vmem:[%s221 + $0x18] sm:$0xff]
        %v226 = vld [vmem:[%s221 + $0x20] sm:$0xff]
        %v227 = vld [vmem:[%s221 + $0x28] sm:$0xff]
        %v228 = vld [vmem:[%s221 + $0x30] sm:$0xff]
        %v229 = vld [vmem:[%s221 + $0x38] sm:$0xff]
        %v230 = vld [vmem:[%s221 + $0x40] sm:$0xff]
        %v231 = vld [vmem:[%s221 + $0x48] sm:$0xff]
        %v232 = vld [vmem:[%s221 + $0x50] sm:$0xff]
        %v233 = vld [vmem:[%s221 + $0x58] sm:$0xff]
        %v234 = vld [vmem:[%s221 + $0x60] sm:$0xff]
        %v235 = vld [vmem:[%s221 + $0x68] sm:$0xff]
        %v236 = vld [vmem:[%s221 + $0x70] sm:$0xff]
        %v237 = vld [vmem:[%s221 + $0x78] sm:$0xff]
        %v238 = vld [vmem:[%s221 + $0x80] sm:$0xff]
        %v239 = vld [vmem:[%s221 + $0x88] sm:$0xff]
        %v240 = vld [vmem:[%s221 + $0x90] sm:$0xff]
        %v241 = vld [vmem:[%s221 + $0x98] sm:$0xff]
        %v242 = vld [vmem:[%s221 + $0xa0] sm:$0xff]
        %v243 = vld [vmem:[%s221 + $0xa8] sm:$0xff]
        %v244 = vld [vmem:[%s221 + $0xb0] sm:$0xff]
        %v245 = vld [vmem:[%s221 + $0xb8] sm:$0xff]
        %v246 = vld [vmem:[%s221 + $0xc0] sm:$0xff]
        %v247 = vld [vmem:[%s221 + $0xc8] sm:$0xff]
        %v248 = vld [vmem:[%s221 + $0xd0] sm:$0xff]
        %v249 = vld [vmem:[%s221 + $0xd8] sm:$0xff]
        %v250 = vld [vmem:[%s221 + $0xe0] sm:$0xff]
        %v251 = vld [vmem:[%s221 + $0xe8] sm:$0xff]
        %v252 = vld [vmem:[%s221 + $0xf0] sm:$0xff]
        %v253 = vld [vmem:[%s221 + $0xf8] sm:$0xff]
        %v254 = vld [vmem:[%s221 + $0x100] sm:$0xff]
        %v255 = vld [vmem:[%s221 + $0x108] sm:$0xff]
        %v256 = vld [vmem:[%s221 + $0x110] sm:$0xff]
        %v257 = vld [vmem:[%s221 + $0x118] sm:$0xff]
        %v258 = vld [vmem:[%s221 + $0x120] sm:$0xff]
        %v259 = vld [vmem:[%s221 + $0x128] sm:$0xff]
        %v260 = vld [vmem:[%s221 + $0x130] sm:$0xff]
        %v261 = vld [vmem:[%s221 + $0x138] sm:$0xff]
        %v262 = vld [vmem:[%s221 + $0x140] sm:$0xff]
        %v263 = vld [vmem:[%s221 + $0x148] sm:$0xff]
        %v264 = vld [vmem:[%s221 + $0x150] sm:$0xff]
        %v265 = vld [vmem:[%s221 + $0x158] sm:$0xff]
        %v266 = vld [vmem:[%s221 + $0x160] sm:$0xff]
        %v267 = vld [vmem:[%s221 + $0x168] sm:$0xff]
        %v268 = vld [vmem:[%s221 + $0x170] sm:$0xff]
        %v269 = vld [vmem:[%s221 + $0x178] sm:$0xff]
        %v270 = vld [vmem:[%s221 + $0x180] sm:$0xff]
        %v271 = vld [vmem:[%s221 + $0x188] sm:$0xff]
        %v272 = vld [vmem:[%s221 + $0x190] sm:$0xff]
        %v273 = vld [vmem:[%s221 + $0x198] sm:$0xff]
        %v274 = vld [vmem:[%s221 + $0x1a0] sm:$0xff]
        %v275 = vld [vmem:[%s221 + $0x1a8] sm:$0xff]
        %v276 = vld [vmem:[%s221 + $0x1b0] sm:$0xff]
        %v277 = vld [vmem:[%s221 + $0x1b8] sm:$0xff]
        %v278 = vld [vmem:[%s221 + $0x1c0] sm:$0xff]
        %v279 = vld [vmem:[%s221 + $0x1c8] sm:$0xff]
        %v280 = vld [vmem:[%s221 + $0x1d0] sm:$0xff]
        %v281 = vld [vmem:[%s221 + $0x1d8] sm:$0xff]
        %v282 = vld [vmem:[%s221 + $0x1e0] sm:$0xff]
        %v283 = vld [vmem:[%s221 + $0x1e8] sm:$0xff]
        %v284 = vld [vmem:[%s221 + $0x1f0] sm:$0xff]
        %v285 = vld [vmem:[%s221 + $0x1f8] sm:$0xff]
        %v286 = vld [vmem:[%s1] sm:$0xff]
        %v287 = vld [vmem:[%s1 + $0x8] sm:$0xff]
        %v288 = vld [vmem:[%s1 + $0x10] sm:$0xff]
        %v289 = vld [vmem:[%s1 + $0x18] sm:$0xff]
        %v290 = vld [vmem:[%s1 + $0x20] sm:$0xff]
        %v291 = vld [vmem:[%s1 + $0x28] sm:$0xff]
        %v292 = vld [vmem:[%s1 + $0x30] sm:$0xff]
        %v293 = vld [vmem:[%s1 + $0x38] sm:$0xff]
        %v294 = vld [vmem:[%s2] sm:$0xff]
        %v295 = vld [vmem:[%s2 + $0x8] sm:$0xff]
        %v296 = vld [vmem:[%s2 + $0x10] sm:$0xff]
        %v297 = vld [vmem:[%s2 + $0x18] sm:$0xff]
        %299 = vset.pattern.permute.xlu0 0
        %300 = vperm.xlu0 %299, %v294
        %v301 = vpop.permute.xlu0 %300
        %304 = vset.pattern.permute.xlu0 0
        %305 = vperm.xlu0 %304, %v295
        %v306 = vpop.permute.xlu0 %305
        %309 = vset.pattern.permute.xlu0 0
        %310 = vperm.xlu0 %309, %v296
        %v311 = vpop.permute.xlu0 %310
        %314 = vset.pattern.permute.xlu0 0
        %315 = vperm.xlu0 %314, %v297
        %v316 = vpop.permute.xlu0 %315
        %318 = vmatprep.subr.mxu0 %v223
        %319 = vmatpush1.msra.mxu0 %v222
        %320 = vmatprep.subr.mxu0 %v225
        %321 = vmatpush1.msra.mxu0 %v224
        %322 = vmatprep.subr.mxu0 %v227
        %323 = vmatpush1.msra.mxu0 %v226
        %324 = vmatprep.subr.mxu0 %v229
        %325 = vmatpush1.msra.mxu0 %v228
        %326 = vmatprep.subr.mxu0 %v231
        %327 = vmatpush1.msra.mxu0 %v230
        %328 = vmatprep.subr.mxu0 %v233
        %329 = vmatpush1.msra.mxu0 %v232
        %330 = vmatprep.subr.mxu0 %v235
        %331 = vmatpush1.msra.mxu0 %v234
        %332 = vmatprep.subr.mxu0 %v237
        %333 = vmatpush1.msra.mxu0 %v236
        %334 = vmatprep.subr.mxu0 %v239
        %335 = vmatpush1.msra.mxu0 %v238
        %336 = vmatprep.subr.mxu0 %v241
        %337 = vmatpush1.msra.mxu0 %v240
        %338 = vmatprep.subr.mxu0 %v243
        %339 = vmatpush1.msra.mxu0 %v242
        %340 = vmatprep.subr.mxu0 %v245
        %341 = vmatpush1.msra.mxu0 %v244
        %342 = vmatprep.subr.mxu0 %v247
        %343 = vmatpush1.msra.mxu0 %v246
        %344 = vmatprep.subr.mxu0 %v249
        %345 = vmatpush1.msra.mxu0 %v248
        %346 = vmatprep.subr.mxu0 %v251
        %347 = vmatpush1.msra.mxu0 %v250
        %348 = vmatprep.subr.mxu0 %v253
        %349 = vmatpush1.msra.mxu0 %v252
        %350 = vmatprep.subr.mxu0 %v255
        %351 = vmatpush1.msra.mxu0 %v254
        %352 = vmatprep.subr.mxu0 %v257
        %353 = vmatpush1.msra.mxu0 %v256
        %354 = vmatprep.subr.mxu0 %v259
        %355 = vmatpush1.msra.mxu0 %v258
        %356 = vmatprep.subr.mxu0 %v261
        %357 = vmatpush1.msra.mxu0 %v260
        %358 = vmatprep.subr.mxu0 %v263
        %359 = vmatpush1.msra.mxu0 %v262
        %360 = vmatprep.subr.mxu0 %v265
        %361 = vmatpush1.msra.mxu0 %v264
        %362 = vmatprep.subr.mxu0 %v267
        %363 = vmatpush1.msra.mxu0 %v266
        %364 = vmatprep.subr.mxu0 %v269
        %365 = vmatpush1.msra.mxu0 %v268
        %366 = vmatprep.subr.mxu0 %v271
        %367 = vmatpush1.msra.mxu0 %v270
        %368 = vmatprep.subr.mxu0 %v273
        %369 = vmatpush1.msra.mxu0 %v272
        %370 = vmatprep.subr.mxu0 %v275
        %371 = vmatpush1.msra.mxu0 %v274
        %372 = vmatprep.subr.mxu0 %v277
        %373 = vmatpush1.msra.mxu0 %v276
        %374 = vmatprep.subr.mxu0 %v279
        %375 = vmatpush1.msra.mxu0 %v278
        %376 = vmatprep.subr.mxu0 %v281
        %377 = vmatpush1.msra.mxu0 %v280
        %378 = vmatprep.subr.mxu0 %v283
        %379 = vmatpush1.msra.mxu0 %v282
        %380 = vmatprep.subr.mxu0 %v285
        %381 = vmatpush1.msra.mxu0 %v284
        %382 = vmatprep.mubr.f32.mxu0 %v287
        %383 = vmatmul.mubr.f32.gmra.mrb[0].mxu0 %v286
        %v384 = vpop.f32.mrb[0].mxu0
        %v385 = vadd.f32 %v301, %v384
        %v386 = vpop.f32.mrb[0].mxu0
        %v387 = vadd.f32 %v301, %v386
        %388 = vmatprep.mubr.f32.mxu0 %v289
        %389 = vmatmul.mubr.f32.gmra.mrb[0].mxu0 %v288
        %v390 = vpop.f32.mrb[0].mxu0
        %v391 = vadd.f32 %v306, %v390
        %v392 = vpop.f32.mrb[0].mxu0
        %v393 = vadd.f32 %v306, %v392
        %394 = vmatprep.mubr.f32.mxu0 %v291
        %395 = vmatmul.mubr.f32.gmra.mrb[0].mxu0 %v290
        %v396 = vpop.f32.mrb[0].mxu0
        %v397 = vadd.f32 %v311, %v396
        %v398 = vpop.f32.mrb[0].mxu0
        %v399 = vadd.f32 %v311, %v398
        %400 = vmatprep.mubr.f32.mxu0 %v293
        %401 = vmatmul.mubr.f32.gmra.mrb[0].mxu0 %v292
        %v402 = vpop.f32.mrb[0].mxu0
        %v403 = vadd.f32 %v316, %v402
        %v404 = vpop.f32.mrb[0].mxu0
        %v405 = vadd.f32 %v316, %v404
        %406 = vdwg.mxu0
        %v407 = vmax.f32 %v385, 0.0
        %v408 = vmax.f32 %v387, 0.0
        %v409 = vmax.f32 %v391, 0.0
        %v410 = vmax.f32 %v393, 0.0
        %v411 = vmax.f32 %v397, 0.0
        %v412 = vmax.f32 %v399, 0.0
        %v413 = vmax.f32 %v403, 0.0
        %v414 = vmax.f32 %v405, 0.0
        %v423 = vcombine.low %v407, %v408
        %v424 = vcombine.high %v407, %v408
        %v426 = vunpack.c.l.s4 1966171168
        %v427 = vunpack.c.0.s8 %v426
        %v428 = vlaneseq
        %v429 = vshrl.u32 %v428, 7
        %v430 = vsub.s32 %v427, %v429
        %v431 = vrot.slane %v423, %v430
        %v433 = vunpack.c.l.s4 1966171168
        %v434 = vunpack.c.0.s8 %v433
        %v435 = vlaneseq
        %v436 = vshrl.u32 %v435, 7
        %v437 = vsub.s32 %v434, %v436
        %v438 = vrot.slane %v424, %v437
        %v439 = vcombine.high %v431, %v431
        %v440 = vcombine.high %v438, %v438
        %v442 = vunpack.c.l.s4 1966171168
        %v443 = vunpack.c.0.s8 %v442
        %v444 = vlaneseq
        %v445 = vshrl.u32 %v444, 7
        %v446 = vsub.s32 %v443, %v445
        %v447 = vrot.slane %v431, %v446
        %v449 = vunpack.c.l.s4 1966171168
        %v450 = vunpack.c.0.s8 %v449
        %v451 = vlaneseq
        %v452 = vshrl.u32 %v451, 7
        %v453 = vsub.s32 %v450, %v452
        %v454 = vrot.slane %v438, %v453
        %v456 = vunpack.c.l.s4 1966171168
        %v457 = vunpack.c.0.s8 %v456
        %v458 = vlaneseq
        %v459 = vshrl.u32 %v458, 7
        %v460 = vsub.s32 %v457, %v459
        %v461 = vrot.slane %v439, %v460
        %v463 = vunpack.c.l.s4 1966171168
        %v464 = vunpack.c.0.s8 %v463
        %v465 = vlaneseq
        %v466 = vshrl.u32 %v465, 7
        %v467 = vsub.s32 %v464, %v466
        %v468 = vrot.slane %v440, %v467
        %v469 = vcombine.high %v447, %v447
        %v470 = vcombine.high %v454, %v454
        %v471 = vcombine.high %v461, %v461
        %v472 = vcombine.high %v468, %v468
        %v473 = vcombine.low %v409, %v410
        %v474 = vcombine.high %v409, %v410
        %v476 = vunpack.c.l.s4 1966171168
        %v477 = vunpack.c.0.s8 %v476
        %v478 = vlaneseq
        %v479 = vshrl.u32 %v478, 7
        %v480 = vsub.s32 %v477, %v479
        %v481 = vrot.slane %v473, %v480
        %v483 = vunpack.c.l.s4 1966171168
        %v484 = vunpack.c.0.s8 %v483
        %v485 = vlaneseq
        %v486 = vshrl.u32 %v485, 7
        %v487 = vsub.s32 %v484, %v486
        %v488 = vrot.slane %v474, %v487
        %v489 = vcombine.high %v481, %v481
        %v490 = vcombine.high %v488, %v488
        %v492 = vunpack.c.l.s4 1966171168
        %v493 = vunpack.c.0.s8 %v492
        %v494 = vlaneseq
        %v495 = vshrl.u32 %v494, 7
        %v496 = vsub.s32 %v493, %v495
        %v497 = vrot.slane %v481, %v496
        %v499 = vunpack.c.l.s4 1966171168
        %v500 = vunpack.c.0.s8 %v499
        %v501 = vlaneseq
        %v502 = vshrl.u32 %v501, 7
        %v503 = vsub.s32 %v500, %v502
        %v504 = vrot.slane %v488, %v503
        %v506 = vunpack.c.l.s4 1966171168
        %v507 = vunpack.c.0.s8 %v506
        %v508 = vlaneseq
        %v509 = vshrl.u32 %v508, 7
        %v510 = vsub.s32 %v507, %v509
        %v511 = vrot.slane %v489, %v510
        %v513 = vunpack.c.l.s4 1966171168
        %v514 = vunpack.c.0.s8 %v513
        %v515 = vlaneseq
        %v516 = vshrl.u32 %v515, 7
        %v517 = vsub.s32 %v514, %v516
        %v518 = vrot.slane %v490, %v517
        %v519 = vcombine.high %v497, %v497
        %v520 = vcombine.high %v504, %v504
        %v521 = vcombine.high %v511, %v511
        %v522 = vcombine.high %v518, %v518
        %v523 = vcombine.low %v411, %v412
        %v524 = vcombine.high %v411, %v412
        %v526 = vunpack.c.l.s4 1966171168
        %v527 = vunpack.c.0.s8 %v526
        %v528 = vlaneseq
        %v529 = vshrl.u32 %v528, 7
        %v530 = vsub.s32 %v527, %v529
        %v531 = vrot.slane %v523, %v530
        %v533 = vunpack.c.l.s4 1966171168
        %v534 = vunpack.c.0.s8 %v533
        %v535 = vlaneseq
        %v536 = vshrl.u32 %v535, 7
        %v537 = vsub.s32 %v534, %v536
        %v538 = vrot.slane %v524, %v537
        %v539 = vcombine.high %v531, %v531
        %v540 = vcombine.high %v538, %v538
        %v542 = vunpack.c.l.s4 1966171168
        %v543 = vunpack.c.0.s8 %v542
        %v544 = vlaneseq
        %v545 = vshrl.u32 %v544, 7
        %v546 = vsub.s32 %v543, %v545
        %v547 = vrot.slane %v531, %v546
        %v549 = vunpack.c.l.s4 1966171168
        %v550 = vunpack.c.0.s8 %v549
        %v551 = vlaneseq
        %v552 = vshrl.u32 %v551, 7
        %v553 = vsub.s32 %v550, %v552
        %v554 = vrot.slane %v538, %v553
        %v556 = vunpack.c.l.s4 1966171168
        %v557 = vunpack.c.0.s8 %v556
        %v558 = vlaneseq
        %v559 = vshrl.u32 %v558, 7
        %v560 = vsub.s32 %v557, %v559
        %v561 = vrot.slane %v539, %v560
        %v563 = vunpack.c.l.s4 1966171168
        %v564 = vunpack.c.0.s8 %v563
        %v565 = vlaneseq
        %v566 = vshrl.u32 %v565, 7
        %v567 = vsub.s32 %v564, %v566
        %v568 = vrot.slane %v540, %v567
        %v569 = vcombine.high %v547, %v547
        %v570 = vcombine.high %v554, %v554
        %v571 = vcombine.high %v561, %v561
        %v572 = vcombine.high %v568, %v568
        %v573 = vcombine.low %v413, %v414
        %v574 = vcombine.high %v413, %v414
        %v576 = vunpack.c.l.s4 1966171168
        %v577 = vunpack.c.0.s8 %v576
        %v578 = vlaneseq
        %v579 = vshrl.u32 %v578, 7
        %v580 = vsub.s32 %v577, %v579
        %v581 = vrot.slane %v573, %v580
        %v583 = vunpack.c.l.s4 1966171168
        %v584 = vunpack.c.0.s8 %v583
        %v585 = vlaneseq
        %v586 = vshrl.u32 %v585, 7
        %v587 = vsub.s32 %v584, %v586
        %v588 = vrot.slane %v574, %v587
        %v589 = vcombine.high %v581, %v581
        %v590 = vcombine.high %v588, %v588
        %v592 = vunpack.c.l.s4 1966171168
        %v593 = vunpack.c.0.s8 %v592
        %v594 = vlaneseq
        %v595 = vshrl.u32 %v594, 7
        %v596 = vsub.s32 %v593, %v595
        %v597 = vrot.slane %v581, %v596
        %v599 = vunpack.c.l.s4 1966171168
        %v600 = vunpack.c.0.s8 %v599
        %v601 = vlaneseq
        %v602 = vshrl.u32 %v601, 7
        %v603 = vsub.s32 %v600, %v602
        %v604 = vrot.slane %v588, %v603
        %v606 = vunpack.c.l.s4 1966171168
        %v607 = vunpack.c.0.s8 %v606
        %v608 = vlaneseq
        %v609 = vshrl.u32 %v608, 7
        %v610 = vsub.s32 %v607, %v609
        %v611 = vrot.slane %v589, %v610
        %v613 = vunpack.c.l.s4 1966171168
        %v614 = vunpack.c.0.s8 %v613
        %v615 = vlaneseq
        %v616 = vshrl.u32 %v615, 7
        %v617 = vsub.s32 %v614, %v616
        %v618 = vrot.slane %v590, %v617
        %v619 = vcombine.high %v597, %v597
        %v620 = vcombine.high %v604, %v604
        %v621 = vcombine.high %v611, %v611
        %v622 = vcombine.high %v618, %v618
        %v623 = vld [vmem:[%s3] sm:$0xff]
        %v624 = vld [vmem:[%s3 + $0x8] sm:$0xff]
        %v625 = vld [vmem:[%s3 + $0x10] sm:$0xff]
        %v626 = vld [vmem:[%s3 + $0x18] sm:$0xff]
        %v627 = vld [vmem:[%s3 + $0x20] sm:$0xff]
        %v628 = vld [vmem:[%s3 + $0x28] sm:$0xff]
        %v629 = vld [vmem:[%s3 + $0x30] sm:$0xff]
        %v630 = vld [vmem:[%s3 + $0x38] sm:$0xff]
        %v631 = vld [vmem:[%s3 + $0x40] sm:$0xff]
        %v632 = vld [vmem:[%s3 + $0x48] sm:$0xff]
        %v633 = vld [vmem:[%s3 + $0x50] sm:$0xff]
        %v634 = vld [vmem:[%s3 + $0x58] sm:$0xff]
        %v635 = vld [vmem:[%s3 + $0x60] sm:$0xff]
        %v636 = vld [vmem:[%s3 + $0x68] sm:$0xff]
        %v637 = vld [vmem:[%s3 + $0x70] sm:$0xff]
        %v638 = vld [vmem:[%s3 + $0x78] sm:$0xff]
        %v639 = vld [vmem:[%s3 + $0x80] sm:$0xff]
        %v640 = vld [vmem:[%s3 + $0x88] sm:$0xff]
        %v641 = vld [vmem:[%s3 + $0x90] sm:$0xff]
        %v642 = vld [vmem:[%s3 + $0x98] sm:$0xff]
        %v643 = vld [vmem:[%s3 + $0xa0] sm:$0xff]
        %v644 = vld [vmem:[%s3 + $0xa8] sm:$0xff]
        %v645 = vld [vmem:[%s3 + $0xb0] sm:$0xff]
        %v646 = vld [vmem:[%s3 + $0xb8] sm:$0xff]
        %v647 = vld [vmem:[%s3 + $0xc0] sm:$0xff]
        %v648 = vld [vmem:[%s3 + $0xc8] sm:$0xff]
        %v649 = vld [vmem:[%s3 + $0xd0] sm:$0xff]
        %v650 = vld [vmem:[%s3 + $0xd8] sm:$0xff]
        %v651 = vld [vmem:[%s3 + $0xe0] sm:$0xff]
        %v652 = vld [vmem:[%s3 + $0xe8] sm:$0xff]
        %v653 = vld [vmem:[%s3 + $0xf0] sm:$0xff]
        %v654 = vld [vmem:[%s3 + $0xf8] sm:$0xff]
        %v655 = vld [vmem:[%s3 + $0x100] sm:$0xff]
        %v656 = vld [vmem:[%s3 + $0x108] sm:$0xff]
        %v657 = vld [vmem:[%s3 + $0x110] sm:$0xff]
        %v658 = vld [vmem:[%s3 + $0x118] sm:$0xff]
        %v659 = vld [vmem:[%s3 + $0x120] sm:$0xff]
        %v660 = vld [vmem:[%s3 + $0x128] sm:$0xff]
        %v661 = vld [vmem:[%s3 + $0x130] sm:$0xff]
        %v662 = vld [vmem:[%s3 + $0x138] sm:$0xff]
        %v663 = vld [vmem:[%s3 + $0x140] sm:$0xff]
        %v664 = vld [vmem:[%s3 + $0x148] sm:$0xff]
        %v665 = vld [vmem:[%s3 + $0x150] sm:$0xff]
        %v666 = vld [vmem:[%s3 + $0x158] sm:$0xff]
        %v667 = vld [vmem:[%s3 + $0x160] sm:$0xff]
        %v668 = vld [vmem:[%s3 + $0x168] sm:$0xff]
        %v669 = vld [vmem:[%s3 + $0x170] sm:$0xff]
        %v670 = vld [vmem:[%s3 + $0x178] sm:$0xff]
        %v671 = vld [vmem:[%s3 + $0x180] sm:$0xff]
        %v672 = vld [vmem:[%s3 + $0x188] sm:$0xff]
        %v673 = vld [vmem:[%s3 + $0x190] sm:$0xff]
        %v674 = vld [vmem:[%s3 + $0x198] sm:$0xff]
        %v675 = vld [vmem:[%s3 + $0x1a0] sm:$0xff]
        %v676 = vld [vmem:[%s3 + $0x1a8] sm:$0xff]
        %v677 = vld [vmem:[%s3 + $0x1b0] sm:$0xff]
        %v678 = vld [vmem:[%s3 + $0x1b8] sm:$0xff]
        %v679 = vld [vmem:[%s3 + $0x1c0] sm:$0xff]
        %v680 = vld [vmem:[%s3 + $0x1c8] sm:$0xff]
        %v681 = vld [vmem:[%s3 + $0x1d0] sm:$0xff]
        %v682 = vld [vmem:[%s3 + $0x1d8] sm:$0xff]
        %v683 = vld [vmem:[%s3 + $0x1e0] sm:$0xff]
        %v684 = vld [vmem:[%s3 + $0x1e8] sm:$0xff]
        %v685 = vld [vmem:[%s3 + $0x1f0] sm:$0xff]
        %v686 = vld [vmem:[%s3 + $0x1f8] sm:$0xff]
        %v687 = vld [vmem:[%s3 + $0x200] sm:$0xff]
        %v688 = vld [vmem:[%s3 + $0x208] sm:$0xff]
        %v689 = vld [vmem:[%s3 + $0x210] sm:$0xff]
        %v690 = vld [vmem:[%s3 + $0x218] sm:$0xff]
        %v691 = vld [vmem:[%s3 + $0x220] sm:$0xff]
        %v692 = vld [vmem:[%s3 + $0x228] sm:$0xff]
        %v693 = vld [vmem:[%s3 + $0x230] sm:$0xff]
        %v694 = vld [vmem:[%s3 + $0x238] sm:$0xff]
        %v695 = vld [vmem:[%s3 + $0x240] sm:$0xff]
        %v696 = vld [vmem:[%s3 + $0x248] sm:$0xff]
        %v697 = vld [vmem:[%s3 + $0x250] sm:$0xff]
        %v698 = vld [vmem:[%s3 + $0x258] sm:$0xff]
        %v699 = vld [vmem:[%s3 + $0x260] sm:$0xff]
        %v700 = vld [vmem:[%s3 + $0x268] sm:$0xff]
        %v701 = vld [vmem:[%s3 + $0x270] sm:$0xff]
        %v702 = vld [vmem:[%s3 + $0x278] sm:$0xff]
        %v703 = vld [vmem:[%s3 + $0x280] sm:$0xff]
        %v704 = vld [vmem:[%s3 + $0x288] sm:$0xff]
        %v705 = vld [vmem:[%s3 + $0x290] sm:$0xff]
        %v706 = vld [vmem:[%s3 + $0x298] sm:$0xff]
        %v707 = vld [vmem:[%s3 + $0x2a0] sm:$0xff]
        %v708 = vld [vmem:[%s3 + $0x2a8] sm:$0xff]
        %v709 = vld [vmem:[%s3 + $0x2b0] sm:$0xff]
        %v710 = vld [vmem:[%s3 + $0x2b8] sm:$0xff]
        %v711 = vld [vmem:[%s3 + $0x2c0] sm:$0xff]
        %v712 = vld [vmem:[%s3 + $0x2c8] sm:$0xff]
        %v713 = vld [vmem:[%s3 + $0x2d0] sm:$0xff]
        %v714 = vld [vmem:[%s3 + $0x2d8] sm:$0xff]
        %v715 = vld [vmem:[%s3 + $0x2e0] sm:$0xff]
        %v716 = vld [vmem:[%s3 + $0x2e8] sm:$0xff]
        %v717 = vld [vmem:[%s3 + $0x2f0] sm:$0xff]
        %v718 = vld [vmem:[%s3 + $0x2f8] sm:$0xff]
        %v719 = vld [vmem:[%s3 + $0x300] sm:$0xff]
        %v720 = vld [vmem:[%s3 + $0x308] sm:$0xff]
        %v721 = vld [vmem:[%s3 + $0x310] sm:$0xff]
        %v722 = vld [vmem:[%s3 + $0x318] sm:$0xff]
        %v723 = vld [vmem:[%s3 + $0x320] sm:$0xff]
        %v724 = vld [vmem:[%s3 + $0x328] sm:$0xff]
        %v725 = vld [vmem:[%s3 + $0x330] sm:$0xff]
        %v726 = vld [vmem:[%s3 + $0x338] sm:$0xff]
        %v727 = vld [vmem:[%s3 + $0x340] sm:$0xff]
        %v728 = vld [vmem:[%s3 + $0x348] sm:$0xff]
        %v729 = vld [vmem:[%s3 + $0x350] sm:$0xff]
        %v730 = vld [vmem:[%s3 + $0x358] sm:$0xff]
        %v731 = vld [vmem:[%s3 + $0x360] sm:$0xff]
        %v732 = vld [vmem:[%s3 + $0x368] sm:$0xff]
        %v733 = vld [vmem:[%s3 + $0x370] sm:$0xff]
        %v734 = vld [vmem:[%s3 + $0x378] sm:$0xff]
        %v735 = vld [vmem:[%s3 + $0x380] sm:$0xff]
        %v736 = vld [vmem:[%s3 + $0x388] sm:$0xff]
        %v737 = vld [vmem:[%s3 + $0x390] sm:$0xff]
        %v738 = vld [vmem:[%s3 + $0x398] sm:$0xff]
        %v739 = vld [vmem:[%s3 + $0x3a0] sm:$0xff]
        %v740 = vld [vmem:[%s3 + $0x3a8] sm:$0xff]
        %v741 = vld [vmem:[%s3 + $0x3b0] sm:$0xff]
        %v742 = vld [vmem:[%s3 + $0x3b8] sm:$0xff]
        %v743 = vld [vmem:[%s3 + $0x3c0] sm:$0xff]
        %v744 = vld [vmem:[%s3 + $0x3c8] sm:$0xff]
        %v745 = vld [vmem:[%s3 + $0x3d0] sm:$0xff]
        %v746 = vld [vmem:[%s3 + $0x3d8] sm:$0xff]
        %v747 = vld [vmem:[%s3 + $0x3e0] sm:$0xff]
        %v748 = vld [vmem:[%s3 + $0x3e8] sm:$0xff]
        %v749 = vld [vmem:[%s3 + $0x3f0] sm:$0xff]
        %v750 = vld [vmem:[%s3 + $0x3f8] sm:$0xff]
        %v751 = vld [vmem:[%s3 + $0x400] sm:$0xff]
        %v752 = vld [vmem:[%s3 + $0x408] sm:$0xff]
        %v753 = vld [vmem:[%s3 + $0x410] sm:$0xff]
        %v754 = vld [vmem:[%s3 + $0x418] sm:$0xff]
        %v755 = vld [vmem:[%s3 + $0x420] sm:$0xff]
        %v756 = vld [vmem:[%s3 + $0x428] sm:$0xff]
        %v757 = vld [vmem:[%s3 + $0x430] sm:$0xff]
        %v758 = vld [vmem:[%s3 + $0x438] sm:$0xff]
        %v759 = vld [vmem:[%s3 + $0x440] sm:$0xff]
        %v760 = vld [vmem:[%s3 + $0x448] sm:$0xff]
        %v761 = vld [vmem:[%s3 + $0x450] sm:$0xff]
        %v762 = vld [vmem:[%s3 + $0x458] sm:$0xff]
        %v763 = vld [vmem:[%s3 + $0x460] sm:$0xff]
        %v764 = vld [vmem:[%s3 + $0x468] sm:$0xff]
        %v765 = vld [vmem:[%s3 + $0x470] sm:$0xff]
        %v766 = vld [vmem:[%s3 + $0x478] sm:$0xff]
        %v767 = vld [vmem:[%s3 + $0x480] sm:$0xff]
        %v768 = vld [vmem:[%s3 + $0x488] sm:$0xff]
        %v769 = vld [vmem:[%s3 + $0x490] sm:$0xff]
        %v770 = vld [vmem:[%s3 + $0x498] sm:$0xff]
        %v771 = vld [vmem:[%s3 + $0x4a0] sm:$0xff]
        %v772 = vld [vmem:[%s3 + $0x4a8] sm:$0xff]
        %v773 = vld [vmem:[%s3 + $0x4b0] sm:$0xff]
        %v774 = vld [vmem:[%s3 + $0x4b8] sm:$0xff]
        %v775 = vld [vmem:[%s3 + $0x4c0] sm:$0xff]
        %v776 = vld [vmem:[%s3 + $0x4c8] sm:$0xff]
        %v777 = vld [vmem:[%s3 + $0x4d0] sm:$0xff]
        %v778 = vld [vmem:[%s3 + $0x4d8] sm:$0xff]
        %v779 = vld [vmem:[%s3 + $0x4e0] sm:$0xff]
        %v780 = vld [vmem:[%s3 + $0x4e8] sm:$0xff]
        %v781 = vld [vmem:[%s3 + $0x4f0] sm:$0xff]
        %v782 = vld [vmem:[%s3 + $0x4f8] sm:$0xff]
        %v783 = vld [vmem:[%s3 + $0x500] sm:$0xff]
        %v784 = vld [vmem:[%s3 + $0x508] sm:$0xff]
        %v785 = vld [vmem:[%s3 + $0x510] sm:$0xff]
        %v786 = vld [vmem:[%s3 + $0x518] sm:$0xff]
        %v787 = vld [vmem:[%s3 + $0x520] sm:$0xff]
        %v788 = vld [vmem:[%s3 + $0x528] sm:$0xff]
        %v789 = vld [vmem:[%s3 + $0x530] sm:$0xff]
        %v790 = vld [vmem:[%s3 + $0x538] sm:$0xff]
        %v791 = vld [vmem:[%s3 + $0x540] sm:$0xff]
        %v792 = vld [vmem:[%s3 + $0x548] sm:$0xff]
        %v793 = vld [vmem:[%s3 + $0x550] sm:$0xff]
        %v794 = vld [vmem:[%s3 + $0x558] sm:$0xff]
        %v795 = vld [vmem:[%s3 + $0x560] sm:$0xff]
        %v796 = vld [vmem:[%s3 + $0x568] sm:$0xff]
        %v797 = vld [vmem:[%s3 + $0x570] sm:$0xff]
        %v798 = vld [vmem:[%s3 + $0x578] sm:$0xff]
        %v799 = vld [vmem:[%s3 + $0x580] sm:$0xff]
        %v800 = vld [vmem:[%s3 + $0x588] sm:$0xff]
        %v801 = vld [vmem:[%s3 + $0x590] sm:$0xff]
        %v802 = vld [vmem:[%s3 + $0x598] sm:$0xff]
        %v803 = vld [vmem:[%s3 + $0x5a0] sm:$0xff]
        %v804 = vld [vmem:[%s3 + $0x5a8] sm:$0xff]
        %v805 = vld [vmem:[%s3 + $0x5b0] sm:$0xff]
        %v806 = vld [vmem:[%s3 + $0x5b8] sm:$0xff]
        %v807 = vld [vmem:[%s3 + $0x5c0] sm:$0xff]
        %v808 = vld [vmem:[%s3 + $0x5c8] sm:$0xff]
        %v809 = vld [vmem:[%s3 + $0x5d0] sm:$0xff]
        %v810 = vld [vmem:[%s3 + $0x5d8] sm:$0xff]
        %v811 = vld [vmem:[%s3 + $0x5e0] sm:$0xff]
        %v812 = vld [vmem:[%s3 + $0x5e8] sm:$0xff]
        %v813 = vld [vmem:[%s3 + $0x5f0] sm:$0xff]
        %v814 = vld [vmem:[%s3 + $0x5f8] sm:$0xff]
        %v815 = vld [vmem:[%s3 + $0x600] sm:$0xff]
        %v816 = vld [vmem:[%s3 + $0x608] sm:$0xff]
        %v817 = vld [vmem:[%s3 + $0x610] sm:$0xff]
        %v818 = vld [vmem:[%s3 + $0x618] sm:$0xff]
        %v819 = vld [vmem:[%s3 + $0x620] sm:$0xff]
        %v820 = vld [vmem:[%s3 + $0x628] sm:$0xff]
        %v821 = vld [vmem:[%s3 + $0x630] sm:$0xff]
        %v822 = vld [vmem:[%s3 + $0x638] sm:$0xff]
        %v823 = vld [vmem:[%s3 + $0x640] sm:$0xff]
        %v824 = vld [vmem:[%s3 + $0x648] sm:$0xff]
        %v825 = vld [vmem:[%s3 + $0x650] sm:$0xff]
        %v826 = vld [vmem:[%s3 + $0x658] sm:$0xff]
        %v827 = vld [vmem:[%s3 + $0x660] sm:$0xff]
        %v828 = vld [vmem:[%s3 + $0x668] sm:$0xff]
        %v829 = vld [vmem:[%s3 + $0x670] sm:$0xff]
        %v830 = vld [vmem:[%s3 + $0x678] sm:$0xff]
        %v831 = vld [vmem:[%s3 + $0x680] sm:$0xff]
        %v832 = vld [vmem:[%s3 + $0x688] sm:$0xff]
        %v833 = vld [vmem:[%s3 + $0x690] sm:$0xff]
        %v834 = vld [vmem:[%s3 + $0x698] sm:$0xff]
        %v835 = vld [vmem:[%s3 + $0x6a0] sm:$0xff]
        %v836 = vld [vmem:[%s3 + $0x6a8] sm:$0xff]
        %v837 = vld [vmem:[%s3 + $0x6b0] sm:$0xff]
        %v838 = vld [vmem:[%s3 + $0x6b8] sm:$0xff]
        %v839 = vld [vmem:[%s3 + $0x6c0] sm:$0xff]
        %v840 = vld [vmem:[%s3 + $0x6c8] sm:$0xff]
        %v841 = vld [vmem:[%s3 + $0x6d0] sm:$0xff]
        %v842 = vld [vmem:[%s3 + $0x6d8] sm:$0xff]
        %v843 = vld [vmem:[%s3 + $0x6e0] sm:$0xff]
        %v844 = vld [vmem:[%s3 + $0x6e8] sm:$0xff]
        %v845 = vld [vmem:[%s3 + $0x6f0] sm:$0xff]
        %v846 = vld [vmem:[%s3 + $0x6f8] sm:$0xff]
        %v847 = vld [vmem:[%s3 + $0x700] sm:$0xff]
        %v848 = vld [vmem:[%s3 + $0x708] sm:$0xff]
        %v849 = vld [vmem:[%s3 + $0x710] sm:$0xff]
        %v850 = vld [vmem:[%s3 + $0x718] sm:$0xff]
        %v851 = vld [vmem:[%s3 + $0x720] sm:$0xff]
        %v852 = vld [vmem:[%s3 + $0x728] sm:$0xff]
        %v853 = vld [vmem:[%s3 + $0x730] sm:$0xff]
        %v854 = vld [vmem:[%s3 + $0x738] sm:$0xff]
        %v855 = vld [vmem:[%s3 + $0x740] sm:$0xff]
        %v856 = vld [vmem:[%s3 + $0x748] sm:$0xff]
        %v857 = vld [vmem:[%s3 + $0x750] sm:$0xff]
        %v858 = vld [vmem:[%s3 + $0x758] sm:$0xff]
        %v859 = vld [vmem:[%s3 + $0x760] sm:$0xff]
        %v860 = vld [vmem:[%s3 + $0x768] sm:$0xff]
        %v861 = vld [vmem:[%s3 + $0x770] sm:$0xff]
        %v862 = vld [vmem:[%s3 + $0x778] sm:$0xff]
        %v863 = vld [vmem:[%s3 + $0x780] sm:$0xff]
        %v864 = vld [vmem:[%s3 + $0x788] sm:$0xff]
        %v865 = vld [vmem:[%s3 + $0x790] sm:$0xff]
        %v866 = vld [vmem:[%s3 + $0x798] sm:$0xff]
        %v867 = vld [vmem:[%s3 + $0x7a0] sm:$0xff]
        %v868 = vld [vmem:[%s3 + $0x7a8] sm:$0xff]
        %v869 = vld [vmem:[%s3 + $0x7b0] sm:$0xff]
        %v870 = vld [vmem:[%s3 + $0x7b8] sm:$0xff]
        %v871 = vld [vmem:[%s3 + $0x7c0] sm:$0xff]
        %v872 = vld [vmem:[%s3 + $0x7c8] sm:$0xff]
        %v873 = vld [vmem:[%s3 + $0x7d0] sm:$0xff]
        %v874 = vld [vmem:[%s3 + $0x7d8] sm:$0xff]
        %v875 = vld [vmem:[%s3 + $0x7e0] sm:$0xff]
        %v876 = vld [vmem:[%s3 + $0x7e8] sm:$0xff]
        %v877 = vld [vmem:[%s3 + $0x7f0] sm:$0xff]
        %v878 = vld [vmem:[%s3 + $0x7f8] sm:$0xff]
        %v879 = vld [vmem:[%s3 + $0x800] sm:$0xff]
        %v880 = vld [vmem:[%s3 + $0x808] sm:$0xff]
        %v881 = vld [vmem:[%s3 + $0x810] sm:$0xff]
        %v882 = vld [vmem:[%s3 + $0x818] sm:$0xff]
        %v883 = vld [vmem:[%s3 + $0x820] sm:$0xff]
        %v884 = vld [vmem:[%s3 + $0x828] sm:$0xff]
        %v885 = vld [vmem:[%s3 + $0x830] sm:$0xff]
        %v886 = vld [vmem:[%s3 + $0x838] sm:$0xff]
        %v887 = vld [vmem:[%s3 + $0x840] sm:$0xff]
        %v888 = vld [vmem:[%s3 + $0x848] sm:$0xff]
        %v889 = vld [vmem:[%s3 + $0x850] sm:$0xff]
        %v890 = vld [vmem:[%s3 + $0x858] sm:$0xff]
        %v891 = vld [vmem:[%s3 + $0x860] sm:$0xff]
        %v892 = vld [vmem:[%s3 + $0x868] sm:$0xff]
        %v893 = vld [vmem:[%s3 + $0x870] sm:$0xff]
        %v894 = vld [vmem:[%s3 + $0x878] sm:$0xff]
        %v895 = vld [vmem:[%s3 + $0x880] sm:$0xff]
        %v896 = vld [vmem:[%s3 + $0x888] sm:$0xff]
        %v897 = vld [vmem:[%s3 + $0x890] sm:$0xff]
        %v898 = vld [vmem:[%s3 + $0x898] sm:$0xff]
        %v899 = vld [vmem:[%s3 + $0x8a0] sm:$0xff]
        %v900 = vld [vmem:[%s3 + $0x8a8] sm:$0xff]
        %v901 = vld [vmem:[%s3 + $0x8b0] sm:$0xff]
        %v902 = vld [vmem:[%s3 + $0x8b8] sm:$0xff]
        %v903 = vld [vmem:[%s3 + $0x8c0] sm:$0xff]
        %v904 = vld [vmem:[%s3 + $0x8c8] sm:$0xff]
        %v905 = vld [vmem:[%s3 + $0x8d0] sm:$0xff]
        %v906 = vld [vmem:[%s3 + $0x8d8] sm:$0xff]
        %v907 = vld [vmem:[%s3 + $0x8e0] sm:$0xff]
        %v908 = vld [vmem:[%s3 + $0x8e8] sm:$0xff]
        %v909 = vld [vmem:[%s3 + $0x8f0] sm:$0xff]
        %v910 = vld [vmem:[%s3 + $0x8f8] sm:$0xff]
        %v911 = vld [vmem:[%s3 + $0x900] sm:$0xff]
        %v912 = vld [vmem:[%s3 + $0x908] sm:$0xff]
        %v913 = vld [vmem:[%s3 + $0x910] sm:$0xff]
        %v914 = vld [vmem:[%s3 + $0x918] sm:$0xff]
        %v915 = vld [vmem:[%s3 + $0x920] sm:$0xff]
        %v916 = vld [vmem:[%s3 + $0x928] sm:$0xff]
        %v917 = vld [vmem:[%s3 + $0x930] sm:$0xff]
        %v918 = vld [vmem:[%s3 + $0x938] sm:$0xff]
        %v919 = vld [vmem:[%s3 + $0x940] sm:$0xff]
        %v920 = vld [vmem:[%s3 + $0x948] sm:$0xff]
        %v921 = vld [vmem:[%s3 + $0x950] sm:$0xff]
        %v922 = vld [vmem:[%s3 + $0x958] sm:$0xff]
        %v923 = vld [vmem:[%s3 + $0x960] sm:$0xff]
        %v924 = vld [vmem:[%s3 + $0x968] sm:$0xff]
        %v925 = vld [vmem:[%s3 + $0x970] sm:$0xff]
        %v926 = vld [vmem:[%s3 + $0x978] sm:$0xff]
        %v927 = vld [vmem:[%s3 + $0x980] sm:$0xff]
        %v928 = vld [vmem:[%s3 + $0x988] sm:$0xff]
        %v929 = vld [vmem:[%s3 + $0x990] sm:$0xff]
        %v930 = vld [vmem:[%s3 + $0x998] sm:$0xff]
        %v931 = vld [vmem:[%s3 + $0x9a0] sm:$0xff]
        %v932 = vld [vmem:[%s3 + $0x9a8] sm:$0xff]
        %v933 = vld [vmem:[%s3 + $0x9b0] sm:$0xff]
        %v934 = vld [vmem:[%s3 + $0x9b8] sm:$0xff]
        %v935 = vld [vmem:[%s3 + $0x9c0] sm:$0xff]
        %v936 = vld [vmem:[%s3 + $0x9c8] sm:$0xff]
        %v937 = vld [vmem:[%s3 + $0x9d0] sm:$0xff]
        %v938 = vld [vmem:[%s3 + $0x9d8] sm:$0xff]
        %v939 = vld [vmem:[%s3 + $0x9e0] sm:$0xff]
        %v940 = vld [vmem:[%s3 + $0x9e8] sm:$0xff]
        %v941 = vld [vmem:[%s3 + $0x9f0] sm:$0xff]
        %v942 = vld [vmem:[%s3 + $0x9f8] sm:$0xff]
        %v943 = vld [vmem:[%s3 + $0xa00] sm:$0xff]
        %v944 = vld [vmem:[%s3 + $0xa08] sm:$0xff]
        %v945 = vld [vmem:[%s3 + $0xa10] sm:$0xff]
        %v946 = vld [vmem:[%s3 + $0xa18] sm:$0xff]
        %v947 = vld [vmem:[%s3 + $0xa20] sm:$0xff]
        %v948 = vld [vmem:[%s3 + $0xa28] sm:$0xff]
        %v949 = vld [vmem:[%s3 + $0xa30] sm:$0xff]
        %v950 = vld [vmem:[%s3 + $0xa38] sm:$0xff]
        %v951 = vld [vmem:[%s3 + $0xa40] sm:$0xff]
        %v952 = vld [vmem:[%s3 + $0xa48] sm:$0xff]
        %v953 = vld [vmem:[%s3 + $0xa50] sm:$0xff]
        %v954 = vld [vmem:[%s3 + $0xa58] sm:$0xff]
        %v955 = vld [vmem:[%s3 + $0xa60] sm:$0xff]
        %v956 = vld [vmem:[%s3 + $0xa68] sm:$0xff]
        %v957 = vld [vmem:[%s3 + $0xa70] sm:$0xff]
        %v958 = vld [vmem:[%s3 + $0xa78] sm:$0xff]
        %v959 = vld [vmem:[%s3 + $0xa80] sm:$0xff]
        %v960 = vld [vmem:[%s3 + $0xa88] sm:$0xff]
        %v961 = vld [vmem:[%s3 + $0xa90] sm:$0xff]
        %v962 = vld [vmem:[%s3 + $0xa98] sm:$0xff]
        %v963 = vld [vmem:[%s3 + $0xaa0] sm:$0xff]
        %v964 = vld [vmem:[%s3 + $0xaa8] sm:$0xff]
        %v965 = vld [vmem:[%s3 + $0xab0] sm:$0xff]
        %v966 = vld [vmem:[%s3 + $0xab8] sm:$0xff]
        %v967 = vld [vmem:[%s3 + $0xac0] sm:$0xff]
        %v968 = vld [vmem:[%s3 + $0xac8] sm:$0xff]
        %v969 = vld [vmem:[%s3 + $0xad0] sm:$0xff]
        %v970 = vld [vmem:[%s3 + $0xad8] sm:$0xff]
        %v971 = vld [vmem:[%s3 + $0xae0] sm:$0xff]
        %v972 = vld [vmem:[%s3 + $0xae8] sm:$0xff]
        %v973 = vld [vmem:[%s3 + $0xaf0] sm:$0xff]
        %v974 = vld [vmem:[%s3 + $0xaf8] sm:$0xff]
        %v975 = vld [vmem:[%s3 + $0xb00] sm:$0xff]
        %v976 = vld [vmem:[%s3 + $0xb08] sm:$0xff]
        %v977 = vld [vmem:[%s3 + $0xb10] sm:$0xff]
        %v978 = vld [vmem:[%s3 + $0xb18] sm:$0xff]
        %v979 = vld [vmem:[%s3 + $0xb20] sm:$0xff]
        %v980 = vld [vmem:[%s3 + $0xb28] sm:$0xff]
        %v981 = vld [vmem:[%s3 + $0xb30] sm:$0xff]
        %v982 = vld [vmem:[%s3 + $0xb38] sm:$0xff]
        %v983 = vld [vmem:[%s3 + $0xb40] sm:$0xff]
        %v984 = vld [vmem:[%s3 + $0xb48] sm:$0xff]
        %v985 = vld [vmem:[%s3 + $0xb50] sm:$0xff]
        %v986 = vld [vmem:[%s3 + $0xb58] sm:$0xff]
        %v987 = vld [vmem:[%s3 + $0xb60] sm:$0xff]
        %v988 = vld [vmem:[%s3 + $0xb68] sm:$0xff]
        %v989 = vld [vmem:[%s3 + $0xb70] sm:$0xff]
        %v990 = vld [vmem:[%s3 + $0xb78] sm:$0xff]
        %v991 = vld [vmem:[%s3 + $0xb80] sm:$0xff]
        %v992 = vld [vmem:[%s3 + $0xb88] sm:$0xff]
        %v993 = vld [vmem:[%s3 + $0xb90] sm:$0xff]
        %v994 = vld [vmem:[%s3 + $0xb98] sm:$0xff]
        %v995 = vld [vmem:[%s3 + $0xba0] sm:$0xff]
        %v996 = vld [vmem:[%s3 + $0xba8] sm:$0xff]
        %v997 = vld [vmem:[%s3 + $0xbb0] sm:$0xff]
        %v998 = vld [vmem:[%s3 + $0xbb8] sm:$0xff]
        %v999 = vld [vmem:[%s3 + $0xbc0] sm:$0xff]
        %v1000 = vld [vmem:[%s3 + $0xbc8] sm:$0xff]
        %v1001 = vld [vmem:[%s3 + $0xbd0] sm:$0xff]
        %v1002 = vld [vmem:[%s3 + $0xbd8] sm:$0xff]
        %v1003 = vld [vmem:[%s3 + $0xbe0] sm:$0xff]
        %v1004 = vld [vmem:[%s3 + $0xbe8] sm:$0xff]
        %v1005 = vld [vmem:[%s3 + $0xbf0] sm:$0xff]
        %v1006 = vld [vmem:[%s3 + $0xbf8] sm:$0xff]
        %v1007 = vld [vmem:[%s3 + $0xc00] sm:$0xff]
        %v1008 = vld [vmem:[%s3 + $0xc08] sm:$0xff]
        %v1009 = vld [vmem:[%s3 + $0xc10] sm:$0xff]
        %v1010 = vld [vmem:[%s3 + $0xc18] sm:$0xff]
        %v1011 = vld [vmem:[%s3 + $0xc20] sm:$0xff]
        %v1012 = vld [vmem:[%s3 + $0xc28] sm:$0xff]
        %v1013 = vld [vmem:[%s3 + $0xc30] sm:$0xff]
        %v1014 = vld [vmem:[%s3 + $0xc38] sm:$0xff]
        %v1015 = vld [vmem:[%s3 + $0xc40] sm:$0xff]
        %v1016 = vld [vmem:[%s3 + $0xc48] sm:$0xff]
        %v1017 = vld [vmem:[%s3 + $0xc50] sm:$0xff]
        %v1018 = vld [vmem:[%s3 + $0xc58] sm:$0xff]
        %v1019 = vld [vmem:[%s3 + $0xc60] sm:$0xff]
        %v1020 = vld [vmem:[%s3 + $0xc68] sm:$0xff]
        %v1021 = vld [vmem:[%s3 + $0xc70] sm:$0xff]
        %v1022 = vld [vmem:[%s3 + $0xc78] sm:$0xff]
        %v1023 = vld [vmem:[%s3 + $0xc80] sm:$0xff]
        %v1024 = vld [vmem:[%s3 + $0xc88] sm:$0xff]
        %v1025 = vld [vmem:[%s3 + $0xc90] sm:$0xff]
        %v1026 = vld [vmem:[%s3 + $0xc98] sm:$0xff]
        %v1027 = vld [vmem:[%s3 + $0xca0] sm:$0xff]
        %v1028 = vld [vmem:[%s3 + $0xca8] sm:$0xff]
        %v1029 = vld [vmem:[%s3 + $0xcb0] sm:$0xff]
        %v1030 = vld [vmem:[%s3 + $0xcb8] sm:$0xff]
        %v1031 = vld [vmem:[%s3 + $0xcc0] sm:$0xff]
        %v1032 = vld [vmem:[%s3 + $0xcc8] sm:$0xff]
        %v1033 = vld [vmem:[%s3 + $0xcd0] sm:$0xff]
        %v1034 = vld [vmem:[%s3 + $0xcd8] sm:$0xff]
        %v1035 = vld [vmem:[%s3 + $0xce0] sm:$0xff]
        %v1036 = vld [vmem:[%s3 + $0xce8] sm:$0xff]
        %v1037 = vld [vmem:[%s3 + $0xcf0] sm:$0xff]
        %v1038 = vld [vmem:[%s3 + $0xcf8] sm:$0xff]
        %v1039 = vld [vmem:[%s3 + $0xd00] sm:$0xff]
        %v1040 = vld [vmem:[%s3 + $0xd08] sm:$0xff]
        %v1041 = vld [vmem:[%s3 + $0xd10] sm:$0xff]
        %v1042 = vld [vmem:[%s3 + $0xd18] sm:$0xff]
        %v1043 = vld [vmem:[%s3 + $0xd20] sm:$0xff]
        %v1044 = vld [vmem:[%s3 + $0xd28] sm:$0xff]
        %v1045 = vld [vmem:[%s3 + $0xd30] sm:$0xff]
        %v1046 = vld [vmem:[%s3 + $0xd38] sm:$0xff]
        %v1047 = vld [vmem:[%s3 + $0xd40] sm:$0xff]
        %v1048 = vld [vmem:[%s3 + $0xd48] sm:$0xff]
        %v1049 = vld [vmem:[%s3 + $0xd50] sm:$0xff]
        %v1050 = vld [vmem:[%s3 + $0xd58] sm:$0xff]
        %v1051 = vld [vmem:[%s3 + $0xd60] sm:$0xff]
        %v1052 = vld [vmem:[%s3 + $0xd68] sm:$0xff]
        %v1053 = vld [vmem:[%s3 + $0xd70] sm:$0xff]
        %v1054 = vld [vmem:[%s3 + $0xd78] sm:$0xff]
        %v1055 = vld [vmem:[%s3 + $0xd80] sm:$0xff]
        %v1056 = vld [vmem:[%s3 + $0xd88] sm:$0xff]
        %v1057 = vld [vmem:[%s3 + $0xd90] sm:$0xff]
        %v1058 = vld [vmem:[%s3 + $0xd98] sm:$0xff]
        %v1059 = vld [vmem:[%s3 + $0xda0] sm:$0xff]
        %v1060 = vld [vmem:[%s3 + $0xda8] sm:$0xff]
        %v1061 = vld [vmem:[%s3 + $0xdb0] sm:$0xff]
        %v1062 = vld [vmem:[%s3 + $0xdb8] sm:$0xff]
        %v1063 = vld [vmem:[%s3 + $0xdc0] sm:$0xff]
        %v1064 = vld [vmem:[%s3 + $0xdc8] sm:$0xff]
        %v1065 = vld [vmem:[%s3 + $0xdd0] sm:$0xff]
        %v1066 = vld [vmem:[%s3 + $0xdd8] sm:$0xff]
        %v1067 = vld [vmem:[%s3 + $0xde0] sm:$0xff]
        %v1068 = vld [vmem:[%s3 + $0xde8] sm:$0xff]
        %v1069 = vld [vmem:[%s3 + $0xdf0] sm:$0xff]
        %v1070 = vld [vmem:[%s3 + $0xdf8] sm:$0xff]
        %v1071 = vld [vmem:[%s3 + $0xe00] sm:$0xff]
        %v1072 = vld [vmem:[%s3 + $0xe08] sm:$0xff]
        %v1073 = vld [vmem:[%s3 + $0xe10] sm:$0xff]
        %v1074 = vld [vmem:[%s3 + $0xe18] sm:$0xff]
        %v1075 = vld [vmem:[%s3 + $0xe20] sm:$0xff]
        %v1076 = vld [vmem:[%s3 + $0xe28] sm:$0xff]
        %v1077 = vld [vmem:[%s3 + $0xe30] sm:$0xff]
        %v1078 = vld [vmem:[%s3 + $0xe38] sm:$0xff]
        %v1079 = vld [vmem:[%s3 + $0xe40] sm:$0xff]
        %v1080 = vld [vmem:[%s3 + $0xe48] sm:$0xff]
        %v1081 = vld [vmem:[%s3 + $0xe50] sm:$0xff]
        %v1082 = vld [vmem:[%s3 + $0xe58] sm:$0xff]
        %v1083 = vld [vmem:[%s3 + $0xe60] sm:$0xff]
        %v1084 = vld [vmem:[%s3 + $0xe68] sm:$0xff]
        %v1085 = vld [vmem:[%s3 + $0xe70] sm:$0xff]
        %v1086 = vld [vmem:[%s3 + $0xe78] sm:$0xff]
        %v1087 = vld [vmem:[%s3 + $0xe80] sm:$0xff]
        %v1088 = vld [vmem:[%s3 + $0xe88] sm:$0xff]
        %v1089 = vld [vmem:[%s3 + $0xe90] sm:$0xff]
        %v1090 = vld [vmem:[%s3 + $0xe98] sm:$0xff]
        %v1091 = vld [vmem:[%s3 + $0xea0] sm:$0xff]
        %v1092 = vld [vmem:[%s3 + $0xea8] sm:$0xff]
        %v1093 = vld [vmem:[%s3 + $0xeb0] sm:$0xff]
        %v1094 = vld [vmem:[%s3 + $0xeb8] sm:$0xff]
        %v1095 = vld [vmem:[%s3 + $0xec0] sm:$0xff]
        %v1096 = vld [vmem:[%s3 + $0xec8] sm:$0xff]
        %v1097 = vld [vmem:[%s3 + $0xed0] sm:$0xff]
        %v1098 = vld [vmem:[%s3 + $0xed8] sm:$0xff]
        %v1099 = vld [vmem:[%s3 + $0xee0] sm:$0xff]
        %v1100 = vld [vmem:[%s3 + $0xee8] sm:$0xff]
        %v1101 = vld [vmem:[%s3 + $0xef0] sm:$0xff]
        %v1102 = vld [vmem:[%s3 + $0xef8] sm:$0xff]
        %v1103 = vld [vmem:[%s3 + $0xf00] sm:$0xff]
        %v1104 = vld [vmem:[%s3 + $0xf08] sm:$0xff]
        %v1105 = vld [vmem:[%s3 + $0xf10] sm:$0xff]
        %v1106 = vld [vmem:[%s3 + $0xf18] sm:$0xff]
        %v1107 = vld [vmem:[%s3 + $0xf20] sm:$0xff]
        %v1108 = vld [vmem:[%s3 + $0xf28] sm:$0xff]
        %v1109 = vld [vmem:[%s3 + $0xf30] sm:$0xff]
        %v1110 = vld [vmem:[%s3 + $0xf38] sm:$0xff]
        %v1111 = vld [vmem:[%s3 + $0xf40] sm:$0xff]
        %v1112 = vld [vmem:[%s3 + $0xf48] sm:$0xff]
        %v1113 = vld [vmem:[%s3 + $0xf50] sm:$0xff]
        %v1114 = vld [vmem:[%s3 + $0xf58] sm:$0xff]
        %v1115 = vld [vmem:[%s3 + $0xf60] sm:$0xff]
        %v1116 = vld [vmem:[%s3 + $0xf68] sm:$0xff]
        %v1117 = vld [vmem:[%s3 + $0xf70] sm:$0xff]
        %v1118 = vld [vmem:[%s3 + $0xf78] sm:$0xff]
        %v1119 = vld [vmem:[%s3 + $0xf80] sm:$0xff]
        %v1120 = vld [vmem:[%s3 + $0xf88] sm:$0xff]
        %v1121 = vld [vmem:[%s3 + $0xf90] sm:$0xff]
        %v1122 = vld [vmem:[%s3 + $0xf98] sm:$0xff]
        %v1123 = vld [vmem:[%s3 + $0xfa0] sm:$0xff]
        %v1124 = vld [vmem:[%s3 + $0xfa8] sm:$0xff]
        %v1125 = vld [vmem:[%s3 + $0xfb0] sm:$0xff]
        %v1126 = vld [vmem:[%s3 + $0xfb8] sm:$0xff]
        %v1127 = vld [vmem:[%s3 + $0xfc0] sm:$0xff]
        %v1128 = vld [vmem:[%s3 + $0xfc8] sm:$0xff]
        %v1129 = vld [vmem:[%s3 + $0xfd0] sm:$0xff]
        %v1130 = vld [vmem:[%s3 + $0xfd8] sm:$0xff]
        %v1131 = vld [vmem:[%s3 + $0xfe0] sm:$0xff]
        %v1132 = vld [vmem:[%s3 + $0xfe8] sm:$0xff]
        %v1133 = vld [vmem:[%s3 + $0xff0] sm:$0xff]
        %v1134 = vld [vmem:[%s3 + $0xff8] sm:$0xff]
        %v1135 = vld [vmem:[%s3 + $0x1000] sm:$0xff]
        %v1136 = vld [vmem:[%s3 + $0x1008] sm:$0xff]
        %v1137 = vld [vmem:[%s3 + $0x1010] sm:$0xff]
        %v1138 = vld [vmem:[%s3 + $0x1018] sm:$0xff]
        %v1139 = vld [vmem:[%s3 + $0x1020] sm:$0xff]
        %v1140 = vld [vmem:[%s3 + $0x1028] sm:$0xff]
        %v1141 = vld [vmem:[%s3 + $0x1030] sm:$0xff]
        %v1142 = vld [vmem:[%s3 + $0x1038] sm:$0xff]
        %v1143 = vld [vmem:[%s3 + $0x1040] sm:$0xff]
        %v1144 = vld [vmem:[%s3 + $0x1048] sm:$0xff]
        %v1145 = vld [vmem:[%s3 + $0x1050] sm:$0xff]
        %v1146 = vld [vmem:[%s3 + $0x1058] sm:$0xff]
        %v1147 = vld [vmem:[%s3 + $0x1060] sm:$0xff]
        %v1148 = vld [vmem:[%s3 + $0x1068] sm:$0xff]
        %v1149 = vld [vmem:[%s3 + $0x1070] sm:$0xff]
        %v1150 = vld [vmem:[%s3 + $0x1078] sm:$0xff]
        %v1151 = vld [vmem:[%s3 + $0x1080] sm:$0xff]
        %v1152 = vld [vmem:[%s3 + $0x1088] sm:$0xff]
        %v1153 = vld [vmem:[%s3 + $0x1090] sm:$0xff]
        %v1154 = vld [vmem:[%s3 + $0x1098] sm:$0xff]
        %v1155 = vld [vmem:[%s3 + $0x10a0] sm:$0xff]
        %v1156 = vld [vmem:[%s3 + $0x10a8] sm:$0xff]
        %v1157 = vld [vmem:[%s3 + $0x10b0] sm:$0xff]
        %v1158 = vld [vmem:[%s3 + $0x10b8] sm:$0xff]
        %v1159 = vld [vmem:[%s3 + $0x10c0] sm:$0xff]
        %v1160 = vld [vmem:[%s3 + $0x10c8] sm:$0xff]
        %v1161 = vld [vmem:[%s3 + $0x10d0] sm:$0xff]
        %v1162 = vld [vmem:[%s3 + $0x10d8] sm:$0xff]
        %v1163 = vld [vmem:[%s3 + $0x10e0] sm:$0xff]
        %v1164 = vld [vmem:[%s3 + $0x10e8] sm:$0xff]
        %v1165 = vld [vmem:[%s3 + $0x10f0] sm:$0xff]
        %v1166 = vld [vmem:[%s3 + $0x10f8] sm:$0xff]
        %v1167 = vld [vmem:[%s3 + $0x1100] sm:$0xff]
        %v1168 = vld [vmem:[%s3 + $0x1108] sm:$0xff]
        %v1169 = vld [vmem:[%s3 + $0x1110] sm:$0xff]
        %v1170 = vld [vmem:[%s3 + $0x1118] sm:$0xff]
        %v1171 = vld [vmem:[%s3 + $0x1120] sm:$0xff]
        %v1172 = vld [vmem:[%s3 + $0x1128] sm:$0xff]
        %v1173 = vld [vmem:[%s3 + $0x1130] sm:$0xff]
        %v1174 = vld [vmem:[%s3 + $0x1138] sm:$0xff]
        %v1175 = vld [vmem:[%s3 + $0x1140] sm:$0xff]
        %v1176 = vld [vmem:[%s3 + $0x1148] sm:$0xff]
        %v1177 = vld [vmem:[%s3 + $0x1150] sm:$0xff]
        %v1178 = vld [vmem:[%s3 + $0x1158] sm:$0xff]
        %v1179 = vld [vmem:[%s3 + $0x1160] sm:$0xff]
        %v1180 = vld [vmem:[%s3 + $0x1168] sm:$0xff]
        %v1181 = vld [vmem:[%s3 + $0x1170] sm:$0xff]
        %v1182 = vld [vmem:[%s3 + $0x1178] sm:$0xff]
        %v1183 = vld [vmem:[%s3 + $0x1180] sm:$0xff]
        %v1184 = vld [vmem:[%s3 + $0x1188] sm:$0xff]
        %v1185 = vld [vmem:[%s3 + $0x1190] sm:$0xff]
        %v1186 = vld [vmem:[%s3 + $0x1198] sm:$0xff]
        %v1187 = vld [vmem:[%s3 + $0x11a0] sm:$0xff]
        %v1188 = vld [vmem:[%s3 + $0x11a8] sm:$0xff]
        %v1189 = vld [vmem:[%s3 + $0x11b0] sm:$0xff]
        %v1190 = vld [vmem:[%s3 + $0x11b8] sm:$0xff]
        %v1191 = vld [vmem:[%s3 + $0x11c0] sm:$0xff]
        %v1192 = vld [vmem:[%s3 + $0x11c8] sm:$0xff]
        %v1193 = vld [vmem:[%s3 + $0x11d0] sm:$0xff]
        %v1194 = vld [vmem:[%s3 + $0x11d8] sm:$0xff]
        %v1195 = vld [vmem:[%s3 + $0x11e0] sm:$0xff]
        %v1196 = vld [vmem:[%s3 + $0x11e8] sm:$0xff]
        %v1197 = vld [vmem:[%s3 + $0x11f0] sm:$0xff]
        %v1198 = vld [vmem:[%s3 + $0x11f8] sm:$0xff]
        %v1199 = vld [vmem:[%s3 + $0x1200] sm:$0xff]
        %v1200 = vld [vmem:[%s3 + $0x1208] sm:$0xff]
        %v1201 = vld [vmem:[%s3 + $0x1210] sm:$0xff]
        %v1202 = vld [vmem:[%s3 + $0x1218] sm:$0xff]
        %v1203 = vld [vmem:[%s3 + $0x1220] sm:$0xff]
        %v1204 = vld [vmem:[%s3 + $0x1228] sm:$0xff]
        %v1205 = vld [vmem:[%s3 + $0x1230] sm:$0xff]
        %v1206 = vld [vmem:[%s3 + $0x1238] sm:$0xff]
        %v1207 = vld [vmem:[%s3 + $0x1240] sm:$0xff]
        %v1208 = vld [vmem:[%s3 + $0x1248] sm:$0xff]
        %v1209 = vld [vmem:[%s3 + $0x1250] sm:$0xff]
        %v1210 = vld [vmem:[%s3 + $0x1258] sm:$0xff]
        %v1211 = vld [vmem:[%s3 + $0x1260] sm:$0xff]
        %v1212 = vld [vmem:[%s3 + $0x1268] sm:$0xff]
        %v1213 = vld [vmem:[%s3 + $0x1270] sm:$0xff]
        %v1214 = vld [vmem:[%s3 + $0x1278] sm:$0xff]
        %v1215 = vld [vmem:[%s3 + $0x1280] sm:$0xff]
        %v1216 = vld [vmem:[%s3 + $0x1288] sm:$0xff]
        %v1217 = vld [vmem:[%s3 + $0x1290] sm:$0xff]
        %v1218 = vld [vmem:[%s3 + $0x1298] sm:$0xff]
        %v1219 = vld [vmem:[%s3 + $0x12a0] sm:$0xff]
        %v1220 = vld [vmem:[%s3 + $0x12a8] sm:$0xff]
        %v1221 = vld [vmem:[%s3 + $0x12b0] sm:$0xff]
        %v1222 = vld [vmem:[%s3 + $0x12b8] sm:$0xff]
        %v1223 = vld [vmem:[%s3 + $0x12c0] sm:$0xff]
        %v1224 = vld [vmem:[%s3 + $0x12c8] sm:$0xff]
        %v1225 = vld [vmem:[%s3 + $0x12d0] sm:$0xff]
        %v1226 = vld [vmem:[%s3 + $0x12d8] sm:$0xff]
        %v1227 = vld [vmem:[%s3 + $0x12e0] sm:$0xff]
        %v1228 = vld [vmem:[%s3 + $0x12e8] sm:$0xff]
        %v1229 = vld [vmem:[%s3 + $0x12f0] sm:$0xff]
        %v1230 = vld [vmem:[%s3 + $0x12f8] sm:$0xff]
        %v1231 = vld [vmem:[%s3 + $0x1300] sm:$0xff]
        %v1232 = vld [vmem:[%s3 + $0x1308] sm:$0xff]
        %v1233 = vld [vmem:[%s3 + $0x1310] sm:$0xff]
        %v1234 = vld [vmem:[%s3 + $0x1318] sm:$0xff]
        %v1235 = vld [vmem:[%s3 + $0x1320] sm:$0xff]
        %v1236 = vld [vmem:[%s3 + $0x1328] sm:$0xff]
        %v1237 = vld [vmem:[%s3 + $0x1330] sm:$0xff]
        %v1238 = vld [vmem:[%s3 + $0x1338] sm:$0xff]
        %v1239 = vld [vmem:[%s3 + $0x1340] sm:$0xff]
        %v1240 = vld [vmem:[%s3 + $0x1348] sm:$0xff]
        %v1241 = vld [vmem:[%s3 + $0x1350] sm:$0xff]
        %v1242 = vld [vmem:[%s3 + $0x1358] sm:$0xff]
        %v1243 = vld [vmem:[%s3 + $0x1360] sm:$0xff]
        %v1244 = vld [vmem:[%s3 + $0x1368] sm:$0xff]
        %v1245 = vld [vmem:[%s3 + $0x1370] sm:$0xff]
        %v1246 = vld [vmem:[%s3 + $0x1378] sm:$0xff]
        %v1247 = vld [vmem:[%s3 + $0x1380] sm:$0xff]
        %v1248 = vld [vmem:[%s3 + $0x1388] sm:$0xff]
        %v1249 = vld [vmem:[%s3 + $0x1390] sm:$0xff]
        %v1250 = vld [vmem:[%s3 + $0x1398] sm:$0xff]
        %v1251 = vld [vmem:[%s3 + $0x13a0] sm:$0xff]
        %v1252 = vld [vmem:[%s3 + $0x13a8] sm:$0xff]
        %v1253 = vld [vmem:[%s3 + $0x13b0] sm:$0xff]
        %v1254 = vld [vmem:[%s3 + $0x13b8] sm:$0xff]
        %v1255 = vld [vmem:[%s3 + $0x13c0] sm:$0xff]
        %v1256 = vld [vmem:[%s3 + $0x13c8] sm:$0xff]
        %v1257 = vld [vmem:[%s3 + $0x13d0] sm:$0xff]
        %v1258 = vld [vmem:[%s3 + $0x13d8] sm:$0xff]
        %v1259 = vld [vmem:[%s3 + $0x13e0] sm:$0xff]
        %v1260 = vld [vmem:[%s3 + $0x13e8] sm:$0xff]
        %v1261 = vld [vmem:[%s3 + $0x13f0] sm:$0xff]
        %v1262 = vld [vmem:[%s3 + $0x13f8] sm:$0xff]
        %v1263 = vld [vmem:[%s3 + $0x1400] sm:$0xff]
        %v1264 = vld [vmem:[%s3 + $0x1408] sm:$0xff]
        %v1265 = vld [vmem:[%s3 + $0x1410] sm:$0xff]
        %v1266 = vld [vmem:[%s3 + $0x1418] sm:$0xff]
        %v1267 = vld [vmem:[%s3 + $0x1420] sm:$0xff]
        %v1268 = vld [vmem:[%s3 + $0x1428] sm:$0xff]
        %v1269 = vld [vmem:[%s3 + $0x1430] sm:$0xff]
        %v1270 = vld [vmem:[%s3 + $0x1438] sm:$0xff]
        %v1271 = vld [vmem:[%s3 + $0x1440] sm:$0xff]
        %v1272 = vld [vmem:[%s3 + $0x1448] sm:$0xff]
        %v1273 = vld [vmem:[%s3 + $0x1450] sm:$0xff]
        %v1274 = vld [vmem:[%s3 + $0x1458] sm:$0xff]
        %v1275 = vld [vmem:[%s3 + $0x1460] sm:$0xff]
        %v1276 = vld [vmem:[%s3 + $0x1468] sm:$0xff]
        %v1277 = vld [vmem:[%s3 + $0x1470] sm:$0xff]
        %v1278 = vld [vmem:[%s3 + $0x1478] sm:$0xff]
        %v1279 = vld [vmem:[%s3 + $0x1480] sm:$0xff]
        %v1280 = vld [vmem:[%s3 + $0x1488] sm:$0xff]
        %v1281 = vld [vmem:[%s3 + $0x1490] sm:$0xff]
        %v1282 = vld [vmem:[%s3 + $0x1498] sm:$0xff]
        %v1283 = vld [vmem:[%s3 + $0x14a0] sm:$0xff]
        %v1284 = vld [vmem:[%s3 + $0x14a8] sm:$0xff]
        %v1285 = vld [vmem:[%s3 + $0x14b0] sm:$0xff]
        %v1286 = vld [vmem:[%s3 + $0x14b8] sm:$0xff]
        %v1287 = vld [vmem:[%s3 + $0x14c0] sm:$0xff]
        %v1288 = vld [vmem:[%s3 + $0x14c8] sm:$0xff]
        %v1289 = vld [vmem:[%s3 + $0x14d0] sm:$0xff]
        %v1290 = vld [vmem:[%s3 + $0x14d8] sm:$0xff]
        %v1291 = vld [vmem:[%s3 + $0x14e0] sm:$0xff]
        %v1292 = vld [vmem:[%s3 + $0x14e8] sm:$0xff]
        %v1293 = vld [vmem:[%s3 + $0x14f0] sm:$0xff]
        %v1294 = vld [vmem:[%s3 + $0x14f8] sm:$0xff]
        %v1295 = vld [vmem:[%s3 + $0x1500] sm:$0xff]
        %v1296 = vld [vmem:[%s3 + $0x1508] sm:$0xff]
        %v1297 = vld [vmem:[%s3 + $0x1510] sm:$0xff]
        %v1298 = vld [vmem:[%s3 + $0x1518] sm:$0xff]
        %v1299 = vld [vmem:[%s3 + $0x1520] sm:$0xff]
        %v1300 = vld [vmem:[%s3 + $0x1528] sm:$0xff]
        %v1301 = vld [vmem:[%s3 + $0x1530] sm:$0xff]
        %v1302 = vld [vmem:[%s3 + $0x1538] sm:$0xff]
        %v1303 = vld [vmem:[%s3 + $0x1540] sm:$0xff]
        %v1304 = vld [vmem:[%s3 + $0x1548] sm:$0xff]
        %v1305 = vld [vmem:[%s3 + $0x1550] sm:$0xff]
        %v1306 = vld [vmem:[%s3 + $0x1558] sm:$0xff]
        %v1307 = vld [vmem:[%s3 + $0x1560] sm:$0xff]
        %v1308 = vld [vmem:[%s3 + $0x1568] sm:$0xff]
        %v1309 = vld [vmem:[%s3 + $0x1570] sm:$0xff]
        %v1310 = vld [vmem:[%s3 + $0x1578] sm:$0xff]
        %v1311 = vld [vmem:[%s3 + $0x1580] sm:$0xff]
        %v1312 = vld [vmem:[%s3 + $0x1588] sm:$0xff]
        %v1313 = vld [vmem:[%s3 + $0x1590] sm:$0xff]
        %v1314 = vld [vmem:[%s3 + $0x1598] sm:$0xff]
        %v1315 = vld [vmem:[%s3 + $0x15a0] sm:$0xff]
        %v1316 = vld [vmem:[%s3 + $0x15a8] sm:$0xff]
        %v1317 = vld [vmem:[%s3 + $0x15b0] sm:$0xff]
        %v1318 = vld [vmem:[%s3 + $0x15b8] sm:$0xff]
        %v1319 = vld [vmem:[%s3 + $0x15c0] sm:$0xff]
        %v1320 = vld [vmem:[%s3 + $0x15c8] sm:$0xff]
        %v1321 = vld [vmem:[%s3 + $0x15d0] sm:$0xff]
        %v1322 = vld [vmem:[%s3 + $0x15d8] sm:$0xff]
        %v1323 = vld [vmem:[%s3 + $0x15e0] sm:$0xff]
        %v1324 = vld [vmem:[%s3 + $0x15e8] sm:$0xff]
        %v1325 = vld [vmem:[%s3 + $0x15f0] sm:$0xff]
        %v1326 = vld [vmem:[%s3 + $0x15f8] sm:$0xff]
        %v1327 = vlaneseq
        %v1328 = vshrl.u32 %v1327, 7
        %v1329 = vsub.s32 0, %v1328
        %v1330 = vrot.slane %v447, %v1329
        %v1331 = vlaneseq
        %v1332 = vshrl.u32 %v1331, 7
        %v1333 = vsub.s32 1, %v1332
        %v1334 = vrot.slane %v447, %v1333
        %vm1336 = vcmask 392192
        %v1337 = vsel %vm1336, %v1334, 0
        %1339 = vmatprep.subr.mxu0 0.0
        %1340 = vmatpush1.msra.mxu0 %v623
        %1341 = vmatprep.subr.mxu0 0.0
        %1342 = vmatpush1.msra.mxu0 %v624
        %1343 = vmatprep.subr.mxu0 0.0
        %1344 = vmatpush1.msra.mxu0 %v625
        %1345 = vmatprep.subr.mxu0 0.0
        %1346 = vmatpush1.msra.mxu0 %v626
        %1347 = vmatprep.subr.mxu0 0.0
        %1348 = vmatpush1.msra.mxu0 %v627
        %1349 = vmatprep.subr.mxu0 0.0
        %1350 = vmatpush1.msra.mxu0 %v628
        %1351 = vmatprep.subr.mxu0 0.0
        %1352 = vmatpush1.msra.mxu0 %v629
        %1353 = vmatprep.subr.mxu0 0.0
        %1354 = vmatpush1.msra.mxu0 %v630
        %1355 = vmatprep.subr.mxu0 0.0
        %1356 = vmatpush1.msra.mxu0 %v631
        %1357 = vmatprep.subr.mxu0 0.0
        %1358 = vmatpush1.msra.mxu0 %v632
        %1359 = vmatprep.subr.mxu0 0.0
        %1360 = vmatpush1.msra.mxu0 %v633
        %1361 = vmatprep.subr.mxu0 0.0
        %1362 = vmatpush1.msra.mxu0 %v634
        %1363 = vmatprep.subr.mxu0 0.0
        %1364 = vmatpush1.msra.mxu0 %v635
        %1365 = vmatprep.subr.mxu0 0.0
        %1366 = vmatpush1.msra.mxu0 %v636
        %1367 = vmatprep.subr.mxu0 0.0
        %1368 = vmatpush1.msra.mxu0 %v637
        %1369 = vmatprep.subr.mxu0 0.0
        %1370 = vmatpush1.msra.mxu0 %v638
        %1371 = vmatprep.subr.mxu0 0.0
        %1372 = vmatpush1.msra.mxu0 %v639
        %1373 = vmatprep.subr.mxu0 0.0
        %1374 = vmatpush1.msra.mxu0 %v640
        %1375 = vmatprep.subr.mxu0 0.0
        %1376 = vmatpush1.msra.mxu0 %v641
        %1377 = vmatprep.subr.mxu0 0.0
        %1378 = vmatpush1.msra.mxu0 %v642
        %1379 = vmatprep.subr.mxu0 0.0
        %1380 = vmatpush1.msra.mxu0 %v643
        %1381 = vmatprep.subr.mxu0 0.0
        %1382 = vmatpush1.msra.mxu0 %v644
        %1383 = vmatprep.subr.mxu0 0.0
        %1384 = vmatpush1.msra.mxu0 0.0
        %1385 = vmatprep.subr.mxu0 0.0
        %1386 = vmatpush1.msra.mxu0 0.0
        %1387 = vmatprep.subr.mxu0 0.0
        %1388 = vmatpush1.msra.mxu0 0.0
        %1389 = vmatprep.subr.mxu0 0.0
        %1390 = vmatpush1.msra.mxu0 0.0
        %1391 = vmatprep.subr.mxu0 0.0
        %1392 = vmatpush1.msra.mxu0 0.0
        %1393 = vmatprep.subr.mxu0 0.0
        %1394 = vmatpush1.msra.mxu0 0.0
        %1395 = vmatprep.subr.mxu0 0.0
        %1396 = vmatpush1.msra.mxu0 0.0
        %1397 = vmatprep.subr.mxu0 0.0
        %1398 = vmatpush1.msra.mxu0 0.0
        %1399 = vmatprep.subr.mxu0 0.0
        %1400 = vmatpush1.msra.mxu0 0.0
        %1401 = vmatprep.subr.mxu0 0.0
        %1402 = vmatpush1.msra.mxu0 0.0
        %1403 = vmatprep.mubr.f32.mxu0 %v1337
        %1404 = vmatmul.mubr.f32.gmra.mrb[0].mxu0 %v1330
        %v1405 = vpop.f32.mrb[0].mxu0
        %v1406 = vadd.f32 0.0, %v1405
        %v1407 = vpop.f32.mrb[0].mxu0
        %1408 = vdwg.mxu0
        %v1409 = vlaneseq
        %v1410 = vshrl.u32 %v1409, 7
        %v1411 = vsub.s32 0, %v1410
        %v1412 = vrot.slane %v461, %v1411
        %v1413 = vlaneseq
        %v1414 = vshrl.u32 %v1413, 7
        %v1415 = vsub.s32 1, %v1414
        %v1416 = vrot.slane %v461, %v1415
        %v1418 = vsel %vm1336, %v1416, 0
        %1420 = vmatprep.subr.mxu0 0.0
        %1421 = vmatpush1.msra.mxu0 %v645
        %1422 = vmatprep.subr.mxu0 0.0
        %1423 = vmatpush1.msra.mxu0 %v646
        %1424 = vmatprep.subr.mxu0 0.0
        %1425 = vmatpush1.msra.mxu0 %v647
        %1426 = vmatprep.subr.mxu0 0.0
        %1427 = vmatpush1.msra.mxu0 %v648
        %1428 = vmatprep.subr.mxu0 0.0
        %1429 = vmatpush1.msra.mxu0 %v649
        %1430 = vmatprep.subr.mxu0 0.0
        %1431 = vmatpush1.msra.mxu0 %v650
        %1432 = vmatprep.subr.mxu0 0.0
        %1433 = vmatpush1.msra.mxu0 %v651
        %1434 = vmatprep.subr.mxu0 0.0
        %1435 = vmatpush1.msra.mxu0 %v652
        %1436 = vmatprep.subr.mxu0 0.0
        %1437 = vmatpush1.msra.mxu0 %v653
        %1438 = vmatprep.subr.mxu0 0.0
        %1439 = vmatpush1.msra.mxu0 %v654
        %1440 = vmatprep.subr.mxu0 0.0
        %1441 = vmatpush1.msra.mxu0 %v655
        %1442 = vmatprep.subr.mxu0 0.0
        %1443 = vmatpush1.msra.mxu0 %v656
        %1444 = vmatprep.subr.mxu0 0.0
        %1445 = vmatpush1.msra.mxu0 %v657
        %1446 = vmatprep.subr.mxu0 0.0
        %1447 = vmatpush1.msra.mxu0 %v658
        %1448 = vmatprep.subr.mxu0 0.0
        %1449 = vmatpush1.msra.mxu0 %v659
        %1450 = vmatprep.subr.mxu0 0.0
        %1451 = vmatpush1.msra.mxu0 %v660
        %1452 = vmatprep.subr.mxu0 0.0
        %1453 = vmatpush1.msra.mxu0 %v661
        %1454 = vmatprep.subr.mxu0 0.0
        %1455 = vmatpush1.msra.mxu0 %v662
        %1456 = vmatprep.subr.mxu0 0.0
        %1457 = vmatpush1.msra.mxu0 %v663
        %1458 = vmatprep.subr.mxu0 0.0
        %1459 = vmatpush1.msra.mxu0 %v664
        %1460 = vmatprep.subr.mxu0 0.0
        %1461 = vmatpush1.msra.mxu0 %v665
        %1462 = vmatprep.subr.mxu0 0.0
        %1463 = vmatpush1.msra.mxu0 %v666
        %1464 = vmatprep.subr.mxu0 0.0
        %1465 = vmatpush1.msra.mxu0 0.0
        %1466 = vmatprep.subr.mxu0 0.0
        %1467 = vmatpush1.msra.mxu0 0.0
        %1468 = vmatprep.subr.mxu0 0.0
        %1469 = vmatpush1.msra.mxu0 0.0
        %1470 = vmatprep.subr.mxu0 0.0
        %1471 = vmatpush1.msra.mxu0 0.0
        %1472 = vmatprep.subr.mxu0 0.0
        %1473 = vmatpush1.msra.mxu0 0.0
        %1474 = vmatprep.subr.mxu0 0.0
        %1475 = vmatpush1.msra.mxu0 0.0
        %1476 = vmatprep.subr.mxu0 0.0
        %1477 = vmatpush1.msra.mxu0 0.0
        %1478 = vmatprep.subr.mxu0 0.0
        %1479 = vmatpush1.msra.mxu0 0.0
        %1480 = vmatprep.subr.mxu0 0.0
        %1481 = vmatpush1.msra.mxu0 0.0
        %1482 = vmatprep.subr.mxu0 0.0
        %1483 = vmatpush1.msra.mxu0 0.0
        %1484 = vmatprep.mubr.f32.mxu0 %v1418
        %1485 = vmatmul.mubr.f32.gmra.mrb[0].mxu0 %v1412
        %v1486 = vpop.f32.mrb[0].mxu0
        %v1487 = vadd.f32 0.0, %v1486
        %v1488 = vpop.f32.mrb[0].mxu0
        %1489 = vdwg.mxu0
        %v1490 = vlaneseq
        %v1491 = vshrl.u32 %v1490, 7
        %v1492 = vsub.s32 0, %v1491
        %v1493 = vrot.slane %v469, %v1492
        %v1494 = vlaneseq
        %v1495 = vshrl.u32 %v1494, 7
        %v1496 = vsub.s32 1, %v1495
        %v1497 = vrot.slane %v469, %v1496
        %v1499 = vsel %vm1336, %v1497, 0
        %1501 = vmatprep.subr.mxu0 0.0
        %1502 = vmatpush1.msra.mxu0 %v667
        %1503 = vmatprep.subr.mxu0 0.0
        %1504 = vmatpush1.msra.mxu0 %v668
        %1505 = vmatprep.subr.mxu0 0.0
        %1506 = vmatpush1.msra.mxu0 %v669
        %1507 = vmatprep.subr.mxu0 0.0
        %1508 = vmatpush1.msra.mxu0 %v670
        %1509 = vmatprep.subr.mxu0 0.0
        %1510 = vmatpush1.msra.mxu0 %v671
        %1511 = vmatprep.subr.mxu0 0.0
        %1512 = vmatpush1.msra.mxu0 %v672
        %1513 = vmatprep.subr.mxu0 0.0
        %1514 = vmatpush1.msra.mxu0 %v673
        %1515 = vmatprep.subr.mxu0 0.0
        %1516 = vmatpush1.msra.mxu0 %v674
        %1517 = vmatprep.subr.mxu0 0.0
        %1518 = vmatpush1.msra.mxu0 %v675
        %1519 = vmatprep.subr.mxu0 0.0
        %1520 = vmatpush1.msra.mxu0 %v676
        %1521 = vmatprep.subr.mxu0 0.0
        %1522 = vmatpush1.msra.mxu0 %v677
        %1523 = vmatprep.subr.mxu0 0.0
        %1524 = vmatpush1.msra.mxu0 %v678
        %1525 = vmatprep.subr.mxu0 0.0
        %1526 = vmatpush1.msra.mxu0 %v679
        %1527 = vmatprep.subr.mxu0 0.0
        %1528 = vmatpush1.msra.mxu0 %v680
        %1529 = vmatprep.subr.mxu0 0.0
        %1530 = vmatpush1.msra.mxu0 %v681
        %1531 = vmatprep.subr.mxu0 0.0
        %1532 = vmatpush1.msra.mxu0 %v682
        %1533 = vmatprep.subr.mxu0 0.0
        %1534 = vmatpush1.msra.mxu0 %v683
        %1535 = vmatprep.subr.mxu0 0.0
        %1536 = vmatpush1.msra.mxu0 %v684
        %1537 = vmatprep.subr.mxu0 0.0
        %1538 = vmatpush1.msra.mxu0 %v685
        %1539 = vmatprep.subr.mxu0 0.0
        %1540 = vmatpush1.msra.mxu0 %v686
        %1541 = vmatprep.subr.mxu0 0.0
        %1542 = vmatpush1.msra.mxu0 %v687
        %1543 = vmatprep.subr.mxu0 0.0
        %1544 = vmatpush1.msra.mxu0 %v688
        %1545 = vmatprep.subr.mxu0 0.0
        %1546 = vmatpush1.msra.mxu0 0.0
        %1547 = vmatprep.subr.mxu0 0.0
        %1548 = vmatpush1.msra.mxu0 0.0
        %1549 = vmatprep.subr.mxu0 0.0
        %1550 = vmatpush1.msra.mxu0 0.0
        %1551 = vmatprep.subr.mxu0 0.0
        %1552 = vmatpush1.msra.mxu0 0.0
        %1553 = vmatprep.subr.mxu0 0.0
        %1554 = vmatpush1.msra.mxu0 0.0
        %1555 = vmatprep.subr.mxu0 0.0
        %1556 = vmatpush1.msra.mxu0 0.0
        %1557 = vmatprep.subr.mxu0 0.0
        %1558 = vmatpush1.msra.mxu0 0.0
        %1559 = vmatprep.subr.mxu0 0.0
        %1560 = vmatpush1.msra.mxu0 0.0
        %1561 = vmatprep.subr.mxu0 0.0
        %1562 = vmatpush1.msra.mxu0 0.0
        %1563 = vmatprep.subr.mxu0 0.0
        %1564 = vmatpush1.msra.mxu0 0.0
        %1565 = vmatprep.mubr.f32.mxu0 %v1499
        %1566 = vmatmul.mubr.f32.gmra.mrb[0].mxu0 %v1493
        %v1567 = vpop.f32.mrb[0].mxu0
        %v1568 = vadd.f32 0.0, %v1567
        %v1569 = vpop.f32.mrb[0].mxu0
        %1570 = vdwg.mxu0
        %v1571 = vlaneseq
        %v1572 = vshrl.u32 %v1571, 7
        %v1573 = vsub.s32 0, %v1572
        %v1574 = vrot.slane %v471, %v1573
        %v1575 = vlaneseq
        %v1576 = vshrl.u32 %v1575, 7
        %v1577 = vsub.s32 1, %v1576
        %v1578 = vrot.slane %v471, %v1577
        %v1580 = vsel %vm1336, %v1578, 0
        %1582 = vmatprep.subr.mxu0 0.0
        %1583 = vmatpush1.msra.mxu0 %v689
        %1584 = vmatprep.subr.mxu0 0.0
        %1585 = vmatpush1.msra.mxu0 %v690
        %1586 = vmatprep.subr.mxu0 0.0
        %1587 = vmatpush1.msra.mxu0 %v691
        %1588 = vmatprep.subr.mxu0 0.0
        %1589 = vmatpush1.msra.mxu0 %v692
        %1590 = vmatprep.subr.mxu0 0.0
        %1591 = vmatpush1.msra.mxu0 %v693
        %1592 = vmatprep.subr.mxu0 0.0
        %1593 = vmatpush1.msra.mxu0 %v694
        %1594 = vmatprep.subr.mxu0 0.0
        %1595 = vmatpush1.msra.mxu0 %v695
        %1596 = vmatprep.subr.mxu0 0.0
        %1597 = vmatpush1.msra.mxu0 %v696
        %1598 = vmatprep.subr.mxu0 0.0
        %1599 = vmatpush1.msra.mxu0 %v697
        %1600 = vmatprep.subr.mxu0 0.0
        %1601 = vmatpush1.msra.mxu0 %v698
        %1602 = vmatprep.subr.mxu0 0.0
        %1603 = vmatpush1.msra.mxu0 %v699
        %1604 = vmatprep.subr.mxu0 0.0
        %1605 = vmatpush1.msra.mxu0 %v700
        %1606 = vmatprep.subr.mxu0 0.0
        %1607 = vmatpush1.msra.mxu0 %v701
        %1608 = vmatprep.subr.mxu0 0.0
        %1609 = vmatpush1.msra.mxu0 %v702
        %1610 = vmatprep.subr.mxu0 0.0
        %1611 = vmatpush1.msra.mxu0 %v703
        %1612 = vmatprep.subr.mxu0 0.0
        %1613 = vmatpush1.msra.mxu0 %v704
        %1614 = vmatprep.subr.mxu0 0.0
        %1615 = vmatpush1.msra.mxu0 %v705
        %1616 = vmatprep.subr.mxu0 0.0
        %1617 = vmatpush1.msra.mxu0 %v706
        %1618 = vmatprep.subr.mxu0 0.0
        %1619 = vmatpush1.msra.mxu0 %v707
        %1620 = vmatprep.subr.mxu0 0.0
        %1621 = vmatpush1.msra.mxu0 %v708
        %1622 = vmatprep.subr.mxu0 0.0
        %1623 = vmatpush1.msra.mxu0 %v709
        %1624 = vmatprep.subr.mxu0 0.0
        %1625 = vmatpush1.msra.mxu0 %v710
        %1626 = vmatprep.subr.mxu0 0.0
        %1627 = vmatpush1.msra.mxu0 0.0
        %1628 = vmatprep.subr.mxu0 0.0
        %1629 = vmatpush1.msra.mxu0 0.0
        %1630 = vmatprep.subr.mxu0 0.0
        %1631 = vmatpush1.msra.mxu0 0.0
        %1632 = vmatprep.subr.mxu0 0.0
        %1633 = vmatpush1.msra.mxu0 0.0
        %1634 = vmatprep.subr.mxu0 0.0
        %1635 = vmatpush1.msra.mxu0 0.0
        %1636 = vmatprep.subr.mxu0 0.0
        %1637 = vmatpush1.msra.mxu0 0.0
        %1638 = vmatprep.subr.mxu0 0.0
        %1639 = vmatpush1.msra.mxu0 0.0
        %1640 = vmatprep.subr.mxu0 0.0
        %1641 = vmatpush1.msra.mxu0 0.0
        %1642 = vmatprep.subr.mxu0 0.0
        %1643 = vmatpush1.msra.mxu0 0.0
        %1644 = vmatprep.subr.mxu0 0.0
        %1645 = vmatpush1.msra.mxu0 0.0
        %1646 = vmatprep.mubr.f32.mxu0 %v1580
        %1647 = vmatmul.mubr.f32.gmra.mrb[0].mxu0 %v1574
        %v1648 = vpop.f32.mrb[0].mxu0
        %v1649 = vadd.f32 0.0, %v1648
        %v1650 = vpop.f32.mrb[0].mxu0
        %1651 = vdwg.mxu0
        %v1652 = vlaneseq
        %v1653 = vshrl.u32 %v1652, 7
        %v1654 = vsub.s32 0, %v1653
        %v1655 = vrot.slane %v454, %v1654
        %v1656 = vlaneseq
        %v1657 = vshrl.u32 %v1656, 7
        %v1658 = vsub.s32 1, %v1657
        %v1659 = vrot.slane %v454, %v1658
        %v1661 = vsel %vm1336, %v1659, 0
        %1663 = vmatprep.subr.mxu0 0.0
        %1664 = vmatpush1.msra.mxu0 %v711
        %1665 = vmatprep.subr.mxu0 0.0
        %1666 = vmatpush1.msra.mxu0 %v712
        %1667 = vmatprep.subr.mxu0 0.0
        %1668 = vmatpush1.msra.mxu0 %v713
        %1669 = vmatprep.subr.mxu0 0.0
        %1670 = vmatpush1.msra.mxu0 %v714
        %1671 = vmatprep.subr.mxu0 0.0
        %1672 = vmatpush1.msra.mxu0 %v715
        %1673 = vmatprep.subr.mxu0 0.0
        %1674 = vmatpush1.msra.mxu0 %v716
        %1675 = vmatprep.subr.mxu0 0.0
        %1676 = vmatpush1.msra.mxu0 %v717
        %1677 = vmatprep.subr.mxu0 0.0
        %1678 = vmatpush1.msra.mxu0 %v718
        %1679 = vmatprep.subr.mxu0 0.0
        %1680 = vmatpush1.msra.mxu0 %v719
        %1681 = vmatprep.subr.mxu0 0.0
        %1682 = vmatpush1.msra.mxu0 %v720
        %1683 = vmatprep.subr.mxu0 0.0
        %1684 = vmatpush1.msra.mxu0 %v721
        %1685 = vmatprep.subr.mxu0 0.0
        %1686 = vmatpush1.msra.mxu0 %v722
        %1687 = vmatprep.subr.mxu0 0.0
        %1688 = vmatpush1.msra.mxu0 %v723
        %1689 = vmatprep.subr.mxu0 0.0
        %1690 = vmatpush1.msra.mxu0 %v724
        %1691 = vmatprep.subr.mxu0 0.0
        %1692 = vmatpush1.msra.mxu0 %v725
        %1693 = vmatprep.subr.mxu0 0.0
        %1694 = vmatpush1.msra.mxu0 %v726
        %1695 = vmatprep.subr.mxu0 0.0
        %1696 = vmatpush1.msra.mxu0 %v727
        %1697 = vmatprep.subr.mxu0 0.0
        %1698 = vmatpush1.msra.mxu0 %v728
        %1699 = vmatprep.subr.mxu0 0.0
        %1700 = vmatpush1.msra.mxu0 %v729
        %1701 = vmatprep.subr.mxu0 0.0
        %1702 = vmatpush1.msra.mxu0 %v730
        %1703 = vmatprep.subr.mxu0 0.0
        %1704 = vmatpush1.msra.mxu0 %v731
        %1705 = vmatprep.subr.mxu0 0.0
        %1706 = vmatpush1.msra.mxu0 %v732
        %1707 = vmatprep.subr.mxu0 0.0
        %1708 = vmatpush1.msra.mxu0 0.0
        %1709 = vmatprep.subr.mxu0 0.0
        %1710 = vmatpush1.msra.mxu0 0.0
        %1711 = vmatprep.subr.mxu0 0.0
        %1712 = vmatpush1.msra.mxu0 0.0
        %1713 = vmatprep.subr.mxu0 0.0
        %1714 = vmatpush1.msra.mxu0 0.0
        %1715 = vmatprep.subr.mxu0 0.0
        %1716 = vmatpush1.msra.mxu0 0.0
        %1717 = vmatprep.subr.mxu0 0.0
        %1718 = vmatpush1.msra.mxu0 0.0
        %1719 = vmatprep.subr.mxu0 0.0
        %1720 = vmatpush1.msra.mxu0 0.0
        %1721 = vmatprep.subr.mxu0 0.0
        %1722 = vmatpush1.msra.mxu0 0.0
        %1723 = vmatprep.subr.mxu0 0.0
        %1724 = vmatpush1.msra.mxu0 0.0
        %1725 = vmatprep.subr.mxu0 0.0
        %1726 = vmatpush1.msra.mxu0 0.0
        %1727 = vmatprep.mubr.f32.mxu0 %v1661
        %1728 = vmatmul.mubr.f32.gmra.mrb[0].mxu0 %v1655
        %v1729 = vpop.f32.mrb[0].mxu0
        %v1730 = vadd.f32 0.0, %v1729
        %v1731 = vpop.f32.mrb[0].mxu0
        %1732 = vdwg.mxu0
        %v1733 = vlaneseq
        %v1734 = vshrl.u32 %v1733, 7
        %v1735 = vsub.s32 0, %v1734
        %v1736 = vrot.slane %v468, %v1735
        %v1737 = vlaneseq
        %v1738 = vshrl.u32 %v1737, 7
        %v1739 = vsub.s32 1, %v1738
        %v1740 = vrot.slane %v468, %v1739
        %v1742 = vsel %vm1336, %v1740, 0
        %1744 = vmatprep.subr.mxu0 0.0
        %1745 = vmatpush1.msra.mxu0 %v733
        %1746 = vmatprep.subr.mxu0 0.0
        %1747 = vmatpush1.msra.mxu0 %v734
        %1748 = vmatprep.subr.mxu0 0.0
        %1749 = vmatpush1.msra.mxu0 %v735
        %1750 = vmatprep.subr.mxu0 0.0
        %1751 = vmatpush1.msra.mxu0 %v736
        %1752 = vmatprep.subr.mxu0 0.0
        %1753 = vmatpush1.msra.mxu0 %v737
        %1754 = vmatprep.subr.mxu0 0.0
        %1755 = vmatpush1.msra.mxu0 %v738
        %1756 = vmatprep.subr.mxu0 0.0
        %1757 = vmatpush1.msra.mxu0 %v739
        %1758 = vmatprep.subr.mxu0 0.0
        %1759 = vmatpush1.msra.mxu0 %v740
        %1760 = vmatprep.subr.mxu0 0.0
        %1761 = vmatpush1.msra.mxu0 %v741
        %1762 = vmatprep.subr.mxu0 0.0
        %1763 = vmatpush1.msra.mxu0 %v742
        %1764 = vmatprep.subr.mxu0 0.0
        %1765 = vmatpush1.msra.mxu0 %v743
        %1766 = vmatprep.subr.mxu0 0.0
        %1767 = vmatpush1.msra.mxu0 %v744
        %1768 = vmatprep.subr.mxu0 0.0
        %1769 = vmatpush1.msra.mxu0 %v745
        %1770 = vmatprep.subr.mxu0 0.0
        %1771 = vmatpush1.msra.mxu0 %v746
        %1772 = vmatprep.subr.mxu0 0.0
        %1773 = vmatpush1.msra.mxu0 %v747
        %1774 = vmatprep.subr.mxu0 0.0
        %1775 = vmatpush1.msra.mxu0 %v748
        %1776 = vmatprep.subr.mxu0 0.0
        %1777 = vmatpush1.msra.mxu0 %v749
        %1778 = vmatprep.subr.mxu0 0.0
        %1779 = vmatpush1.msra.mxu0 %v750
        %1780 = vmatprep.subr.mxu0 0.0
        %1781 = vmatpush1.msra.mxu0 %v751
        %1782 = vmatprep.subr.mxu0 0.0
        %1783 = vmatpush1.msra.mxu0 %v752
        %1784 = vmatprep.subr.mxu0 0.0
        %1785 = vmatpush1.msra.mxu0 %v753
        %1786 = vmatprep.subr.mxu0 0.0
        %1787 = vmatpush1.msra.mxu0 %v754
        %1788 = vmatprep.subr.mxu0 0.0
        %1789 = vmatpush1.msra.mxu0 0.0
        %1790 = vmatprep.subr.mxu0 0.0
        %1791 = vmatpush1.msra.mxu0 0.0
        %1792 = vmatprep.subr.mxu0 0.0
        %1793 = vmatpush1.msra.mxu0 0.0
        %1794 = vmatprep.subr.mxu0 0.0
        %1795 = vmatpush1.msra.mxu0 0.0
        %1796 = vmatprep.subr.mxu0 0.0
        %1797 = vmatpush1.msra.mxu0 0.0
        %1798 = vmatprep.subr.mxu0 0.0
        %1799 = vmatpush1.msra.mxu0 0.0
        %1800 = vmatprep.subr.mxu0 0.0
        %1801 = vmatpush1.msra.mxu0 0.0
        %1802 = vmatprep.subr.mxu0 0.0
        %1803 = vmatpush1.msra.mxu0 0.0
        %1804 = vmatprep.subr.mxu0 0.0
        %1805 = vmatpush1.msra.mxu0 0.0
        %1806 = vmatprep.subr.mxu0 0.0
        %1807 = vmatpush1.msra.mxu0 0.0
        %1808 = vmatprep.mubr.f32.mxu0 %v1742
        %1809 = vmatmul.mubr.f32.gmra.mrb[0].mxu0 %v1736
        %v1810 = vpop.f32.mrb[0].mxu0
        %v1811 = vadd.f32 0.0, %v1810
        %v1812 = vpop.f32.mrb[0].mxu0
        %1813 = vdwg.mxu0
        %v1814 = vlaneseq
        %v1815 = vshrl.u32 %v1814, 7
        %v1816 = vsub.s32 0, %v1815
        %v1817 = vrot.slane %v470, %v1816
        %v1818 = vlaneseq
        %v1819 = vshrl.u32 %v1818, 7
        %v1820 = vsub.s32 1, %v1819
        %v1821 = vrot.slane %v470, %v1820
        %v1823 = vsel %vm1336, %v1821, 0
        %1825 = vmatprep.subr.mxu0 0.0
        %1826 = vmatpush1.msra.mxu0 %v755
        %1827 = vmatprep.subr.mxu0 0.0
        %1828 = vmatpush1.msra.mxu0 %v756
        %1829 = vmatprep.subr.mxu0 0.0
        %1830 = vmatpush1.msra.mxu0 %v757
        %1831 = vmatprep.subr.mxu0 0.0
        %1832 = vmatpush1.msra.mxu0 %v758
        %1833 = vmatprep.subr.mxu0 0.0
        %1834 = vmatpush1.msra.mxu0 %v759
        %1835 = vmatprep.subr.mxu0 0.0
        %1836 = vmatpush1.msra.mxu0 %v760
        %1837 = vmatprep.subr.mxu0 0.0
        %1838 = vmatpush1.msra.mxu0 %v761
        %1839 = vmatprep.subr.mxu0 0.0
        %1840 = vmatpush1.msra.mxu0 %v762
        %1841 = vmatprep.subr.mxu0 0.0
        %1842 = vmatpush1.msra.mxu0 %v763
        %1843 = vmatprep.subr.mxu0 0.0
        %1844 = vmatpush1.msra.mxu0 %v764
        %1845 = vmatprep.subr.mxu0 0.0
        %1846 = vmatpush1.msra.mxu0 %v765
        %1847 = vmatprep.subr.mxu0 0.0
        %1848 = vmatpush1.msra.mxu0 %v766
        %1849 = vmatprep.subr.mxu0 0.0
        %1850 = vmatpush1.msra.mxu0 %v767
        %1851 = vmatprep.subr.mxu0 0.0
        %1852 = vmatpush1.msra.mxu0 %v768
        %1853 = vmatprep.subr.mxu0 0.0
        %1854 = vmatpush1.msra.mxu0 %v769
        %1855 = vmatprep.subr.mxu0 0.0
        %1856 = vmatpush1.msra.mxu0 %v770
        %1857 = vmatprep.subr.mxu0 0.0
        %1858 = vmatpush1.msra.mxu0 %v771
        %1859 = vmatprep.subr.mxu0 0.0
        %1860 = vmatpush1.msra.mxu0 %v772
        %1861 = vmatprep.subr.mxu0 0.0
        %1862 = vmatpush1.msra.mxu0 %v773
        %1863 = vmatprep.subr.mxu0 0.0
        %1864 = vmatpush1.msra.mxu0 %v774
        %1865 = vmatprep.subr.mxu0 0.0
        %1866 = vmatpush1.msra.mxu0 %v775
        %1867 = vmatprep.subr.mxu0 0.0
        %1868 = vmatpush1.msra.mxu0 %v776
        %1869 = vmatprep.subr.mxu0 0.0
        %1870 = vmatpush1.msra.mxu0 0.0
        %1871 = vmatprep.subr.mxu0 0.0
        %1872 = vmatpush1.msra.mxu0 0.0
        %1873 = vmatprep.subr.mxu0 0.0
        %1874 = vmatpush1.msra.mxu0 0.0
        %1875 = vmatprep.subr.mxu0 0.0
        %1876 = vmatpush1.msra.mxu0 0.0
        %1877 = vmatprep.subr.mxu0 0.0
        %1878 = vmatpush1.msra.mxu0 0.0
        %1879 = vmatprep.subr.mxu0 0.0
        %1880 = vmatpush1.msra.mxu0 0.0
        %1881 = vmatprep.subr.mxu0 0.0
        %1882 = vmatpush1.msra.mxu0 0.0
        %1883 = vmatprep.subr.mxu0 0.0
        %1884 = vmatpush1.msra.mxu0 0.0
        %1885 = vmatprep.subr.mxu0 0.0
        %1886 = vmatpush1.msra.mxu0 0.0
        %1887 = vmatprep.subr.mxu0 0.0
        %1888 = vmatpush1.msra.mxu0 0.0
        %1889 = vmatprep.mubr.f32.mxu0 %v1823
        %1890 = vmatmul.mubr.f32.gmra.mrb[0].mxu0 %v1817
        %v1891 = vpop.f32.mrb[0].mxu0
        %v1892 = vadd.f32 0.0, %v1891
        %v1893 = vpop.f32.mrb[0].mxu0
        %1894 = vdwg.mxu0
        %v1895 = vlaneseq
        %v1896 = vshrl.u32 %v1895, 7
        %v1897 = vsub.s32 0, %v1896
        %v1898 = vrot.slane %v472, %v1897
        %v1899 = vlaneseq
        %v1900 = vshrl.u32 %v1899, 7
        %v1901 = vsub.s32 1, %v1900
        %v1902 = vrot.slane %v472, %v1901
        %v1904 = vsel %vm1336, %v1902, 0
        %1906 = vmatprep.subr.mxu0 0.0
        %1907 = vmatpush1.msra.mxu0 %v777
        %1908 = vmatprep.subr.mxu0 0.0
        %1909 = vmatpush1.msra.mxu0 %v778
        %1910 = vmatprep.subr.mxu0 0.0
        %1911 = vmatpush1.msra.mxu0 %v779
        %1912 = vmatprep.subr.mxu0 0.0
        %1913 = vmatpush1.msra.mxu0 %v780
        %1914 = vmatprep.subr.mxu0 0.0
        %1915 = vmatpush1.msra.mxu0 %v781
        %1916 = vmatprep.subr.mxu0 0.0
        %1917 = vmatpush1.msra.mxu0 %v782
        %1918 = vmatprep.subr.mxu0 0.0
        %1919 = vmatpush1.msra.mxu0 %v783
        %1920 = vmatprep.subr.mxu0 0.0
        %1921 = vmatpush1.msra.mxu0 %v784
        %1922 = vmatprep.subr.mxu0 0.0
        %1923 = vmatpush1.msra.mxu0 %v785
        %1924 = vmatprep.subr.mxu0 0.0
        %1925 = vmatpush1.msra.mxu0 %v786
        %1926 = vmatprep.subr.mxu0 0.0
        %1927 = vmatpush1.msra.mxu0 %v787
        %1928 = vmatprep.subr.mxu0 0.0
        %1929 = vmatpush1.msra.mxu0 %v788
        %1930 = vmatprep.subr.mxu0 0.0
        %1931 = vmatpush1.msra.mxu0 %v789
        %1932 = vmatprep.subr.mxu0 0.0
        %1933 = vmatpush1.msra.mxu0 %v790
        %1934 = vmatprep.subr.mxu0 0.0
        %1935 = vmatpush1.msra.mxu0 %v791
        %1936 = vmatprep.subr.mxu0 0.0
        %1937 = vmatpush1.msra.mxu0 %v792
        %1938 = vmatprep.subr.mxu0 0.0
        %1939 = vmatpush1.msra.mxu0 %v793
        %1940 = vmatprep.subr.mxu0 0.0
        %1941 = vmatpush1.msra.mxu0 %v794
        %1942 = vmatprep.subr.mxu0 0.0
        %1943 = vmatpush1.msra.mxu0 %v795
        %1944 = vmatprep.subr.mxu0 0.0
        %1945 = vmatpush1.msra.mxu0 %v796
        %1946 = vmatprep.subr.mxu0 0.0
        %1947 = vmatpush1.msra.mxu0 %v797
        %1948 = vmatprep.subr.mxu0 0.0
        %1949 = vmatpush1.msra.mxu0 %v798
        %1950 = vmatprep.subr.mxu0 0.0
        %1951 = vmatpush1.msra.mxu0 0.0
        %1952 = vmatprep.subr.mxu0 0.0
        %1953 = vmatpush1.msra.mxu0 0.0
        %1954 = vmatprep.subr.mxu0 0.0
        %1955 = vmatpush1.msra.mxu0 0.0
        %1956 = vmatprep.subr.mxu0 0.0
        %1957 = vmatpush1.msra.mxu0 0.0
        %1958 = vmatprep.subr.mxu0 0.0
        %1959 = vmatpush1.msra.mxu0 0.0
        %1960 = vmatprep.subr.mxu0 0.0
        %1961 = vmatpush1.msra.mxu0 0.0
        %1962 = vmatprep.subr.mxu0 0.0
        %1963 = vmatpush1.msra.mxu0 0.0
        %1964 = vmatprep.subr.mxu0 0.0
        %1965 = vmatpush1.msra.mxu0 0.0
        %1966 = vmatprep.subr.mxu0 0.0
        %1967 = vmatpush1.msra.mxu0 0.0
        %1968 = vmatprep.subr.mxu0 0.0
        %1969 = vmatpush1.msra.mxu0 0.0
        %1970 = vmatprep.mubr.f32.mxu0 %v1904
        %1971 = vmatmul.mubr.f32.gmra.mrb[0].mxu0 %v1898
        %v1972 = vpop.f32.mrb[0].mxu0
        %v1973 = vadd.f32 0.0, %v1972
        %v1974 = vpop.f32.mrb[0].mxu0
        %1975 = vdwg.mxu0
        %v1976 = vlaneseq
        %v1977 = vshrl.u32 %v1976, 7
        %v1978 = vsub.s32 0, %v1977
        %v1979 = vrot.slane %v497, %v1978
        %v1980 = vlaneseq
        %v1981 = vshrl.u32 %v1980, 7
        %v1982 = vsub.s32 1, %v1981
        %v1983 = vrot.slane %v497, %v1982
        %v1985 = vsel %vm1336, %v1983, 0
        %1987 = vmatprep.subr.mxu0 0.0
        %1988 = vmatpush1.msra.mxu0 %v799
        %1989 = vmatprep.subr.mxu0 0.0
        %1990 = vmatpush1.msra.mxu0 %v800
        %1991 = vmatprep.subr.mxu0 0.0
        %1992 = vmatpush1.msra.mxu0 %v801
        %1993 = vmatprep.subr.mxu0 0.0
        %1994 = vmatpush1.msra.mxu0 %v802
        %1995 = vmatprep.subr.mxu0 0.0
        %1996 = vmatpush1.msra.mxu0 %v803
        %1997 = vmatprep.subr.mxu0 0.0
        %1998 = vmatpush1.msra.mxu0 %v804
        %1999 = vmatprep.subr.mxu0 0.0
        %2000 = vmatpush1.msra.mxu0 %v805
        %2001 = vmatprep.subr.mxu0 0.0
        %2002 = vmatpush1.msra.mxu0 %v806
        %2003 = vmatprep.subr.mxu0 0.0
        %2004 = vmatpush1.msra.mxu0 %v807
        %2005 = vmatprep.subr.mxu0 0.0
        %2006 = vmatpush1.msra.mxu0 %v808
        %2007 = vmatprep.subr.mxu0 0.0
        %2008 = vmatpush1.msra.mxu0 %v809
        %2009 = vmatprep.subr.mxu0 0.0
        %2010 = vmatpush1.msra.mxu0 %v810
        %2011 = vmatprep.subr.mxu0 0.0
        %2012 = vmatpush1.msra.mxu0 %v811
        %2013 = vmatprep.subr.mxu0 0.0
        %2014 = vmatpush1.msra.mxu0 %v812
        %2015 = vmatprep.subr.mxu0 0.0
        %2016 = vmatpush1.msra.mxu0 %v813
        %2017 = vmatprep.subr.mxu0 0.0
        %2018 = vmatpush1.msra.mxu0 %v814
        %2019 = vmatprep.subr.mxu0 0.0
        %2020 = vmatpush1.msra.mxu0 %v815
        %2021 = vmatprep.subr.mxu0 0.0
        %2022 = vmatpush1.msra.mxu0 %v816
        %2023 = vmatprep.subr.mxu0 0.0
        %2024 = vmatpush1.msra.mxu0 %v817
        %2025 = vmatprep.subr.mxu0 0.0
        %2026 = vmatpush1.msra.mxu0 %v818
        %2027 = vmatprep.subr.mxu0 0.0
        %2028 = vmatpush1.msra.mxu0 %v819
        %2029 = vmatprep.subr.mxu0 0.0
        %2030 = vmatpush1.msra.mxu0 %v820
        %2031 = vmatprep.subr.mxu0 0.0
        %2032 = vmatpush1.msra.mxu0 0.0
        %2033 = vmatprep.subr.mxu0 0.0
        %2034 = vmatpush1.msra.mxu0 0.0
        %2035 = vmatprep.subr.mxu0 0.0
        %2036 = vmatpush1.msra.mxu0 0.0
        %2037 = vmatprep.subr.mxu0 0.0
        %2038 = vmatpush1.msra.mxu0 0.0
        %2039 = vmatprep.subr.mxu0 0.0
        %2040 = vmatpush1.msra.mxu0 0.0
        %2041 = vmatprep.subr.mxu0 0.0
        %2042 = vmatpush1.msra.mxu0 0.0
        %2043 = vmatprep.subr.mxu0 0.0
        %2044 = vmatpush1.msra.mxu0 0.0
        %2045 = vmatprep.subr.mxu0 0.0
        %2046 = vmatpush1.msra.mxu0 0.0
        %2047 = vmatprep.subr.mxu0 0.0
        %2048 = vmatpush1.msra.mxu0 0.0
        %2049 = vmatprep.subr.mxu0 0.0
        %2050 = vmatpush1.msra.mxu0 0.0
        %2051 = vmatprep.mubr.f32.mxu0 %v1985
        %2052 = vmatmul.mubr.f32.gmra.mrb[0].mxu0 %v1979
        %v2053 = vpop.f32.mrb[0].mxu0
        %v2054 = vadd.f32 0.0, %v2053
        %v2055 = vpop.f32.mrb[0].mxu0
        %2056 = vdwg.mxu0
        %v2057 = vlaneseq
        %v2058 = vshrl.u32 %v2057, 7
        %v2059 = vsub.s32 0, %v2058
        %v2060 = vrot.slane %v511, %v2059
        %v2061 = vlaneseq
        %v2062 = vshrl.u32 %v2061, 7
        %v2063 = vsub.s32 1, %v2062
        %v2064 = vrot.slane %v511, %v2063
        %v2066 = vsel %vm1336, %v2064, 0
        %2068 = vmatprep.subr.mxu0 0.0
        %2069 = vmatpush1.msra.mxu0 %v821
        %2070 = vmatprep.subr.mxu0 0.0
        %2071 = vmatpush1.msra.mxu0 %v822
        %2072 = vmatprep.subr.mxu0 0.0
        %2073 = vmatpush1.msra.mxu0 %v823
        %2074 = vmatprep.subr.mxu0 0.0
        %2075 = vmatpush1.msra.mxu0 %v824
        %2076 = vmatprep.subr.mxu0 0.0
        %2077 = vmatpush1.msra.mxu0 %v825
        %2078 = vmatprep.subr.mxu0 0.0
        %2079 = vmatpush1.msra.mxu0 %v826
        %2080 = vmatprep.subr.mxu0 0.0
        %2081 = vmatpush1.msra.mxu0 %v827
        %2082 = vmatprep.subr.mxu0 0.0
        %2083 = vmatpush1.msra.mxu0 %v828
        %2084 = vmatprep.subr.mxu0 0.0
        %2085 = vmatpush1.msra.mxu0 %v829
        %2086 = vmatprep.subr.mxu0 0.0
        %2087 = vmatpush1.msra.mxu0 %v830
        %2088 = vmatprep.subr.mxu0 0.0
        %2089 = vmatpush1.msra.mxu0 %v831
        %2090 = vmatprep.subr.mxu0 0.0
        %2091 = vmatpush1.msra.mxu0 %v832
        %2092 = vmatprep.subr.mxu0 0.0
        %2093 = vmatpush1.msra.mxu0 %v833
        %2094 = vmatprep.subr.mxu0 0.0
        %2095 = vmatpush1.msra.mxu0 %v834
        %2096 = vmatprep.subr.mxu0 0.0
        %2097 = vmatpush1.msra.mxu0 %v835
        %2098 = vmatprep.subr.mxu0 0.0
        %2099 = vmatpush1.msra.mxu0 %v836
        %2100 = vmatprep.subr.mxu0 0.0
        %2101 = vmatpush1.msra.mxu0 %v837
        %2102 = vmatprep.subr.mxu0 0.0
        %2103 = vmatpush1.msra.mxu0 %v838
        %2104 = vmatprep.subr.mxu0 0.0
        %2105 = vmatpush1.msra.mxu0 %v839
        %2106 = vmatprep.subr.mxu0 0.0
        %2107 = vmatpush1.msra.mxu0 %v840
        %2108 = vmatprep.subr.mxu0 0.0
        %2109 = vmatpush1.msra.mxu0 %v841
        %2110 = vmatprep.subr.mxu0 0.0
        %2111 = vmatpush1.msra.mxu0 %v842
        %2112 = vmatprep.subr.mxu0 0.0
        %2113 = vmatpush1.msra.mxu0 0.0
        %2114 = vmatprep.subr.mxu0 0.0
        %2115 = vmatpush1.msra.mxu0 0.0
        %2116 = vmatprep.subr.mxu0 0.0
        %2117 = vmatpush1.msra.mxu0 0.0
        %2118 = vmatprep.subr.mxu0 0.0
        %2119 = vmatpush1.msra.mxu0 0.0
        %2120 = vmatprep.subr.mxu0 0.0
        %2121 = vmatpush1.msra.mxu0 0.0
        %2122 = vmatprep.subr.mxu0 0.0
        %2123 = vmatpush1.msra.mxu0 0.0
        %2124 = vmatprep.subr.mxu0 0.0
        %2125 = vmatpush1.msra.mxu0 0.0
        %2126 = vmatprep.subr.mxu0 0.0
        %2127 = vmatpush1.msra.mxu0 0.0
        %2128 = vmatprep.subr.mxu0 0.0
        %2129 = vmatpush1.msra.mxu0 0.0
        %2130 = vmatprep.subr.mxu0 0.0
        %2131 = vmatpush1.msra.mxu0 0.0
        %2132 = vmatprep.mubr.f32.mxu0 %v2066
        %2133 = vmatmul.mubr.f32.gmra.mrb[0].mxu0 %v2060
        %v2134 = vpop.f32.mrb[0].mxu0
        %v2135 = vadd.f32 0.0, %v2134
        %v2136 = vpop.f32.mrb[0].mxu0
        %2137 = vdwg.mxu0
        %v2138 = vlaneseq
        %v2139 = vshrl.u32 %v2138, 7
        %v2140 = vsub.s32 0, %v2139
        %v2141 = vrot.slane %v519, %v2140
        %v2142 = vlaneseq
        %v2143 = vshrl.u32 %v2142, 7
        %v2144 = vsub.s32 1, %v2143
        %v2145 = vrot.slane %v519, %v2144
        %v2147 = vsel %vm1336, %v2145, 0
        %2149 = vmatprep.subr.mxu0 0.0
        %2150 = vmatpush1.msra.mxu0 %v843
        %2151 = vmatprep.subr.mxu0 0.0
        %2152 = vmatpush1.msra.mxu0 %v844
        %2153 = vmatprep.subr.mxu0 0.0
        %2154 = vmatpush1.msra.mxu0 %v845
        %2155 = vmatprep.subr.mxu0 0.0
        %2156 = vmatpush1.msra.mxu0 %v846
        %2157 = vmatprep.subr.mxu0 0.0
        %2158 = vmatpush1.msra.mxu0 %v847
        %2159 = vmatprep.subr.mxu0 0.0
        %2160 = vmatpush1.msra.mxu0 %v848
        %2161 = vmatprep.subr.mxu0 0.0
        %2162 = vmatpush1.msra.mxu0 %v849
        %2163 = vmatprep.subr.mxu0 0.0
        %2164 = vmatpush1.msra.mxu0 %v850
        %2165 = vmatprep.subr.mxu0 0.0
        %2166 = vmatpush1.msra.mxu0 %v851
        %2167 = vmatprep.subr.mxu0 0.0
        %2168 = vmatpush1.msra.mxu0 %v852
        %2169 = vmatprep.subr.mxu0 0.0
        %2170 = vmatpush1.msra.mxu0 %v853
        %2171 = vmatprep.subr.mxu0 0.0
        %2172 = vmatpush1.msra.mxu0 %v854
        %2173 = vmatprep.subr.mxu0 0.0
        %2174 = vmatpush1.msra.mxu0 %v855
        %2175 = vmatprep.subr.mxu0 0.0
        %2176 = vmatpush1.msra.mxu0 %v856
        %2177 = vmatprep.subr.mxu0 0.0
        %2178 = vmatpush1.msra.mxu0 %v857
        %2179 = vmatprep.subr.mxu0 0.0
        %2180 = vmatpush1.msra.mxu0 %v858
        %2181 = vmatprep.subr.mxu0 0.0
        %2182 = vmatpush1.msra.mxu0 %v859
        %2183 = vmatprep.subr.mxu0 0.0
        %2184 = vmatpush1.msra.mxu0 %v860
        %2185 = vmatprep.subr.mxu0 0.0
        %2186 = vmatpush1.msra.mxu0 %v861
        %2187 = vmatprep.subr.mxu0 0.0
        %2188 = vmatpush1.msra.mxu0 %v862
        %2189 = vmatprep.subr.mxu0 0.0
        %2190 = vmatpush1.msra.mxu0 %v863
        %2191 = vmatprep.subr.mxu0 0.0
        %2192 = vmatpush1.msra.mxu0 %v864
        %2193 = vmatprep.subr.mxu0 0.0
        %2194 = vmatpush1.msra.mxu0 0.0
        %2195 = vmatprep.subr.mxu0 0.0
        %2196 = vmatpush1.msra.mxu0 0.0
        %2197 = vmatprep.subr.mxu0 0.0
        %2198 = vmatpush1.msra.mxu0 0.0
        %2199 = vmatprep.subr.mxu0 0.0
        %2200 = vmatpush1.msra.mxu0 0.0
        %2201 = vmatprep.subr.mxu0 0.0
        %2202 = vmatpush1.msra.mxu0 0.0
        %2203 = vmatprep.subr.mxu0 0.0
        %2204 = vmatpush1.msra.mxu0 0.0
        %2205 = vmatprep.subr.mxu0 0.0
        %2206 = vmatpush1.msra.mxu0 0.0
        %2207 = vmatprep.subr.mxu0 0.0
        %2208 = vmatpush1.msra.mxu0 0.0
        %2209 = vmatprep.subr.mxu0 0.0
        %2210 = vmatpush1.msra.mxu0 0.0
        %2211 = vmatprep.subr.mxu0 0.0
        %2212 = vmatpush1.msra.mxu0 0.0
        %2213 = vmatprep.mubr.f32.mxu0 %v2147
        %2214 = vmatmul.mubr.f32.gmra.mrb[0].mxu0 %v2141
        %v2215 = vpop.f32.mrb[0].mxu0
        %v2216 = vadd.f32 0.0, %v2215
        %v2217 = vpop.f32.mrb[0].mxu0
        %2218 = vdwg.mxu0
        %v2219 = vlaneseq
        %v2220 = vshrl.u32 %v2219, 7
        %v2221 = vsub.s32 0, %v2220
        %v2222 = vrot.slane %v521, %v2221
        %v2223 = vlaneseq
        %v2224 = vshrl.u32 %v2223, 7
        %v2225 = vsub.s32 1, %v2224
        %v2226 = vrot.slane %v521, %v2225
        %v2228 = vsel %vm1336, %v2226, 0
        %2230 = vmatprep.subr.mxu0 0.0
        %2231 = vmatpush1.msra.mxu0 %v865
        %2232 = vmatprep.subr.mxu0 0.0
        %2233 = vmatpush1.msra.mxu0 %v866
        %2234 = vmatprep.subr.mxu0 0.0
        %2235 = vmatpush1.msra.mxu0 %v867
        %2236 = vmatprep.subr.mxu0 0.0
        %2237 = vmatpush1.msra.mxu0 %v868
        %2238 = vmatprep.subr.mxu0 0.0
        %2239 = vmatpush1.msra.mxu0 %v869
        %2240 = vmatprep.subr.mxu0 0.0
        %2241 = vmatpush1.msra.mxu0 %v870
        %2242 = vmatprep.subr.mxu0 0.0
        %2243 = vmatpush1.msra.mxu0 %v871
        %2244 = vmatprep.subr.mxu0 0.0
        %2245 = vmatpush1.msra.mxu0 %v872
        %2246 = vmatprep.subr.mxu0 0.0
        %2247 = vmatpush1.msra.mxu0 %v873
        %2248 = vmatprep.subr.mxu0 0.0
        %2249 = vmatpush1.msra.mxu0 %v874
        %2250 = vmatprep.subr.mxu0 0.0
        %2251 = vmatpush1.msra.mxu0 %v875
        %2252 = vmatprep.subr.mxu0 0.0
        %2253 = vmatpush1.msra.mxu0 %v876
        %2254 = vmatprep.subr.mxu0 0.0
        %2255 = vmatpush1.msra.mxu0 %v877
        %2256 = vmatprep.subr.mxu0 0.0
        %2257 = vmatpush1.msra.mxu0 %v878
        %2258 = vmatprep.subr.mxu0 0.0
        %2259 = vmatpush1.msra.mxu0 %v879
        %2260 = vmatprep.subr.mxu0 0.0
        %2261 = vmatpush1.msra.mxu0 %v880
        %2262 = vmatprep.subr.mxu0 0.0
        %2263 = vmatpush1.msra.mxu0 %v881
        %2264 = vmatprep.subr.mxu0 0.0
        %2265 = vmatpush1.msra.mxu0 %v882
        %2266 = vmatprep.subr.mxu0 0.0
        %2267 = vmatpush1.msra.mxu0 %v883
        %2268 = vmatprep.subr.mxu0 0.0
        %2269 = vmatpush1.msra.mxu0 %v884
        %2270 = vmatprep.subr.mxu0 0.0
        %2271 = vmatpush1.msra.mxu0 %v885
        %2272 = vmatprep.subr.mxu0 0.0
        %2273 = vmatpush1.msra.mxu0 %v886
        %2274 = vmatprep.subr.mxu0 0.0
        %2275 = vmatpush1.msra.mxu0 0.0
        %2276 = vmatprep.subr.mxu0 0.0
        %2277 = vmatpush1.msra.mxu0 0.0
        %2278 = vmatprep.subr.mxu0 0.0
        %2279 = vmatpush1.msra.mxu0 0.0
        %2280 = vmatprep.subr.mxu0 0.0
        %2281 = vmatpush1.msra.mxu0 0.0
        %2282 = vmatprep.subr.mxu0 0.0
        %2283 = vmatpush1.msra.mxu0 0.0
        %2284 = vmatprep.subr.mxu0 0.0
        %2285 = vmatpush1.msra.mxu0 0.0
        %2286 = vmatprep.subr.mxu0 0.0
        %2287 = vmatpush1.msra.mxu0 0.0
        %2288 = vmatprep.subr.mxu0 0.0
        %2289 = vmatpush1.msra.mxu0 0.0
        %2290 = vmatprep.subr.mxu0 0.0
        %2291 = vmatpush1.msra.mxu0 0.0
        %2292 = vmatprep.subr.mxu0 0.0
        %2293 = vmatpush1.msra.mxu0 0.0
        %2294 = vmatprep.mubr.f32.mxu0 %v2228
        %2295 = vmatmul.mubr.f32.gmra.mrb[0].mxu0 %v2222
        %v2296 = vpop.f32.mrb[0].mxu0
        %v2297 = vadd.f32 0.0, %v2296
        %v2298 = vpop.f32.mrb[0].mxu0
        %2299 = vdwg.mxu0
        %v2300 = vlaneseq
        %v2301 = vshrl.u32 %v2300, 7
        %v2302 = vsub.s32 0, %v2301
        %v2303 = vrot.slane %v504, %v2302
        %v2304 = vlaneseq
        %v2305 = vshrl.u32 %v2304, 7
        %v2306 = vsub.s32 1, %v2305
        %v2307 = vrot.slane %v504, %v2306
        %v2309 = vsel %vm1336, %v2307, 0
        %2311 = vmatprep.subr.mxu0 0.0
        %2312 = vmatpush1.msra.mxu0 %v887
        %2313 = vmatprep.subr.mxu0 0.0
        %2314 = vmatpush1.msra.mxu0 %v888
        %2315 = vmatprep.subr.mxu0 0.0
        %2316 = vmatpush1.msra.mxu0 %v889
        %2317 = vmatprep.subr.mxu0 0.0
        %2318 = vmatpush1.msra.mxu0 %v890
        %2319 = vmatprep.subr.mxu0 0.0
        %2320 = vmatpush1.msra.mxu0 %v891
        %2321 = vmatprep.subr.mxu0 0.0
        %2322 = vmatpush1.msra.mxu0 %v892
        %2323 = vmatprep.subr.mxu0 0.0
        %2324 = vmatpush1.msra.mxu0 %v893
        %2325 = vmatprep.subr.mxu0 0.0
        %2326 = vmatpush1.msra.mxu0 %v894
        %2327 = vmatprep.subr.mxu0 0.0
        %2328 = vmatpush1.msra.mxu0 %v895
        %2329 = vmatprep.subr.mxu0 0.0
        %2330 = vmatpush1.msra.mxu0 %v896
        %2331 = vmatprep.subr.mxu0 0.0
        %2332 = vmatpush1.msra.mxu0 %v897
        %2333 = vmatprep.subr.mxu0 0.0
        %2334 = vmatpush1.msra.mxu0 %v898
        %2335 = vmatprep.subr.mxu0 0.0
        %2336 = vmatpush1.msra.mxu0 %v899
        %2337 = vmatprep.subr.mxu0 0.0
        %2338 = vmatpush1.msra.mxu0 %v900
        %2339 = vmatprep.subr.mxu0 0.0
        %2340 = vmatpush1.msra.mxu0 %v901
        %2341 = vmatprep.subr.mxu0 0.0
        %2342 = vmatpush1.msra.mxu0 %v902
        %2343 = vmatprep.subr.mxu0 0.0
        %2344 = vmatpush1.msra.mxu0 %v903
        %2345 = vmatprep.subr.mxu0 0.0
        %2346 = vmatpush1.msra.mxu0 %v904
        %2347 = vmatprep.subr.mxu0 0.0
        %2348 = vmatpush1.msra.mxu0 %v905
        %2349 = vmatprep.subr.mxu0 0.0
        %2350 = vmatpush1.msra.mxu0 %v906
        %2351 = vmatprep.subr.mxu0 0.0
        %2352 = vmatpush1.msra.mxu0 %v907
        %2353 = vmatprep.subr.mxu0 0.0
        %2354 = vmatpush1.msra.mxu0 %v908
        %2355 = vmatprep.subr.mxu0 0.0
        %2356 = vmatpush1.msra.mxu0 0.0
        %2357 = vmatprep.subr.mxu0 0.0
        %2358 = vmatpush1.msra.mxu0 0.0
        %2359 = vmatprep.subr.mxu0 0.0
        %2360 = vmatpush1.msra.mxu0 0.0
        %2361 = vmatprep.subr.mxu0 0.0
        %2362 = vmatpush1.msra.mxu0 0.0
        %2363 = vmatprep.subr.mxu0 0.0
        %2364 = vmatpush1.msra.mxu0 0.0
        %2365 = vmatprep.subr.mxu0 0.0
        %2366 = vmatpush1.msra.mxu0 0.0
        %2367 = vmatprep.subr.mxu0 0.0
        %2368 = vmatpush1.msra.mxu0 0.0
        %2369 = vmatprep.subr.mxu0 0.0
        %2370 = vmatpush1.msra.mxu0 0.0
        %2371 = vmatprep.subr.mxu0 0.0
        %2372 = vmatpush1.msra.mxu0 0.0
        %2373 = vmatprep.subr.mxu0 0.0
        %2374 = vmatpush1.msra.mxu0 0.0
        %2375 = vmatprep.mubr.f32.mxu0 %v2309
        %2376 = vmatmul.mubr.f32.gmra.mrb[0].mxu0 %v2303
        %v2377 = vpop.f32.mrb[0].mxu0
        %v2378 = vadd.f32 0.0, %v2377
        %v2379 = vpop.f32.mrb[0].mxu0
        %2380 = vdwg.mxu0
        %v2381 = vlaneseq
        %v2382 = vshrl.u32 %v2381, 7
        %v2383 = vsub.s32 0, %v2382
        %v2384 = vrot.slane %v518, %v2383
        %v2385 = vlaneseq
        %v2386 = vshrl.u32 %v2385, 7
        %v2387 = vsub.s32 1, %v2386
        %v2388 = vrot.slane %v518, %v2387
        %v2390 = vsel %vm1336, %v2388, 0
        %2392 = vmatprep.subr.mxu0 0.0
        %2393 = vmatpush1.msra.mxu0 %v909
        %2394 = vmatprep.subr.mxu0 0.0
        %2395 = vmatpush1.msra.mxu0 %v910
        %2396 = vmatprep.subr.mxu0 0.0
        %2397 = vmatpush1.msra.mxu0 %v911
        %2398 = vmatprep.subr.mxu0 0.0
        %2399 = vmatpush1.msra.mxu0 %v912
        %2400 = vmatprep.subr.mxu0 0.0
        %2401 = vmatpush1.msra.mxu0 %v913
        %2402 = vmatprep.subr.mxu0 0.0
        %2403 = vmatpush1.msra.mxu0 %v914
        %2404 = vmatprep.subr.mxu0 0.0
        %2405 = vmatpush1.msra.mxu0 %v915
        %2406 = vmatprep.subr.mxu0 0.0
        %2407 = vmatpush1.msra.mxu0 %v916
        %2408 = vmatprep.subr.mxu0 0.0
        %2409 = vmatpush1.msra.mxu0 %v917
        %2410 = vmatprep.subr.mxu0 0.0
        %2411 = vmatpush1.msra.mxu0 %v918
        %2412 = vmatprep.subr.mxu0 0.0
        %2413 = vmatpush1.msra.mxu0 %v919
        %2414 = vmatprep.subr.mxu0 0.0
        %2415 = vmatpush1.msra.mxu0 %v920
        %2416 = vmatprep.subr.mxu0 0.0
        %2417 = vmatpush1.msra.mxu0 %v921
        %2418 = vmatprep.subr.mxu0 0.0
        %2419 = vmatpush1.msra.mxu0 %v922
        %2420 = vmatprep.subr.mxu0 0.0
        %2421 = vmatpush1.msra.mxu0 %v923
        %2422 = vmatprep.subr.mxu0 0.0
        %2423 = vmatpush1.msra.mxu0 %v924
        %2424 = vmatprep.subr.mxu0 0.0
        %2425 = vmatpush1.msra.mxu0 %v925
        %2426 = vmatprep.subr.mxu0 0.0
        %2427 = vmatpush1.msra.mxu0 %v926
        %2428 = vmatprep.subr.mxu0 0.0
        %2429 = vmatpush1.msra.mxu0 %v927
        %2430 = vmatprep.subr.mxu0 0.0
        %2431 = vmatpush1.msra.mxu0 %v928
        %2432 = vmatprep.subr.mxu0 0.0
        %2433 = vmatpush1.msra.mxu0 %v929
        %2434 = vmatprep.subr.mxu0 0.0
        %2435 = vmatpush1.msra.mxu0 %v930
        %2436 = vmatprep.subr.mxu0 0.0
        %2437 = vmatpush1.msra.mxu0 0.0
        %2438 = vmatprep.subr.mxu0 0.0
        %2439 = vmatpush1.msra.mxu0 0.0
        %2440 = vmatprep.subr.mxu0 0.0
        %2441 = vmatpush1.msra.mxu0 0.0
        %2442 = vmatprep.subr.mxu0 0.0
        %2443 = vmatpush1.msra.mxu0 0.0
        %2444 = vmatprep.subr.mxu0 0.0
        %2445 = vmatpush1.msra.mxu0 0.0
        %2446 = vmatprep.subr.mxu0 0.0
        %2447 = vmatpush1.msra.mxu0 0.0
        %2448 = vmatprep.subr.mxu0 0.0
        %2449 = vmatpush1.msra.mxu0 0.0
        %2450 = vmatprep.subr.mxu0 0.0
        %2451 = vmatpush1.msra.mxu0 0.0
        %2452 = vmatprep.subr.mxu0 0.0
        %2453 = vmatpush1.msra.mxu0 0.0
        %2454 = vmatprep.subr.mxu0 0.0
        %2455 = vmatpush1.msra.mxu0 0.0
        %2456 = vmatprep.mubr.f32.mxu0 %v2390
        %2457 = vmatmul.mubr.f32.gmra.mrb[0].mxu0 %v2384
        %v2458 = vpop.f32.mrb[0].mxu0
        %v2459 = vadd.f32 0.0, %v2458
        %v2460 = vpop.f32.mrb[0].mxu0
        %2461 = vdwg.mxu0
        %v2462 = vlaneseq
        %v2463 = vshrl.u32 %v2462, 7
        %v2464 = vsub.s32 0, %v2463
        %v2465 = vrot.slane %v520, %v2464
        %v2466 = vlaneseq
        %v2467 = vshrl.u32 %v2466, 7
        %v2468 = vsub.s32 1, %v2467
        %v2469 = vrot.slane %v520, %v2468
        %v2471 = vsel %vm1336, %v2469, 0
        %2473 = vmatprep.subr.mxu0 0.0
        %2474 = vmatpush1.msra.mxu0 %v931
        %2475 = vmatprep.subr.mxu0 0.0
        %2476 = vmatpush1.msra.mxu0 %v932
        %2477 = vmatprep.subr.mxu0 0.0
        %2478 = vmatpush1.msra.mxu0 %v933
        %2479 = vmatprep.subr.mxu0 0.0
        %2480 = vmatpush1.msra.mxu0 %v934
        %2481 = vmatprep.subr.mxu0 0.0
        %2482 = vmatpush1.msra.mxu0 %v935
        %2483 = vmatprep.subr.mxu0 0.0
        %2484 = vmatpush1.msra.mxu0 %v936
        %2485 = vmatprep.subr.mxu0 0.0
        %2486 = vmatpush1.msra.mxu0 %v937
        %2487 = vmatprep.subr.mxu0 0.0
        %2488 = vmatpush1.msra.mxu0 %v938
        %2489 = vmatprep.subr.mxu0 0.0
        %2490 = vmatpush1.msra.mxu0 %v939
        %2491 = vmatprep.subr.mxu0 0.0
        %2492 = vmatpush1.msra.mxu0 %v940
        %2493 = vmatprep.subr.mxu0 0.0
        %2494 = vmatpush1.msra.mxu0 %v941
        %2495 = vmatprep.subr.mxu0 0.0
        %2496 = vmatpush1.msra.mxu0 %v942
        %2497 = vmatprep.subr.mxu0 0.0
        %2498 = vmatpush1.msra.mxu0 %v943
        %2499 = vmatprep.subr.mxu0 0.0
        %2500 = vmatpush1.msra.mxu0 %v944
        %2501 = vmatprep.subr.mxu0 0.0
        %2502 = vmatpush1.msra.mxu0 %v945
        %2503 = vmatprep.subr.mxu0 0.0
        %2504 = vmatpush1.msra.mxu0 %v946
        %2505 = vmatprep.subr.mxu0 0.0
        %2506 = vmatpush1.msra.mxu0 %v947
        %2507 = vmatprep.subr.mxu0 0.0
        %2508 = vmatpush1.msra.mxu0 %v948
        %2509 = vmatprep.subr.mxu0 0.0
        %2510 = vmatpush1.msra.mxu0 %v949
        %2511 = vmatprep.subr.mxu0 0.0
        %2512 = vmatpush1.msra.mxu0 %v950
        %2513 = vmatprep.subr.mxu0 0.0
        %2514 = vmatpush1.msra.mxu0 %v951
        %2515 = vmatprep.subr.mxu0 0.0
        %2516 = vmatpush1.msra.mxu0 %v952
        %2517 = vmatprep.subr.mxu0 0.0
        %2518 = vmatpush1.msra.mxu0 0.0
        %2519 = vmatprep.subr.mxu0 0.0
        %2520 = vmatpush1.msra.mxu0 0.0
        %2521 = vmatprep.subr.mxu0 0.0
        %2522 = vmatpush1.msra.mxu0 0.0
        %2523 = vmatprep.subr.mxu0 0.0
        %2524 = vmatpush1.msra.mxu0 0.0
        %2525 = vmatprep.subr.mxu0 0.0
        %2526 = vmatpush1.msra.mxu0 0.0
        %2527 = vmatprep.subr.mxu0 0.0
        %2528 = vmatpush1.msra.mxu0 0.0
        %2529 = vmatprep.subr.mxu0 0.0
        %2530 = vmatpush1.msra.mxu0 0.0
        %2531 = vmatprep.subr.mxu0 0.0
        %2532 = vmatpush1.msra.mxu0 0.0
        %2533 = vmatprep.subr.mxu0 0.0
        %2534 = vmatpush1.msra.mxu0 0.0
        %2535 = vmatprep.subr.mxu0 0.0
        %2536 = vmatpush1.msra.mxu0 0.0
        %2537 = vmatprep.mubr.f32.mxu0 %v2471
        %2538 = vmatmul.mubr.f32.gmra.mrb[0].mxu0 %v2465
        %v2539 = vpop.f32.mrb[0].mxu0
        %v2540 = vadd.f32 0.0, %v2539
        %v2541 = vpop.f32.mrb[0].mxu0
        %2542 = vdwg.mxu0
        %v2543 = vlaneseq
        %v2544 = vshrl.u32 %v2543, 7
        %v2545 = vsub.s32 0, %v2544
        %v2546 = vrot.slane %v522, %v2545
        %v2547 = vlaneseq
        %v2548 = vshrl.u32 %v2547, 7
        %v2549 = vsub.s32 1, %v2548
        %v2550 = vrot.slane %v522, %v2549
        %v2552 = vsel %vm1336, %v2550, 0
        %2554 = vmatprep.subr.mxu0 0.0
        %2555 = vmatpush1.msra.mxu0 %v953
        %2556 = vmatprep.subr.mxu0 0.0
        %2557 = vmatpush1.msra.mxu0 %v954
        %2558 = vmatprep.subr.mxu0 0.0
        %2559 = vmatpush1.msra.mxu0 %v955
        %2560 = vmatprep.subr.mxu0 0.0
        %2561 = vmatpush1.msra.mxu0 %v956
        %2562 = vmatprep.subr.mxu0 0.0
        %2563 = vmatpush1.msra.mxu0 %v957
        %2564 = vmatprep.subr.mxu0 0.0
        %2565 = vmatpush1.msra.mxu0 %v958
        %2566 = vmatprep.subr.mxu0 0.0
        %2567 = vmatpush1.msra.mxu0 %v959
        %2568 = vmatprep.subr.mxu0 0.0
        %2569 = vmatpush1.msra.mxu0 %v960
        %2570 = vmatprep.subr.mxu0 0.0
        %2571 = vmatpush1.msra.mxu0 %v961
        %2572 = vmatprep.subr.mxu0 0.0
        %2573 = vmatpush1.msra.mxu0 %v962
        %2574 = vmatprep.subr.mxu0 0.0
        %2575 = vmatpush1.msra.mxu0 %v963
        %2576 = vmatprep.subr.mxu0 0.0
        %2577 = vmatpush1.msra.mxu0 %v964
        %2578 = vmatprep.subr.mxu0 0.0
        %2579 = vmatpush1.msra.mxu0 %v965
        %2580 = vmatprep.subr.mxu0 0.0
        %2581 = vmatpush1.msra.mxu0 %v966
        %2582 = vmatprep.subr.mxu0 0.0
        %2583 = vmatpush1.msra.mxu0 %v967
        %2584 = vmatprep.subr.mxu0 0.0
        %2585 = vmatpush1.msra.mxu0 %v968
        %2586 = vmatprep.subr.mxu0 0.0
        %2587 = vmatpush1.msra.mxu0 %v969
        %2588 = vmatprep.subr.mxu0 0.0
        %2589 = vmatpush1.msra.mxu0 %v970
        %2590 = vmatprep.subr.mxu0 0.0
        %2591 = vmatpush1.msra.mxu0 %v971
        %2592 = vmatprep.subr.mxu0 0.0
        %2593 = vmatpush1.msra.mxu0 %v972
        %2594 = vmatprep.subr.mxu0 0.0
        %2595 = vmatpush1.msra.mxu0 %v973
        %2596 = vmatprep.subr.mxu0 0.0
        %2597 = vmatpush1.msra.mxu0 %v974
        %2598 = vmatprep.subr.mxu0 0.0
        %2599 = vmatpush1.msra.mxu0 0.0
        %2600 = vmatprep.subr.mxu0 0.0
        %2601 = vmatpush1.msra.mxu0 0.0
        %2602 = vmatprep.subr.mxu0 0.0
        %2603 = vmatpush1.msra.mxu0 0.0
        %2604 = vmatprep.subr.mxu0 0.0
        %2605 = vmatpush1.msra.mxu0 0.0
        %2606 = vmatprep.subr.mxu0 0.0
        %2607 = vmatpush1.msra.mxu0 0.0
        %2608 = vmatprep.subr.mxu0 0.0
        %2609 = vmatpush1.msra.mxu0 0.0
        %2610 = vmatprep.subr.mxu0 0.0
        %2611 = vmatpush1.msra.mxu0 0.0
        %2612 = vmatprep.subr.mxu0 0.0
        %2613 = vmatpush1.msra.mxu0 0.0
        %2614 = vmatprep.subr.mxu0 0.0
        %2615 = vmatpush1.msra.mxu0 0.0
        %2616 = vmatprep.subr.mxu0 0.0
        %2617 = vmatpush1.msra.mxu0 0.0
        %2618 = vmatprep.mubr.f32.mxu0 %v2552
        %2619 = vmatmul.mubr.f32.gmra.mrb[0].mxu0 %v2546
        %v2620 = vpop.f32.mrb[0].mxu0
        %v2621 = vadd.f32 0.0, %v2620
        %v2622 = vpop.f32.mrb[0].mxu0
        %2623 = vdwg.mxu0
        %v2624 = vlaneseq
        %v2625 = vshrl.u32 %v2624, 7
        %v2626 = vsub.s32 0, %v2625
        %v2627 = vrot.slane %v547, %v2626
        %v2628 = vlaneseq
        %v2629 = vshrl.u32 %v2628, 7
        %v2630 = vsub.s32 1, %v2629
        %v2631 = vrot.slane %v547, %v2630
        %v2633 = vsel %vm1336, %v2631, 0
        %2635 = vmatprep.subr.mxu0 0.0
        %2636 = vmatpush1.msra.mxu0 %v975
        %2637 = vmatprep.subr.mxu0 0.0
        %2638 = vmatpush1.msra.mxu0 %v976
        %2639 = vmatprep.subr.mxu0 0.0
        %2640 = vmatpush1.msra.mxu0 %v977
        %2641 = vmatprep.subr.mxu0 0.0
        %2642 = vmatpush1.msra.mxu0 %v978
        %2643 = vmatprep.subr.mxu0 0.0
        %2644 = vmatpush1.msra.mxu0 %v979
        %2645 = vmatprep.subr.mxu0 0.0
        %2646 = vmatpush1.msra.mxu0 %v980
        %2647 = vmatprep.subr.mxu0 0.0
        %2648 = vmatpush1.msra.mxu0 %v981
        %2649 = vmatprep.subr.mxu0 0.0
        %2650 = vmatpush1.msra.mxu0 %v982
        %2651 = vmatprep.subr.mxu0 0.0
        %2652 = vmatpush1.msra.mxu0 %v983
        %2653 = vmatprep.subr.mxu0 0.0
        %2654 = vmatpush1.msra.mxu0 %v984
        %2655 = vmatprep.subr.mxu0 0.0
        %2656 = vmatpush1.msra.mxu0 %v985
        %2657 = vmatprep.subr.mxu0 0.0
        %2658 = vmatpush1.msra.mxu0 %v986
        %2659 = vmatprep.subr.mxu0 0.0
        %2660 = vmatpush1.msra.mxu0 %v987
        %2661 = vmatprep.subr.mxu0 0.0
        %2662 = vmatpush1.msra.mxu0 %v988
        %2663 = vmatprep.subr.mxu0 0.0
        %2664 = vmatpush1.msra.mxu0 %v989
        %2665 = vmatprep.subr.mxu0 0.0
        %2666 = vmatpush1.msra.mxu0 %v990
        %2667 = vmatprep.subr.mxu0 0.0
        %2668 = vmatpush1.msra.mxu0 %v991
        %2669 = vmatprep.subr.mxu0 0.0
        %2670 = vmatpush1.msra.mxu0 %v992
        %2671 = vmatprep.subr.mxu0 0.0
        %2672 = vmatpush1.msra.mxu0 %v993
        %2673 = vmatprep.subr.mxu0 0.0
        %2674 = vmatpush1.msra.mxu0 %v994
        %2675 = vmatprep.subr.mxu0 0.0
        %2676 = vmatpush1.msra.mxu0 %v995
        %2677 = vmatprep.subr.mxu0 0.0
        %2678 = vmatpush1.msra.mxu0 %v996
        %2679 = vmatprep.subr.mxu0 0.0
        %2680 = vmatpush1.msra.mxu0 0.0
        %2681 = vmatprep.subr.mxu0 0.0
        %2682 = vmatpush1.msra.mxu0 0.0
        %2683 = vmatprep.subr.mxu0 0.0
        %2684 = vmatpush1.msra.mxu0 0.0
        %2685 = vmatprep.subr.mxu0 0.0
        %2686 = vmatpush1.msra.mxu0 0.0
        %2687 = vmatprep.subr.mxu0 0.0
        %2688 = vmatpush1.msra.mxu0 0.0
        %2689 = vmatprep.subr.mxu0 0.0
        %2690 = vmatpush1.msra.mxu0 0.0
        %2691 = vmatprep.subr.mxu0 0.0
        %2692 = vmatpush1.msra.mxu0 0.0
        %2693 = vmatprep.subr.mxu0 0.0
        %2694 = vmatpush1.msra.mxu0 0.0
        %2695 = vmatprep.subr.mxu0 0.0
        %2696 = vmatpush1.msra.mxu0 0.0
        %2697 = vmatprep.subr.mxu0 0.0
        %2698 = vmatpush1.msra.mxu0 0.0
        %2699 = vmatprep.mubr.f32.mxu0 %v2633
        %2700 = vmatmul.mubr.f32.gmra.mrb[0].mxu0 %v2627
        %v2701 = vpop.f32.mrb[0].mxu0
        %v2702 = vadd.f32 0.0, %v2701
        %v2703 = vpop.f32.mrb[0].mxu0
        %2704 = vdwg.mxu0
        %v2705 = vlaneseq
        %v2706 = vshrl.u32 %v2705, 7
        %v2707 = vsub.s32 0, %v2706
        %v2708 = vrot.slane %v561, %v2707
        %v2709 = vlaneseq
        %v2710 = vshrl.u32 %v2709, 7
        %v2711 = vsub.s32 1, %v2710
        %v2712 = vrot.slane %v561, %v2711
        %v2714 = vsel %vm1336, %v2712, 0
        %2716 = vmatprep.subr.mxu0 0.0
        %2717 = vmatpush1.msra.mxu0 %v997
        %2718 = vmatprep.subr.mxu0 0.0
        %2719 = vmatpush1.msra.mxu0 %v998
        %2720 = vmatprep.subr.mxu0 0.0
        %2721 = vmatpush1.msra.mxu0 %v999
        %2722 = vmatprep.subr.mxu0 0.0
        %2723 = vmatpush1.msra.mxu0 %v1000
        %2724 = vmatprep.subr.mxu0 0.0
        %2725 = vmatpush1.msra.mxu0 %v1001
        %2726 = vmatprep.subr.mxu0 0.0
        %2727 = vmatpush1.msra.mxu0 %v1002
        %2728 = vmatprep.subr.mxu0 0.0
        %2729 = vmatpush1.msra.mxu0 %v1003
        %2730 = vmatprep.subr.mxu0 0.0
        %2731 = vmatpush1.msra.mxu0 %v1004
        %2732 = vmatprep.subr.mxu0 0.0
        %2733 = vmatpush1.msra.mxu0 %v1005
        %2734 = vmatprep.subr.mxu0 0.0
        %2735 = vmatpush1.msra.mxu0 %v1006
        %2736 = vmatprep.subr.mxu0 0.0
        %2737 = vmatpush1.msra.mxu0 %v1007
        %2738 = vmatprep.subr.mxu0 0.0
        %2739 = vmatpush1.msra.mxu0 %v1008
        %2740 = vmatprep.subr.mxu0 0.0
        %2741 = vmatpush1.msra.mxu0 %v1009
        %2742 = vmatprep.subr.mxu0 0.0
        %2743 = vmatpush1.msra.mxu0 %v1010
        %2744 = vmatprep.subr.mxu0 0.0
        %2745 = vmatpush1.msra.mxu0 %v1011
        %2746 = vmatprep.subr.mxu0 0.0
        %2747 = vmatpush1.msra.mxu0 %v1012
        %2748 = vmatprep.subr.mxu0 0.0
        %2749 = vmatpush1.msra.mxu0 %v1013
        %2750 = vmatprep.subr.mxu0 0.0
        %2751 = vmatpush1.msra.mxu0 %v1014
        %2752 = vmatprep.subr.mxu0 0.0
        %2753 = vmatpush1.msra.mxu0 %v1015
        %2754 = vmatprep.subr.mxu0 0.0
        %2755 = vmatpush1.msra.mxu0 %v1016
        %2756 = vmatprep.subr.mxu0 0.0
        %2757 = vmatpush1.msra.mxu0 %v1017
        %2758 = vmatprep.subr.mxu0 0.0
        %2759 = vmatpush1.msra.mxu0 %v1018
        %2760 = vmatprep.subr.mxu0 0.0
        %2761 = vmatpush1.msra.mxu0 0.0
        %2762 = vmatprep.subr.mxu0 0.0
        %2763 = vmatpush1.msra.mxu0 0.0
        %2764 = vmatprep.subr.mxu0 0.0
        %2765 = vmatpush1.msra.mxu0 0.0
        %2766 = vmatprep.subr.mxu0 0.0
        %2767 = vmatpush1.msra.mxu0 0.0
        %2768 = vmatprep.subr.mxu0 0.0
        %2769 = vmatpush1.msra.mxu0 0.0
        %2770 = vmatprep.subr.mxu0 0.0
        %2771 = vmatpush1.msra.mxu0 0.0
        %2772 = vmatprep.subr.mxu0 0.0
        %2773 = vmatpush1.msra.mxu0 0.0
        %2774 = vmatprep.subr.mxu0 0.0
        %2775 = vmatpush1.msra.mxu0 0.0
        %2776 = vmatprep.subr.mxu0 0.0
        %2777 = vmatpush1.msra.mxu0 0.0
        %2778 = vmatprep.subr.mxu0 0.0
        %2779 = vmatpush1.msra.mxu0 0.0
        %2780 = vmatprep.mubr.f32.mxu0 %v2714
        %2781 = vmatmul.mubr.f32.gmra.mrb[0].mxu0 %v2708
        %v2782 = vpop.f32.mrb[0].mxu0
        %v2783 = vadd.f32 0.0, %v2782
        %v2784 = vpop.f32.mrb[0].mxu0
        %2785 = vdwg.mxu0
        %v2786 = vlaneseq
        %v2787 = vshrl.u32 %v2786, 7
        %v2788 = vsub.s32 0, %v2787
        %v2789 = vrot.slane %v569, %v2788
        %v2790 = vlaneseq
        %v2791 = vshrl.u32 %v2790, 7
        %v2792 = vsub.s32 1, %v2791
        %v2793 = vrot.slane %v569, %v2792
        %v2795 = vsel %vm1336, %v2793, 0
        %2797 = vmatprep.subr.mxu0 0.0
        %2798 = vmatpush1.msra.mxu0 %v1019
        %2799 = vmatprep.subr.mxu0 0.0
        %2800 = vmatpush1.msra.mxu0 %v1020
        %2801 = vmatprep.subr.mxu0 0.0
        %2802 = vmatpush1.msra.mxu0 %v1021
        %2803 = vmatprep.subr.mxu0 0.0
        %2804 = vmatpush1.msra.mxu0 %v1022
        %2805 = vmatprep.subr.mxu0 0.0
        %2806 = vmatpush1.msra.mxu0 %v1023
        %2807 = vmatprep.subr.mxu0 0.0
        %2808 = vmatpush1.msra.mxu0 %v1024
        %2809 = vmatprep.subr.mxu0 0.0
        %2810 = vmatpush1.msra.mxu0 %v1025
        %2811 = vmatprep.subr.mxu0 0.0
        %2812 = vmatpush1.msra.mxu0 %v1026
        %2813 = vmatprep.subr.mxu0 0.0
        %2814 = vmatpush1.msra.mxu0 %v1027
        %2815 = vmatprep.subr.mxu0 0.0
        %2816 = vmatpush1.msra.mxu0 %v1028
        %2817 = vmatprep.subr.mxu0 0.0
        %2818 = vmatpush1.msra.mxu0 %v1029
        %2819 = vmatprep.subr.mxu0 0.0
        %2820 = vmatpush1.msra.mxu0 %v1030
        %2821 = vmatprep.subr.mxu0 0.0
        %2822 = vmatpush1.msra.mxu0 %v1031
        %2823 = vmatprep.subr.mxu0 0.0
        %2824 = vmatpush1.msra.mxu0 %v1032
        %2825 = vmatprep.subr.mxu0 0.0
        %2826 = vmatpush1.msra.mxu0 %v1033
        %2827 = vmatprep.subr.mxu0 0.0
        %2828 = vmatpush1.msra.mxu0 %v1034
        %2829 = vmatprep.subr.mxu0 0.0
        %2830 = vmatpush1.msra.mxu0 %v1035
        %2831 = vmatprep.subr.mxu0 0.0
        %2832 = vmatpush1.msra.mxu0 %v1036
        %2833 = vmatprep.subr.mxu0 0.0
        %2834 = vmatpush1.msra.mxu0 %v1037
        %2835 = vmatprep.subr.mxu0 0.0
        %2836 = vmatpush1.msra.mxu0 %v1038
        %2837 = vmatprep.subr.mxu0 0.0
        %2838 = vmatpush1.msra.mxu0 %v1039
        %2839 = vmatprep.subr.mxu0 0.0
        %2840 = vmatpush1.msra.mxu0 %v1040
        %2841 = vmatprep.subr.mxu0 0.0
        %2842 = vmatpush1.msra.mxu0 0.0
        %2843 = vmatprep.subr.mxu0 0.0
        %2844 = vmatpush1.msra.mxu0 0.0
        %2845 = vmatprep.subr.mxu0 0.0
        %2846 = vmatpush1.msra.mxu0 0.0
        %2847 = vmatprep.subr.mxu0 0.0
        %2848 = vmatpush1.msra.mxu0 0.0
        %2849 = vmatprep.subr.mxu0 0.0
        %2850 = vmatpush1.msra.mxu0 0.0
        %2851 = vmatprep.subr.mxu0 0.0
        %2852 = vmatpush1.msra.mxu0 0.0
        %2853 = vmatprep.subr.mxu0 0.0
        %2854 = vmatpush1.msra.mxu0 0.0
        %2855 = vmatprep.subr.mxu0 0.0
        %2856 = vmatpush1.msra.mxu0 0.0
        %2857 = vmatprep.subr.mxu0 0.0
        %2858 = vmatpush1.msra.mxu0 0.0
        %2859 = vmatprep.subr.mxu0 0.0
        %2860 = vmatpush1.msra.mxu0 0.0
        %2861 = vmatprep.mubr.f32.mxu0 %v2795
        %2862 = vmatmul.mubr.f32.gmra.mrb[0].mxu0 %v2789
        %v2863 = vpop.f32.mrb[0].mxu0
        %v2864 = vadd.f32 0.0, %v2863
        %v2865 = vpop.f32.mrb[0].mxu0
        %2866 = vdwg.mxu0
        %v2867 = vlaneseq
        %v2868 = vshrl.u32 %v2867, 7
        %v2869 = vsub.s32 0, %v2868
        %v2870 = vrot.slane %v571, %v2869
        %v2871 = vlaneseq
        %v2872 = vshrl.u32 %v2871, 7
        %v2873 = vsub.s32 1, %v2872
        %v2874 = vrot.slane %v571, %v2873
        %v2876 = vsel %vm1336, %v2874, 0
        %2878 = vmatprep.subr.mxu0 0.0
        %2879 = vmatpush1.msra.mxu0 %v1041
        %2880 = vmatprep.subr.mxu0 0.0
        %2881 = vmatpush1.msra.mxu0 %v1042
        %2882 = vmatprep.subr.mxu0 0.0
        %2883 = vmatpush1.msra.mxu0 %v1043
        %2884 = vmatprep.subr.mxu0 0.0
        %2885 = vmatpush1.msra.mxu0 %v1044
        %2886 = vmatprep.subr.mxu0 0.0
        %2887 = vmatpush1.msra.mxu0 %v1045
        %2888 = vmatprep.subr.mxu0 0.0
        %2889 = vmatpush1.msra.mxu0 %v1046
        %2890 = vmatprep.subr.mxu0 0.0
        %2891 = vmatpush1.msra.mxu0 %v1047
        %2892 = vmatprep.subr.mxu0 0.0
        %2893 = vmatpush1.msra.mxu0 %v1048
        %2894 = vmatprep.subr.mxu0 0.0
        %2895 = vmatpush1.msra.mxu0 %v1049
        %2896 = vmatprep.subr.mxu0 0.0
        %2897 = vmatpush1.msra.mxu0 %v1050
        %2898 = vmatprep.subr.mxu0 0.0
        %2899 = vmatpush1.msra.mxu0 %v1051
        %2900 = vmatprep.subr.mxu0 0.0
        %2901 = vmatpush1.msra.mxu0 %v1052
        %2902 = vmatprep.subr.mxu0 0.0
        %2903 = vmatpush1.msra.mxu0 %v1053
        %2904 = vmatprep.subr.mxu0 0.0
        %2905 = vmatpush1.msra.mxu0 %v1054
        %2906 = vmatprep.subr.mxu0 0.0
        %2907 = vmatpush1.msra.mxu0 %v1055
        %2908 = vmatprep.subr.mxu0 0.0
        %2909 = vmatpush1.msra.mxu0 %v1056
        %2910 = vmatprep.subr.mxu0 0.0
        %2911 = vmatpush1.msra.mxu0 %v1057
        %2912 = vmatprep.subr.mxu0 0.0
        %2913 = vmatpush1.msra.mxu0 %v1058
        %2914 = vmatprep.subr.mxu0 0.0
        %2915 = vmatpush1.msra.mxu0 %v1059
        %2916 = vmatprep.subr.mxu0 0.0
        %2917 = vmatpush1.msra.mxu0 %v1060
        %2918 = vmatprep.subr.mxu0 0.0
        %2919 = vmatpush1.msra.mxu0 %v1061
        %2920 = vmatprep.subr.mxu0 0.0
        %2921 = vmatpush1.msra.mxu0 %v1062
        %2922 = vmatprep.subr.mxu0 0.0
        %2923 = vmatpush1.msra.mxu0 0.0
        %2924 = vmatprep.subr.mxu0 0.0
        %2925 = vmatpush1.msra.mxu0 0.0
        %2926 = vmatprep.subr.mxu0 0.0
        %2927 = vmatpush1.msra.mxu0 0.0
        %2928 = vmatprep.subr.mxu0 0.0
        %2929 = vmatpush1.msra.mxu0 0.0
        %2930 = vmatprep.subr.mxu0 0.0
        %2931 = vmatpush1.msra.mxu0 0.0
        %2932 = vmatprep.subr.mxu0 0.0
        %2933 = vmatpush1.msra.mxu0 0.0
        %2934 = vmatprep.subr.mxu0 0.0
        %2935 = vmatpush1.msra.mxu0 0.0
        %2936 = vmatprep.subr.mxu0 0.0
        %2937 = vmatpush1.msra.mxu0 0.0
        %2938 = vmatprep.subr.mxu0 0.0
        %2939 = vmatpush1.msra.mxu0 0.0
        %2940 = vmatprep.subr.mxu0 0.0
        %2941 = vmatpush1.msra.mxu0 0.0
        %2942 = vmatprep.mubr.f32.mxu0 %v2876
        %2943 = vmatmul.mubr.f32.gmra.mrb[0].mxu0 %v2870
        %v2944 = vpop.f32.mrb[0].mxu0
        %v2945 = vadd.f32 0.0, %v2944
        %v2946 = vpop.f32.mrb[0].mxu0
        %2947 = vdwg.mxu0
        %v2948 = vlaneseq
        %v2949 = vshrl.u32 %v2948, 7
        %v2950 = vsub.s32 0, %v2949
        %v2951 = vrot.slane %v554, %v2950
        %v2952 = vlaneseq
        %v2953 = vshrl.u32 %v2952, 7
        %v2954 = vsub.s32 1, %v2953
        %v2955 = vrot.slane %v554, %v2954
        %v2957 = vsel %vm1336, %v2955, 0
        %2959 = vmatprep.subr.mxu0 0.0
        %2960 = vmatpush1.msra.mxu0 %v1063
        %2961 = vmatprep.subr.mxu0 0.0
        %2962 = vmatpush1.msra.mxu0 %v1064
        %2963 = vmatprep.subr.mxu0 0.0
        %2964 = vmatpush1.msra.mxu0 %v1065
        %2965 = vmatprep.subr.mxu0 0.0
        %2966 = vmatpush1.msra.mxu0 %v1066
        %2967 = vmatprep.subr.mxu0 0.0
        %2968 = vmatpush1.msra.mxu0 %v1067
        %2969 = vmatprep.subr.mxu0 0.0
        %2970 = vmatpush1.msra.mxu0 %v1068
        %2971 = vmatprep.subr.mxu0 0.0
        %2972 = vmatpush1.msra.mxu0 %v1069
        %2973 = vmatprep.subr.mxu0 0.0
        %2974 = vmatpush1.msra.mxu0 %v1070
        %2975 = vmatprep.subr.mxu0 0.0
        %2976 = vmatpush1.msra.mxu0 %v1071
        %2977 = vmatprep.subr.mxu0 0.0
        %2978 = vmatpush1.msra.mxu0 %v1072
        %2979 = vmatprep.subr.mxu0 0.0
        %2980 = vmatpush1.msra.mxu0 %v1073
        %2981 = vmatprep.subr.mxu0 0.0
        %2982 = vmatpush1.msra.mxu0 %v1074
        %2983 = vmatprep.subr.mxu0 0.0
        %2984 = vmatpush1.msra.mxu0 %v1075
        %2985 = vmatprep.subr.mxu0 0.0
        %2986 = vmatpush1.msra.mxu0 %v1076
        %2987 = vmatprep.subr.mxu0 0.0
        %2988 = vmatpush1.msra.mxu0 %v1077
        %2989 = vmatprep.subr.mxu0 0.0
        %2990 = vmatpush1.msra.mxu0 %v1078
        %2991 = vmatprep.subr.mxu0 0.0
        %2992 = vmatpush1.msra.mxu0 %v1079
        %2993 = vmatprep.subr.mxu0 0.0
        %2994 = vmatpush1.msra.mxu0 %v1080
        %2995 = vmatprep.subr.mxu0 0.0
        %2996 = vmatpush1.msra.mxu0 %v1081
        %2997 = vmatprep.subr.mxu0 0.0
        %2998 = vmatpush1.msra.mxu0 %v1082
        %2999 = vmatprep.subr.mxu0 0.0
        %3000 = vmatpush1.msra.mxu0 %v1083
        %3001 = vmatprep.subr.mxu0 0.0
        %3002 = vmatpush1.msra.mxu0 %v1084
        %3003 = vmatprep.subr.mxu0 0.0
        %3004 = vmatpush1.msra.mxu0 0.0
        %3005 = vmatprep.subr.mxu0 0.0
        %3006 = vmatpush1.msra.mxu0 0.0
        %3007 = vmatprep.subr.mxu0 0.0
        %3008 = vmatpush1.msra.mxu0 0.0
        %3009 = vmatprep.subr.mxu0 0.0
        %3010 = vmatpush1.msra.mxu0 0.0
        %3011 = vmatprep.subr.mxu0 0.0
        %3012 = vmatpush1.msra.mxu0 0.0
        %3013 = vmatprep.subr.mxu0 0.0
        %3014 = vmatpush1.msra.mxu0 0.0
        %3015 = vmatprep.subr.mxu0 0.0
        %3016 = vmatpush1.msra.mxu0 0.0
        %3017 = vmatprep.subr.mxu0 0.0
        %3018 = vmatpush1.msra.mxu0 0.0
        %3019 = vmatprep.subr.mxu0 0.0
        %3020 = vmatpush1.msra.mxu0 0.0
        %3021 = vmatprep.subr.mxu0 0.0
        %3022 = vmatpush1.msra.mxu0 0.0
        %3023 = vmatprep.mubr.f32.mxu0 %v2957
        %3024 = vmatmul.mubr.f32.gmra.mrb[0].mxu0 %v2951
        %v3025 = vpop.f32.mrb[0].mxu0
        %v3026 = vadd.f32 0.0, %v3025
        %v3027 = vpop.f32.mrb[0].mxu0
        %3028 = vdwg.mxu0
        %v3029 = vlaneseq
        %v3030 = vshrl.u32 %v3029, 7
        %v3031 = vsub.s32 0, %v3030
        %v3032 = vrot.slane %v568, %v3031
        %v3033 = vlaneseq
        %v3034 = vshrl.u32 %v3033, 7
        %v3035 = vsub.s32 1, %v3034
        %v3036 = vrot.slane %v568, %v3035
        %v3038 = vsel %vm1336, %v3036, 0
        %3040 = vmatprep.subr.mxu0 0.0
        %3041 = vmatpush1.msra.mxu0 %v1085
        %3042 = vmatprep.subr.mxu0 0.0
        %3043 = vmatpush1.msra.mxu0 %v1086
        %3044 = vmatprep.subr.mxu0 0.0
        %3045 = vmatpush1.msra.mxu0 %v1087
        %3046 = vmatprep.subr.mxu0 0.0
        %3047 = vmatpush1.msra.mxu0 %v1088
        %3048 = vmatprep.subr.mxu0 0.0
        %3049 = vmatpush1.msra.mxu0 %v1089
        %3050 = vmatprep.subr.mxu0 0.0
        %3051 = vmatpush1.msra.mxu0 %v1090
        %3052 = vmatprep.subr.mxu0 0.0
        %3053 = vmatpush1.msra.mxu0 %v1091
        %3054 = vmatprep.subr.mxu0 0.0
        %3055 = vmatpush1.msra.mxu0 %v1092
        %3056 = vmatprep.subr.mxu0 0.0
        %3057 = vmatpush1.msra.mxu0 %v1093
        %3058 = vmatprep.subr.mxu0 0.0
        %3059 = vmatpush1.msra.mxu0 %v1094
        %3060 = vmatprep.subr.mxu0 0.0
        %3061 = vmatpush1.msra.mxu0 %v1095
        %3062 = vmatprep.subr.mxu0 0.0
        %3063 = vmatpush1.msra.mxu0 %v1096
        %3064 = vmatprep.subr.mxu0 0.0
        %3065 = vmatpush1.msra.mxu0 %v1097
        %3066 = vmatprep.subr.mxu0 0.0
        %3067 = vmatpush1.msra.mxu0 %v1098
        %3068 = vmatprep.subr.mxu0 0.0
        %3069 = vmatpush1.msra.mxu0 %v1099
        %3070 = vmatprep.subr.mxu0 0.0
        %3071 = vmatpush1.msra.mxu0 %v1100
        %3072 = vmatprep.subr.mxu0 0.0
        %3073 = vmatpush1.msra.mxu0 %v1101
        %3074 = vmatprep.subr.mxu0 0.0
        %3075 = vmatpush1.msra.mxu0 %v1102
        %3076 = vmatprep.subr.mxu0 0.0
        %3077 = vmatpush1.msra.mxu0 %v1103
        %3078 = vmatprep.subr.mxu0 0.0
        %3079 = vmatpush1.msra.mxu0 %v1104
        %3080 = vmatprep.subr.mxu0 0.0
        %3081 = vmatpush1.msra.mxu0 %v1105
        %3082 = vmatprep.subr.mxu0 0.0
        %3083 = vmatpush1.msra.mxu0 %v1106
        %3084 = vmatprep.subr.mxu0 0.0
        %3085 = vmatpush1.msra.mxu0 0.0
        %3086 = vmatprep.subr.mxu0 0.0
        %3087 = vmatpush1.msra.mxu0 0.0
        %3088 = vmatprep.subr.mxu0 0.0
        %3089 = vmatpush1.msra.mxu0 0.0
        %3090 = vmatprep.subr.mxu0 0.0
        %3091 = vmatpush1.msra.mxu0 0.0
        %3092 = vmatprep.subr.mxu0 0.0
        %3093 = vmatpush1.msra.mxu0 0.0
        %3094 = vmatprep.subr.mxu0 0.0
        %3095 = vmatpush1.msra.mxu0 0.0
        %3096 = vmatprep.subr.mxu0 0.0
        %3097 = vmatpush1.msra.mxu0 0.0
        %3098 = vmatprep.subr.mxu0 0.0
        %3099 = vmatpush1.msra.mxu0 0.0
        %3100 = vmatprep.subr.mxu0 0.0
        %3101 = vmatpush1.msra.mxu0 0.0
        %3102 = vmatprep.subr.mxu0 0.0
        %3103 = vmatpush1.msra.mxu0 0.0
        %3104 = vmatprep.mubr.f32.mxu0 %v3038
        %3105 = vmatmul.mubr.f32.gmra.mrb[0].mxu0 %v3032
        %v3106 = vpop.f32.mrb[0].mxu0
        %v3107 = vadd.f32 0.0, %v3106
        %v3108 = vpop.f32.mrb[0].mxu0
        %3109 = vdwg.mxu0
        %v3110 = vlaneseq
        %v3111 = vshrl.u32 %v3110, 7
        %v3112 = vsub.s32 0, %v3111
        %v3113 = vrot.slane %v570, %v3112
        %v3114 = vlaneseq
        %v3115 = vshrl.u32 %v3114, 7
        %v3116 = vsub.s32 1, %v3115
        %v3117 = vrot.slane %v570, %v3116
        %v3119 = vsel %vm1336, %v3117, 0
        %3121 = vmatprep.subr.mxu0 0.0
        %3122 = vmatpush1.msra.mxu0 %v1107
        %3123 = vmatprep.subr.mxu0 0.0
        %3124 = vmatpush1.msra.mxu0 %v1108
        %3125 = vmatprep.subr.mxu0 0.0
        %3126 = vmatpush1.msra.mxu0 %v1109
        %3127 = vmatprep.subr.mxu0 0.0
        %3128 = vmatpush1.msra.mxu0 %v1110
        %3129 = vmatprep.subr.mxu0 0.0
        %3130 = vmatpush1.msra.mxu0 %v1111
        %3131 = vmatprep.subr.mxu0 0.0
        %3132 = vmatpush1.msra.mxu0 %v1112
        %3133 = vmatprep.subr.mxu0 0.0
        %3134 = vmatpush1.msra.mxu0 %v1113
        %3135 = vmatprep.subr.mxu0 0.0
        %3136 = vmatpush1.msra.mxu0 %v1114
        %3137 = vmatprep.subr.mxu0 0.0
        %3138 = vmatpush1.msra.mxu0 %v1115
        %3139 = vmatprep.subr.mxu0 0.0
        %3140 = vmatpush1.msra.mxu0 %v1116
        %3141 = vmatprep.subr.mxu0 0.0
        %3142 = vmatpush1.msra.mxu0 %v1117
        %3143 = vmatprep.subr.mxu0 0.0
        %3144 = vmatpush1.msra.mxu0 %v1118
        %3145 = vmatprep.subr.mxu0 0.0
        %3146 = vmatpush1.msra.mxu0 %v1119
        %3147 = vmatprep.subr.mxu0 0.0
        %3148 = vmatpush1.msra.mxu0 %v1120
        %3149 = vmatprep.subr.mxu0 0.0
        %3150 = vmatpush1.msra.mxu0 %v1121
        %3151 = vmatprep.subr.mxu0 0.0
        %3152 = vmatpush1.msra.mxu0 %v1122
        %3153 = vmatprep.subr.mxu0 0.0
        %3154 = vmatpush1.msra.mxu0 %v1123
        %3155 = vmatprep.subr.mxu0 0.0
        %3156 = vmatpush1.msra.mxu0 %v1124
        %3157 = vmatprep.subr.mxu0 0.0
        %3158 = vmatpush1.msra.mxu0 %v1125
        %3159 = vmatprep.subr.mxu0 0.0
        %3160 = vmatpush1.msra.mxu0 %v1126
        %3161 = vmatprep.subr.mxu0 0.0
        %3162 = vmatpush1.msra.mxu0 %v1127
        %3163 = vmatprep.subr.mxu0 0.0
        %3164 = vmatpush1.msra.mxu0 %v1128
        %3165 = vmatprep.subr.mxu0 0.0
        %3166 = vmatpush1.msra.mxu0 0.0
        %3167 = vmatprep.subr.mxu0 0.0
        %3168 = vmatpush1.msra.mxu0 0.0
        %3169 = vmatprep.subr.mxu0 0.0
        %3170 = vmatpush1.msra.mxu0 0.0
        %3171 = vmatprep.subr.mxu0 0.0
        %3172 = vmatpush1.msra.mxu0 0.0
        %3173 = vmatprep.subr.mxu0 0.0
        %3174 = vmatpush1.msra.mxu0 0.0
        %3175 = vmatprep.subr.mxu0 0.0
        %3176 = vmatpush1.msra.mxu0 0.0
        %3177 = vmatprep.subr.mxu0 0.0
        %3178 = vmatpush1.msra.mxu0 0.0
        %3179 = vmatprep.subr.mxu0 0.0
        %3180 = vmatpush1.msra.mxu0 0.0
        %3181 = vmatprep.subr.mxu0 0.0
        %3182 = vmatpush1.msra.mxu0 0.0
        %3183 = vmatprep.subr.mxu0 0.0
        %3184 = vmatpush1.msra.mxu0 0.0
        %3185 = vmatprep.mubr.f32.mxu0 %v3119
        %3186 = vmatmul.mubr.f32.gmra.mrb[0].mxu0 %v3113
        %v3187 = vpop.f32.mrb[0].mxu0
        %v3188 = vadd.f32 0.0, %v3187
        %v3189 = vpop.f32.mrb[0].mxu0
        %3190 = vdwg.mxu0
        %v3191 = vlaneseq
        %v3192 = vshrl.u32 %v3191, 7
        %v3193 = vsub.s32 0, %v3192
        %v3194 = vrot.slane %v572, %v3193
        %v3195 = vlaneseq
        %v3196 = vshrl.u32 %v3195, 7
        %v3197 = vsub.s32 1, %v3196
        %v3198 = vrot.slane %v572, %v3197
        %v3200 = vsel %vm1336, %v3198, 0
        %3202 = vmatprep.subr.mxu0 0.0
        %3203 = vmatpush1.msra.mxu0 %v1129
        %3204 = vmatprep.subr.mxu0 0.0
        %3205 = vmatpush1.msra.mxu0 %v1130
        %3206 = vmatprep.subr.mxu0 0.0
        %3207 = vmatpush1.msra.mxu0 %v1131
        %3208 = vmatprep.subr.mxu0 0.0
        %3209 = vmatpush1.msra.mxu0 %v1132
        %3210 = vmatprep.subr.mxu0 0.0
        %3211 = vmatpush1.msra.mxu0 %v1133
        %3212 = vmatprep.subr.mxu0 0.0
        %3213 = vmatpush1.msra.mxu0 %v1134
        %3214 = vmatprep.subr.mxu0 0.0
        %3215 = vmatpush1.msra.mxu0 %v1135
        %3216 = vmatprep.subr.mxu0 0.0
        %3217 = vmatpush1.msra.mxu0 %v1136
        %3218 = vmatprep.subr.mxu0 0.0
        %3219 = vmatpush1.msra.mxu0 %v1137
        %3220 = vmatprep.subr.mxu0 0.0
        %3221 = vmatpush1.msra.mxu0 %v1138
        %3222 = vmatprep.subr.mxu0 0.0
        %3223 = vmatpush1.msra.mxu0 %v1139
        %3224 = vmatprep.subr.mxu0 0.0
        %3225 = vmatpush1.msra.mxu0 %v1140
        %3226 = vmatprep.subr.mxu0 0.0
        %3227 = vmatpush1.msra.mxu0 %v1141
        %3228 = vmatprep.subr.mxu0 0.0
        %3229 = vmatpush1.msra.mxu0 %v1142
        %3230 = vmatprep.subr.mxu0 0.0
        %3231 = vmatpush1.msra.mxu0 %v1143
        %3232 = vmatprep.subr.mxu0 0.0
        %3233 = vmatpush1.msra.mxu0 %v1144
        %3234 = vmatprep.subr.mxu0 0.0
        %3235 = vmatpush1.msra.mxu0 %v1145
        %3236 = vmatprep.subr.mxu0 0.0
        %3237 = vmatpush1.msra.mxu0 %v1146
        %3238 = vmatprep.subr.mxu0 0.0
        %3239 = vmatpush1.msra.mxu0 %v1147
        %3240 = vmatprep.subr.mxu0 0.0
        %3241 = vmatpush1.msra.mxu0 %v1148
        %3242 = vmatprep.subr.mxu0 0.0
        %3243 = vmatpush1.msra.mxu0 %v1149
        %3244 = vmatprep.subr.mxu0 0.0
        %3245 = vmatpush1.msra.mxu0 %v1150
        %3246 = vmatprep.subr.mxu0 0.0
        %3247 = vmatpush1.msra.mxu0 0.0
        %3248 = vmatprep.subr.mxu0 0.0
        %3249 = vmatpush1.msra.mxu0 0.0
        %3250 = vmatprep.subr.mxu0 0.0
        %3251 = vmatpush1.msra.mxu0 0.0
        %3252 = vmatprep.subr.mxu0 0.0
        %3253 = vmatpush1.msra.mxu0 0.0
        %3254 = vmatprep.subr.mxu0 0.0
        %3255 = vmatpush1.msra.mxu0 0.0
        %3256 = vmatprep.subr.mxu0 0.0
        %3257 = vmatpush1.msra.mxu0 0.0
        %3258 = vmatprep.subr.mxu0 0.0
        %3259 = vmatpush1.msra.mxu0 0.0
        %3260 = vmatprep.subr.mxu0 0.0
        %3261 = vmatpush1.msra.mxu0 0.0
        %3262 = vmatprep.subr.mxu0 0.0
        %3263 = vmatpush1.msra.mxu0 0.0
        %3264 = vmatprep.subr.mxu0 0.0
        %3265 = vmatpush1.msra.mxu0 0.0
        %3266 = vmatprep.mubr.f32.mxu0 %v3200
        %3267 = vmatmul.mubr.f32.gmra.mrb[0].mxu0 %v3194
        %v3268 = vpop.f32.mrb[0].mxu0
        %v3269 = vadd.f32 0.0, %v3268
        %v3270 = vpop.f32.mrb[0].mxu0
        %3271 = vdwg.mxu0
        %v3272 = vlaneseq
        %v3273 = vshrl.u32 %v3272, 7
        %v3274 = vsub.s32 0, %v3273
        %v3275 = vrot.slane %v597, %v3274
        %v3276 = vlaneseq
        %v3277 = vshrl.u32 %v3276, 7
        %v3278 = vsub.s32 1, %v3277
        %v3279 = vrot.slane %v597, %v3278
        %v3281 = vsel %vm1336, %v3279, 0
        %3283 = vmatprep.subr.mxu0 0.0
        %3284 = vmatpush1.msra.mxu0 %v1151
        %3285 = vmatprep.subr.mxu0 0.0
        %3286 = vmatpush1.msra.mxu0 %v1152
        %3287 = vmatprep.subr.mxu0 0.0
        %3288 = vmatpush1.msra.mxu0 %v1153
        %3289 = vmatprep.subr.mxu0 0.0
        %3290 = vmatpush1.msra.mxu0 %v1154
        %3291 = vmatprep.subr.mxu0 0.0
        %3292 = vmatpush1.msra.mxu0 %v1155
        %3293 = vmatprep.subr.mxu0 0.0
        %3294 = vmatpush1.msra.mxu0 %v1156
        %3295 = vmatprep.subr.mxu0 0.0
        %3296 = vmatpush1.msra.mxu0 %v1157
        %3297 = vmatprep.subr.mxu0 0.0
        %3298 = vmatpush1.msra.mxu0 %v1158
        %3299 = vmatprep.subr.mxu0 0.0
        %3300 = vmatpush1.msra.mxu0 %v1159
        %3301 = vmatprep.subr.mxu0 0.0
        %3302 = vmatpush1.msra.mxu0 %v1160
        %3303 = vmatprep.subr.mxu0 0.0
        %3304 = vmatpush1.msra.mxu0 %v1161
        %3305 = vmatprep.subr.mxu0 0.0
        %3306 = vmatpush1.msra.mxu0 %v1162
        %3307 = vmatprep.subr.mxu0 0.0
        %3308 = vmatpush1.msra.mxu0 %v1163
        %3309 = vmatprep.subr.mxu0 0.0
        %3310 = vmatpush1.msra.mxu0 %v1164
        %3311 = vmatprep.subr.mxu0 0.0
        %3312 = vmatpush1.msra.mxu0 %v1165
        %3313 = vmatprep.subr.mxu0 0.0
        %3314 = vmatpush1.msra.mxu0 %v1166
        %3315 = vmatprep.subr.mxu0 0.0
        %3316 = vmatpush1.msra.mxu0 %v1167
        %3317 = vmatprep.subr.mxu0 0.0
        %3318 = vmatpush1.msra.mxu0 %v1168
        %3319 = vmatprep.subr.mxu0 0.0
        %3320 = vmatpush1.msra.mxu0 %v1169
        %3321 = vmatprep.subr.mxu0 0.0
        %3322 = vmatpush1.msra.mxu0 %v1170
        %3323 = vmatprep.subr.mxu0 0.0
        %3324 = vmatpush1.msra.mxu0 %v1171
        %3325 = vmatprep.subr.mxu0 0.0
        %3326 = vmatpush1.msra.mxu0 %v1172
        %3327 = vmatprep.subr.mxu0 0.0
        %3328 = vmatpush1.msra.mxu0 0.0
        %3329 = vmatprep.subr.mxu0 0.0
        %3330 = vmatpush1.msra.mxu0 0.0
        %3331 = vmatprep.subr.mxu0 0.0
        %3332 = vmatpush1.msra.mxu0 0.0
        %3333 = vmatprep.subr.mxu0 0.0
        %3334 = vmatpush1.msra.mxu0 0.0
        %3335 = vmatprep.subr.mxu0 0.0
        %3336 = vmatpush1.msra.mxu0 0.0
        %3337 = vmatprep.subr.mxu0 0.0
        %3338 = vmatpush1.msra.mxu0 0.0
        %3339 = vmatprep.subr.mxu0 0.0
        %3340 = vmatpush1.msra.mxu0 0.0
        %3341 = vmatprep.subr.mxu0 0.0
        %3342 = vmatpush1.msra.mxu0 0.0
        %3343 = vmatprep.subr.mxu0 0.0
        %3344 = vmatpush1.msra.mxu0 0.0
        %3345 = vmatprep.subr.mxu0 0.0
        %3346 = vmatpush1.msra.mxu0 0.0
        %3347 = vmatprep.mubr.f32.mxu0 %v3281
        %3348 = vmatmul.mubr.f32.gmra.mrb[0].mxu0 %v3275
        %v3349 = vpop.f32.mrb[0].mxu0
        %v3350 = vadd.f32 0.0, %v3349
        %v3351 = vpop.f32.mrb[0].mxu0
        %3352 = vdwg.mxu0
        %v3353 = vlaneseq
        %v3354 = vshrl.u32 %v3353, 7
        %v3355 = vsub.s32 0, %v3354
        %v3356 = vrot.slane %v611, %v3355
        %v3357 = vlaneseq
        %v3358 = vshrl.u32 %v3357, 7
        %v3359 = vsub.s32 1, %v3358
        %v3360 = vrot.slane %v611, %v3359
        %v3362 = vsel %vm1336, %v3360, 0
        %3364 = vmatprep.subr.mxu0 0.0
        %3365 = vmatpush1.msra.mxu0 %v1173
        %3366 = vmatprep.subr.mxu0 0.0
        %3367 = vmatpush1.msra.mxu0 %v1174
        %3368 = vmatprep.subr.mxu0 0.0
        %3369 = vmatpush1.msra.mxu0 %v1175
        %3370 = vmatprep.subr.mxu0 0.0
        %3371 = vmatpush1.msra.mxu0 %v1176
        %3372 = vmatprep.subr.mxu0 0.0
        %3373 = vmatpush1.msra.mxu0 %v1177
        %3374 = vmatprep.subr.mxu0 0.0
        %3375 = vmatpush1.msra.mxu0 %v1178
        %3376 = vmatprep.subr.mxu0 0.0
        %3377 = vmatpush1.msra.mxu0 %v1179
        %3378 = vmatprep.subr.mxu0 0.0
        %3379 = vmatpush1.msra.mxu0 %v1180
        %3380 = vmatprep.subr.mxu0 0.0
        %3381 = vmatpush1.msra.mxu0 %v1181
        %3382 = vmatprep.subr.mxu0 0.0
        %3383 = vmatpush1.msra.mxu0 %v1182
        %3384 = vmatprep.subr.mxu0 0.0
        %3385 = vmatpush1.msra.mxu0 %v1183
        %3386 = vmatprep.subr.mxu0 0.0
        %3387 = vmatpush1.msra.mxu0 %v1184
        %3388 = vmatprep.subr.mxu0 0.0
        %3389 = vmatpush1.msra.mxu0 %v1185
        %3390 = vmatprep.subr.mxu0 0.0
        %3391 = vmatpush1.msra.mxu0 %v1186
        %3392 = vmatprep.subr.mxu0 0.0
        %3393 = vmatpush1.msra.mxu0 %v1187
        %3394 = vmatprep.subr.mxu0 0.0
        %3395 = vmatpush1.msra.mxu0 %v1188
        %3396 = vmatprep.subr.mxu0 0.0
        %3397 = vmatpush1.msra.mxu0 %v1189
        %3398 = vmatprep.subr.mxu0 0.0
        %3399 = vmatpush1.msra.mxu0 %v1190
        %3400 = vmatprep.subr.mxu0 0.0
        %3401 = vmatpush1.msra.mxu0 %v1191
        %3402 = vmatprep.subr.mxu0 0.0
        %3403 = vmatpush1.msra.mxu0 %v1192
        %3404 = vmatprep.subr.mxu0 0.0
        %3405 = vmatpush1.msra.mxu0 %v1193
        %3406 = vmatprep.subr.mxu0 0.0
        %3407 = vmatpush1.msra.mxu0 %v1194
        %3408 = vmatprep.subr.mxu0 0.0
        %3409 = vmatpush1.msra.mxu0 0.0
        %3410 = vmatprep.subr.mxu0 0.0
        %3411 = vmatpush1.msra.mxu0 0.0
        %3412 = vmatprep.subr.mxu0 0.0
        %3413 = vmatpush1.msra.mxu0 0.0
        %3414 = vmatprep.subr.mxu0 0.0
        %3415 = vmatpush1.msra.mxu0 0.0
        %3416 = vmatprep.subr.mxu0 0.0
        %3417 = vmatpush1.msra.mxu0 0.0
        %3418 = vmatprep.subr.mxu0 0.0
        %3419 = vmatpush1.msra.mxu0 0.0
        %3420 = vmatprep.subr.mxu0 0.0
        %3421 = vmatpush1.msra.mxu0 0.0
        %3422 = vmatprep.subr.mxu0 0.0
        %3423 = vmatpush1.msra.mxu0 0.0
        %3424 = vmatprep.subr.mxu0 0.0
        %3425 = vmatpush1.msra.mxu0 0.0
        %3426 = vmatprep.subr.mxu0 0.0
        %3427 = vmatpush1.msra.mxu0 0.0
        %3428 = vmatprep.mubr.f32.mxu0 %v3362
        %3429 = vmatmul.mubr.f32.gmra.mrb[0].mxu0 %v3356
        %v3430 = vpop.f32.mrb[0].mxu0
        %v3431 = vadd.f32 0.0, %v3430
        %v3432 = vpop.f32.mrb[0].mxu0
        %3433 = vdwg.mxu0
        %v3434 = vlaneseq
        %v3435 = vshrl.u32 %v3434, 7
        %v3436 = vsub.s32 0, %v3435
        %v3437 = vrot.slane %v619, %v3436
        %v3438 = vlaneseq
        %v3439 = vshrl.u32 %v3438, 7
        %v3440 = vsub.s32 1, %v3439
        %v3441 = vrot.slane %v619, %v3440
        %v3443 = vsel %vm1336, %v3441, 0
        %3445 = vmatprep.subr.mxu0 0.0
        %3446 = vmatpush1.msra.mxu0 %v1195
        %3447 = vmatprep.subr.mxu0 0.0
        %3448 = vmatpush1.msra.mxu0 %v1196
        %3449 = vmatprep.subr.mxu0 0.0
        %3450 = vmatpush1.msra.mxu0 %v1197
        %3451 = vmatprep.subr.mxu0 0.0
        %3452 = vmatpush1.msra.mxu0 %v1198
        %3453 = vmatprep.subr.mxu0 0.0
        %3454 = vmatpush1.msra.mxu0 %v1199
        %3455 = vmatprep.subr.mxu0 0.0
        %3456 = vmatpush1.msra.mxu0 %v1200
        %3457 = vmatprep.subr.mxu0 0.0
        %3458 = vmatpush1.msra.mxu0 %v1201
        %3459 = vmatprep.subr.mxu0 0.0
        %3460 = vmatpush1.msra.mxu0 %v1202
        %3461 = vmatprep.subr.mxu0 0.0
        %3462 = vmatpush1.msra.mxu0 %v1203
        %3463 = vmatprep.subr.mxu0 0.0
        %3464 = vmatpush1.msra.mxu0 %v1204
        %3465 = vmatprep.subr.mxu0 0.0
        %3466 = vmatpush1.msra.mxu0 %v1205
        %3467 = vmatprep.subr.mxu0 0.0
        %3468 = vmatpush1.msra.mxu0 %v1206
        %3469 = vmatprep.subr.mxu0 0.0
        %3470 = vmatpush1.msra.mxu0 %v1207
        %3471 = vmatprep.subr.mxu0 0.0
        %3472 = vmatpush1.msra.mxu0 %v1208
        %3473 = vmatprep.subr.mxu0 0.0
        %3474 = vmatpush1.msra.mxu0 %v1209
        %3475 = vmatprep.subr.mxu0 0.0
        %3476 = vmatpush1.msra.mxu0 %v1210
        %3477 = vmatprep.subr.mxu0 0.0
        %3478 = vmatpush1.msra.mxu0 %v1211
        %3479 = vmatprep.subr.mxu0 0.0
        %3480 = vmatpush1.msra.mxu0 %v1212
        %3481 = vmatprep.subr.mxu0 0.0
        %3482 = vmatpush1.msra.mxu0 %v1213
        %3483 = vmatprep.subr.mxu0 0.0
        %3484 = vmatpush1.msra.mxu0 %v1214
        %3485 = vmatprep.subr.mxu0 0.0
        %3486 = vmatpush1.msra.mxu0 %v1215
        %3487 = vmatprep.subr.mxu0 0.0
        %3488 = vmatpush1.msra.mxu0 %v1216
        %3489 = vmatprep.subr.mxu0 0.0
        %3490 = vmatpush1.msra.mxu0 0.0
        %3491 = vmatprep.subr.mxu0 0.0
        %3492 = vmatpush1.msra.mxu0 0.0
        %3493 = vmatprep.subr.mxu0 0.0
        %3494 = vmatpush1.msra.mxu0 0.0
        %3495 = vmatprep.subr.mxu0 0.0
        %3496 = vmatpush1.msra.mxu0 0.0
        %3497 = vmatprep.subr.mxu0 0.0
        %3498 = vmatpush1.msra.mxu0 0.0
        %3499 = vmatprep.subr.mxu0 0.0
        %3500 = vmatpush1.msra.mxu0 0.0
        %3501 = vmatprep.subr.mxu0 0.0
        %3502 = vmatpush1.msra.mxu0 0.0
        %3503 = vmatprep.subr.mxu0 0.0
        %3504 = vmatpush1.msra.mxu0 0.0
        %3505 = vmatprep.subr.mxu0 0.0
        %3506 = vmatpush1.msra.mxu0 0.0
        %3507 = vmatprep.subr.mxu0 0.0
        %3508 = vmatpush1.msra.mxu0 0.0
        %3509 = vmatprep.mubr.f32.mxu0 %v3443
        %3510 = vmatmul.mubr.f32.gmra.mrb[0].mxu0 %v3437
        %v3511 = vpop.f32.mrb[0].mxu0
        %v3512 = vadd.f32 0.0, %v3511
        %v3513 = vpop.f32.mrb[0].mxu0
        %3514 = vdwg.mxu0
        %v3515 = vlaneseq
        %v3516 = vshrl.u32 %v3515, 7
        %v3517 = vsub.s32 0, %v3516
        %v3518 = vrot.slane %v621, %v3517
        %v3519 = vlaneseq
        %v3520 = vshrl.u32 %v3519, 7
        %v3521 = vsub.s32 1, %v3520
        %v3522 = vrot.slane %v621, %v3521
        %v3524 = vsel %vm1336, %v3522, 0
        %3526 = vmatprep.subr.mxu0 0.0
        %3527 = vmatpush1.msra.mxu0 %v1217
        %3528 = vmatprep.subr.mxu0 0.0
        %3529 = vmatpush1.msra.mxu0 %v1218
        %3530 = vmatprep.subr.mxu0 0.0
        %3531 = vmatpush1.msra.mxu0 %v1219
        %3532 = vmatprep.subr.mxu0 0.0
        %3533 = vmatpush1.msra.mxu0 %v1220
        %3534 = vmatprep.subr.mxu0 0.0
        %3535 = vmatpush1.msra.mxu0 %v1221
        %3536 = vmatprep.subr.mxu0 0.0
        %3537 = vmatpush1.msra.mxu0 %v1222
        %3538 = vmatprep.subr.mxu0 0.0
        %3539 = vmatpush1.msra.mxu0 %v1223
        %3540 = vmatprep.subr.mxu0 0.0
        %3541 = vmatpush1.msra.mxu0 %v1224
        %3542 = vmatprep.subr.mxu0 0.0
        %3543 = vmatpush1.msra.mxu0 %v1225
        %3544 = vmatprep.subr.mxu0 0.0
        %3545 = vmatpush1.msra.mxu0 %v1226
        %3546 = vmatprep.subr.mxu0 0.0
        %3547 = vmatpush1.msra.mxu0 %v1227
        %3548 = vmatprep.subr.mxu0 0.0
        %3549 = vmatpush1.msra.mxu0 %v1228
        %3550 = vmatprep.subr.mxu0 0.0
        %3551 = vmatpush1.msra.mxu0 %v1229
        %3552 = vmatprep.subr.mxu0 0.0
        %3553 = vmatpush1.msra.mxu0 %v1230
        %3554 = vmatprep.subr.mxu0 0.0
        %3555 = vmatpush1.msra.mxu0 %v1231
        %3556 = vmatprep.subr.mxu0 0.0
        %3557 = vmatpush1.msra.mxu0 %v1232
        %3558 = vmatprep.subr.mxu0 0.0
        %3559 = vmatpush1.msra.mxu0 %v1233
        %3560 = vmatprep.subr.mxu0 0.0
        %3561 = vmatpush1.msra.mxu0 %v1234
        %3562 = vmatprep.subr.mxu0 0.0
        %3563 = vmatpush1.msra.mxu0 %v1235
        %3564 = vmatprep.subr.mxu0 0.0
        %3565 = vmatpush1.msra.mxu0 %v1236
        %3566 = vmatprep.subr.mxu0 0.0
        %3567 = vmatpush1.msra.mxu0 %v1237
        %3568 = vmatprep.subr.mxu0 0.0
        %3569 = vmatpush1.msra.mxu0 %v1238
        %3570 = vmatprep.subr.mxu0 0.0
        %3571 = vmatpush1.msra.mxu0 0.0
        %3572 = vmatprep.subr.mxu0 0.0
        %3573 = vmatpush1.msra.mxu0 0.0
        %3574 = vmatprep.subr.mxu0 0.0
        %3575 = vmatpush1.msra.mxu0 0.0
        %3576 = vmatprep.subr.mxu0 0.0
        %3577 = vmatpush1.msra.mxu0 0.0
        %3578 = vmatprep.subr.mxu0 0.0
        %3579 = vmatpush1.msra.mxu0 0.0
        %3580 = vmatprep.subr.mxu0 0.0
        %3581 = vmatpush1.msra.mxu0 0.0
        %3582 = vmatprep.subr.mxu0 0.0
        %3583 = vmatpush1.msra.mxu0 0.0
        %3584 = vmatprep.subr.mxu0 0.0
        %3585 = vmatpush1.msra.mxu0 0.0
        %3586 = vmatprep.subr.mxu0 0.0
        %3587 = vmatpush1.msra.mxu0 0.0
        %3588 = vmatprep.subr.mxu0 0.0
        %3589 = vmatpush1.msra.mxu0 0.0
        %3590 = vmatprep.mubr.f32.mxu0 %v3524
        %3591 = vmatmul.mubr.f32.gmra.mrb[0].mxu0 %v3518
        %v3592 = vpop.f32.mrb[0].mxu0
        %v3593 = vadd.f32 0.0, %v3592
        %v3594 = vpop.f32.mrb[0].mxu0
        %3595 = vdwg.mxu0
        %v3596 = vlaneseq
        %v3597 = vshrl.u32 %v3596, 7
        %v3598 = vsub.s32 0, %v3597
        %v3599 = vrot.slane %v604, %v3598
        %v3600 = vlaneseq
        %v3601 = vshrl.u32 %v3600, 7
        %v3602 = vsub.s32 1, %v3601
        %v3603 = vrot.slane %v604, %v3602
        %v3605 = vsel %vm1336, %v3603, 0
        %3607 = vmatprep.subr.mxu0 0.0
        %3608 = vmatpush1.msra.mxu0 %v1239
        %3609 = vmatprep.subr.mxu0 0.0
        %3610 = vmatpush1.msra.mxu0 %v1240
        %3611 = vmatprep.subr.mxu0 0.0
        %3612 = vmatpush1.msra.mxu0 %v1241
        %3613 = vmatprep.subr.mxu0 0.0
        %3614 = vmatpush1.msra.mxu0 %v1242
        %3615 = vmatprep.subr.mxu0 0.0
        %3616 = vmatpush1.msra.mxu0 %v1243
        %3617 = vmatprep.subr.mxu0 0.0
        %3618 = vmatpush1.msra.mxu0 %v1244
        %3619 = vmatprep.subr.mxu0 0.0
        %3620 = vmatpush1.msra.mxu0 %v1245
        %3621 = vmatprep.subr.mxu0 0.0
        %3622 = vmatpush1.msra.mxu0 %v1246
        %3623 = vmatprep.subr.mxu0 0.0
        %3624 = vmatpush1.msra.mxu0 %v1247
        %3625 = vmatprep.subr.mxu0 0.0
        %3626 = vmatpush1.msra.mxu0 %v1248
        %3627 = vmatprep.subr.mxu0 0.0
        %3628 = vmatpush1.msra.mxu0 %v1249
        %3629 = vmatprep.subr.mxu0 0.0
        %3630 = vmatpush1.msra.mxu0 %v1250
        %3631 = vmatprep.subr.mxu0 0.0
        %3632 = vmatpush1.msra.mxu0 %v1251
        %3633 = vmatprep.subr.mxu0 0.0
        %3634 = vmatpush1.msra.mxu0 %v1252
        %3635 = vmatprep.subr.mxu0 0.0
        %3636 = vmatpush1.msra.mxu0 %v1253
        %3637 = vmatprep.subr.mxu0 0.0
        %3638 = vmatpush1.msra.mxu0 %v1254
        %3639 = vmatprep.subr.mxu0 0.0
        %3640 = vmatpush1.msra.mxu0 %v1255
        %3641 = vmatprep.subr.mxu0 0.0
        %3642 = vmatpush1.msra.mxu0 %v1256
        %3643 = vmatprep.subr.mxu0 0.0
        %3644 = vmatpush1.msra.mxu0 %v1257
        %3645 = vmatprep.subr.mxu0 0.0
        %3646 = vmatpush1.msra.mxu0 %v1258
        %3647 = vmatprep.subr.mxu0 0.0
        %3648 = vmatpush1.msra.mxu0 %v1259
        %3649 = vmatprep.subr.mxu0 0.0
        %3650 = vmatpush1.msra.mxu0 %v1260
        %3651 = vmatprep.subr.mxu0 0.0
        %3652 = vmatpush1.msra.mxu0 0.0
        %3653 = vmatprep.subr.mxu0 0.0
        %3654 = vmatpush1.msra.mxu0 0.0
        %3655 = vmatprep.subr.mxu0 0.0
        %3656 = vmatpush1.msra.mxu0 0.0
        %3657 = vmatprep.subr.mxu0 0.0
        %3658 = vmatpush1.msra.mxu0 0.0
        %3659 = vmatprep.subr.mxu0 0.0
        %3660 = vmatpush1.msra.mxu0 0.0
        %3661 = vmatprep.subr.mxu0 0.0
        %3662 = vmatpush1.msra.mxu0 0.0
        %3663 = vmatprep.subr.mxu0 0.0
        %3664 = vmatpush1.msra.mxu0 0.0
        %3665 = vmatprep.subr.mxu0 0.0
        %3666 = vmatpush1.msra.mxu0 0.0
        %3667 = vmatprep.subr.mxu0 0.0
        %3668 = vmatpush1.msra.mxu0 0.0
        %3669 = vmatprep.subr.mxu0 0.0
        %3670 = vmatpush1.msra.mxu0 0.0
        %3671 = vmatprep.mubr.f32.mxu0 %v3605
        %3672 = vmatmul.mubr.f32.gmra.mrb[0].mxu0 %v3599
        %v3673 = vpop.f32.mrb[0].mxu0
        %v3674 = vadd.f32 0.0, %v3673
        %v3675 = vpop.f32.mrb[0].mxu0
        %3676 = vdwg.mxu0
        %v3677 = vlaneseq
        %v3678 = vshrl.u32 %v3677, 7
        %v3679 = vsub.s32 0, %v3678
        %v3680 = vrot.slane %v618, %v3679
        %v3681 = vlaneseq
        %v3682 = vshrl.u32 %v3681, 7
        %v3683 = vsub.s32 1, %v3682
        %v3684 = vrot.slane %v618, %v3683
        %v3686 = vsel %vm1336, %v3684, 0
        %3688 = vmatprep.subr.mxu0 0.0
        %3689 = vmatpush1.msra.mxu0 %v1261
        %3690 = vmatprep.subr.mxu0 0.0
        %3691 = vmatpush1.msra.mxu0 %v1262
        %3692 = vmatprep.subr.mxu0 0.0
        %3693 = vmatpush1.msra.mxu0 %v1263
        %3694 = vmatprep.subr.mxu0 0.0
        %3695 = vmatpush1.msra.mxu0 %v1264
        %3696 = vmatprep.subr.mxu0 0.0
        %3697 = vmatpush1.msra.mxu0 %v1265
        %3698 = vmatprep.subr.mxu0 0.0
        %3699 = vmatpush1.msra.mxu0 %v1266
        %3700 = vmatprep.subr.mxu0 0.0
        %3701 = vmatpush1.msra.mxu0 %v1267
        %3702 = vmatprep.subr.mxu0 0.0
        %3703 = vmatpush1.msra.mxu0 %v1268
        %3704 = vmatprep.subr.mxu0 0.0
        %3705 = vmatpush1.msra.mxu0 %v1269
        %3706 = vmatprep.subr.mxu0 0.0
        %3707 = vmatpush1.msra.mxu0 %v1270
        %3708 = vmatprep.subr.mxu0 0.0
        %3709 = vmatpush1.msra.mxu0 %v1271
        %3710 = vmatprep.subr.mxu0 0.0
        %3711 = vmatpush1.msra.mxu0 %v1272
        %3712 = vmatprep.subr.mxu0 0.0
        %3713 = vmatpush1.msra.mxu0 %v1273
        %3714 = vmatprep.subr.mxu0 0.0
        %3715 = vmatpush1.msra.mxu0 %v1274
        %3716 = vmatprep.subr.mxu0 0.0
        %3717 = vmatpush1.msra.mxu0 %v1275
        %3718 = vmatprep.subr.mxu0 0.0
        %3719 = vmatpush1.msra.mxu0 %v1276
        %3720 = vmatprep.subr.mxu0 0.0
        %3721 = vmatpush1.msra.mxu0 %v1277
        %3722 = vmatprep.subr.mxu0 0.0
        %3723 = vmatpush1.msra.mxu0 %v1278
        %3724 = vmatprep.subr.mxu0 0.0
        %3725 = vmatpush1.msra.mxu0 %v1279
        %3726 = vmatprep.subr.mxu0 0.0
        %3727 = vmatpush1.msra.mxu0 %v1280
        %3728 = vmatprep.subr.mxu0 0.0
        %3729 = vmatpush1.msra.mxu0 %v1281
        %3730 = vmatprep.subr.mxu0 0.0
        %3731 = vmatpush1.msra.mxu0 %v1282
        %3732 = vmatprep.subr.mxu0 0.0
        %3733 = vmatpush1.msra.mxu0 0.0
        %3734 = vmatprep.subr.mxu0 0.0
        %3735 = vmatpush1.msra.mxu0 0.0
        %3736 = vmatprep.subr.mxu0 0.0
        %3737 = vmatpush1.msra.mxu0 0.0
        %3738 = vmatprep.subr.mxu0 0.0
        %3739 = vmatpush1.msra.mxu0 0.0
        %3740 = vmatprep.subr.mxu0 0.0
        %3741 = vmatpush1.msra.mxu0 0.0
        %3742 = vmatprep.subr.mxu0 0.0
        %3743 = vmatpush1.msra.mxu0 0.0
        %3744 = vmatprep.subr.mxu0 0.0
        %3745 = vmatpush1.msra.mxu0 0.0
        %3746 = vmatprep.subr.mxu0 0.0
        %3747 = vmatpush1.msra.mxu0 0.0
        %3748 = vmatprep.subr.mxu0 0.0
        %3749 = vmatpush1.msra.mxu0 0.0
        %3750 = vmatprep.subr.mxu0 0.0
        %3751 = vmatpush1.msra.mxu0 0.0
        %3752 = vmatprep.mubr.f32.mxu0 %v3686
        %3753 = vmatmul.mubr.f32.gmra.mrb[0].mxu0 %v3680
        %v3754 = vpop.f32.mrb[0].mxu0
        %v3755 = vadd.f32 0.0, %v3754
        %v3756 = vpop.f32.mrb[0].mxu0
        %3757 = vdwg.mxu0
        %v3758 = vlaneseq
        %v3759 = vshrl.u32 %v3758, 7
        %v3760 = vsub.s32 0, %v3759
        %v3761 = vrot.slane %v620, %v3760
        %v3762 = vlaneseq
        %v3763 = vshrl.u32 %v3762, 7
        %v3764 = vsub.s32 1, %v3763
        %v3765 = vrot.slane %v620, %v3764
        %v3767 = vsel %vm1336, %v3765, 0
        %3769 = vmatprep.subr.mxu0 0.0
        %3770 = vmatpush1.msra.mxu0 %v1283
        %3771 = vmatprep.subr.mxu0 0.0
        %3772 = vmatpush1.msra.mxu0 %v1284
        %3773 = vmatprep.subr.mxu0 0.0
        %3774 = vmatpush1.msra.mxu0 %v1285
        %3775 = vmatprep.subr.mxu0 0.0
        %3776 = vmatpush1.msra.mxu0 %v1286
        %3777 = vmatprep.subr.mxu0 0.0
        %3778 = vmatpush1.msra.mxu0 %v1287
        %3779 = vmatprep.subr.mxu0 0.0
        %3780 = vmatpush1.msra.mxu0 %v1288
        %3781 = vmatprep.subr.mxu0 0.0
        %3782 = vmatpush1.msra.mxu0 %v1289
        %3783 = vmatprep.subr.mxu0 0.0
        %3784 = vmatpush1.msra.mxu0 %v1290
        %3785 = vmatprep.subr.mxu0 0.0
        %3786 = vmatpush1.msra.mxu0 %v1291
        %3787 = vmatprep.subr.mxu0 0.0
        %3788 = vmatpush1.msra.mxu0 %v1292
        %3789 = vmatprep.subr.mxu0 0.0
        %3790 = vmatpush1.msra.mxu0 %v1293
        %3791 = vmatprep.subr.mxu0 0.0
        %3792 = vmatpush1.msra.mxu0 %v1294
        %3793 = vmatprep.subr.mxu0 0.0
        %3794 = vmatpush1.msra.mxu0 %v1295
        %3795 = vmatprep.subr.mxu0 0.0
        %3796 = vmatpush1.msra.mxu0 %v1296
        %3797 = vmatprep.subr.mxu0 0.0
        %3798 = vmatpush1.msra.mxu0 %v1297
        %3799 = vmatprep.subr.mxu0 0.0
        %3800 = vmatpush1.msra.mxu0 %v1298
        %3801 = vmatprep.subr.mxu0 0.0
        %3802 = vmatpush1.msra.mxu0 %v1299
        %3803 = vmatprep.subr.mxu0 0.0
        %3804 = vmatpush1.msra.mxu0 %v1300
        %3805 = vmatprep.subr.mxu0 0.0
        %3806 = vmatpush1.msra.mxu0 %v1301
        %3807 = vmatprep.subr.mxu0 0.0
        %3808 = vmatpush1.msra.mxu0 %v1302
        %3809 = vmatprep.subr.mxu0 0.0
        %3810 = vmatpush1.msra.mxu0 %v1303
        %3811 = vmatprep.subr.mxu0 0.0
        %3812 = vmatpush1.msra.mxu0 %v1304
        %3813 = vmatprep.subr.mxu0 0.0
        %3814 = vmatpush1.msra.mxu0 0.0
        %3815 = vmatprep.subr.mxu0 0.0
        %3816 = vmatpush1.msra.mxu0 0.0
        %3817 = vmatprep.subr.mxu0 0.0
        %3818 = vmatpush1.msra.mxu0 0.0
        %3819 = vmatprep.subr.mxu0 0.0
        %3820 = vmatpush1.msra.mxu0 0.0
        %3821 = vmatprep.subr.mxu0 0.0
        %3822 = vmatpush1.msra.mxu0 0.0
        %3823 = vmatprep.subr.mxu0 0.0
        %3824 = vmatpush1.msra.mxu0 0.0
        %3825 = vmatprep.subr.mxu0 0.0
        %3826 = vmatpush1.msra.mxu0 0.0
        %3827 = vmatprep.subr.mxu0 0.0
        %3828 = vmatpush1.msra.mxu0 0.0
        %3829 = vmatprep.subr.mxu0 0.0
        %3830 = vmatpush1.msra.mxu0 0.0
        %3831 = vmatprep.subr.mxu0 0.0
        %3832 = vmatpush1.msra.mxu0 0.0
        %3833 = vmatprep.mubr.f32.mxu0 %v3767
        %3834 = vmatmul.mubr.f32.gmra.mrb[0].mxu0 %v3761
        %v3835 = vpop.f32.mrb[0].mxu0
        %v3836 = vadd.f32 0.0, %v3835
        %v3837 = vpop.f32.mrb[0].mxu0
        %3838 = vdwg.mxu0
        %v3839 = vlaneseq
        %v3840 = vshrl.u32 %v3839, 7
        %v3841 = vsub.s32 0, %v3840
        %v3842 = vrot.slane %v622, %v3841
        %v3843 = vlaneseq
        %v3844 = vshrl.u32 %v3843, 7
        %v3845 = vsub.s32 1, %v3844
        %v3846 = vrot.slane %v622, %v3845
        %v3848 = vsel %vm1336, %v3846, 0
        %3850 = vmatprep.subr.mxu0 0.0
        %3851 = vmatpush1.msra.mxu0 %v1305
        %3852 = vmatprep.subr.mxu0 0.0
        %3853 = vmatpush1.msra.mxu0 %v1306
        %3854 = vmatprep.subr.mxu0 0.0
        %3855 = vmatpush1.msra.mxu0 %v1307
        %3856 = vmatprep.subr.mxu0 0.0
        %3857 = vmatpush1.msra.mxu0 %v1308
        %3858 = vmatprep.subr.mxu0 0.0
        %3859 = vmatpush1.msra.mxu0 %v1309
        %3860 = vmatprep.subr.mxu0 0.0
        %3861 = vmatpush1.msra.mxu0 %v1310
        %3862 = vmatprep.subr.mxu0 0.0
        %3863 = vmatpush1.msra.mxu0 %v1311
        %3864 = vmatprep.subr.mxu0 0.0
        %3865 = vmatpush1.msra.mxu0 %v1312
        %3866 = vmatprep.subr.mxu0 0.0
        %3867 = vmatpush1.msra.mxu0 %v1313
        %3868 = vmatprep.subr.mxu0 0.0
        %3869 = vmatpush1.msra.mxu0 %v1314
        %3870 = vmatprep.subr.mxu0 0.0
        %3871 = vmatpush1.msra.mxu0 %v1315
        %3872 = vmatprep.subr.mxu0 0.0
        %3873 = vmatpush1.msra.mxu0 %v1316
        %3874 = vmatprep.subr.mxu0 0.0
        %3875 = vmatpush1.msra.mxu0 %v1317
        %3876 = vmatprep.subr.mxu0 0.0
        %3877 = vmatpush1.msra.mxu0 %v1318
        %3878 = vmatprep.subr.mxu0 0.0
        %3879 = vmatpush1.msra.mxu0 %v1319
        %3880 = vmatprep.subr.mxu0 0.0
        %3881 = vmatpush1.msra.mxu0 %v1320
        %3882 = vmatprep.subr.mxu0 0.0
        %3883 = vmatpush1.msra.mxu0 %v1321
        %3884 = vmatprep.subr.mxu0 0.0
        %3885 = vmatpush1.msra.mxu0 %v1322
        %3886 = vmatprep.subr.mxu0 0.0
        %3887 = vmatpush1.msra.mxu0 %v1323
        %3888 = vmatprep.subr.mxu0 0.0
        %3889 = vmatpush1.msra.mxu0 %v1324
        %3890 = vmatprep.subr.mxu0 0.0
        %3891 = vmatpush1.msra.mxu0 %v1325
        %3892 = vmatprep.subr.mxu0 0.0
        %3893 = vmatpush1.msra.mxu0 %v1326
        %3894 = vmatprep.subr.mxu0 0.0
        %3895 = vmatpush1.msra.mxu0 0.0
        %3896 = vmatprep.subr.mxu0 0.0
        %3897 = vmatpush1.msra.mxu0 0.0
        %3898 = vmatprep.subr.mxu0 0.0
        %3899 = vmatpush1.msra.mxu0 0.0
        %3900 = vmatprep.subr.mxu0 0.0
        %3901 = vmatpush1.msra.mxu0 0.0
        %3902 = vmatprep.subr.mxu0 0.0
        %3903 = vmatpush1.msra.mxu0 0.0
        %3904 = vmatprep.subr.mxu0 0.0
        %3905 = vmatpush1.msra.mxu0 0.0
        %3906 = vmatprep.subr.mxu0 0.0
        %3907 = vmatpush1.msra.mxu0 0.0
        %3908 = vmatprep.subr.mxu0 0.0
        %3909 = vmatpush1.msra.mxu0 0.0
        %3910 = vmatprep.subr.mxu0 0.0
        %3911 = vmatpush1.msra.mxu0 0.0
        %3912 = vmatprep.subr.mxu0 0.0
        %3913 = vmatpush1.msra.mxu0 0.0
        %3914 = vmatprep.mubr.f32.mxu0 %v3848
        %3915 = vmatmul.mubr.f32.gmra.mrb[0].mxu0 %v3842
        %v3916 = vpop.f32.mrb[0].mxu0
        %v3917 = vadd.f32 0.0, %v3916
        %v3918 = vpop.f32.mrb[0].mxu0
        %3919 = vdwg.mxu0
        %vm3920 = vcmask 1040384
        %v3921 = vsel %vm3920, %v1406, 0.0
        %v3922 = vsel %vm3920, %v1487, 0.0
        %v3923 = vadd.f32 %v3921, %v3922
        %v3924 = vsel %vm3920, %v1568, 0.0
        %v3925 = vadd.f32 %v3923, %v3924
        %v3926 = vsel %vm3920, %v1649, 0.0
        %v3927 = vadd.f32 %v3925, %v3926
        %v3928 = vsel %vm3920, %v1730, 0.0
        %v3929 = vadd.f32 %v3927, %v3928
        %v3930 = vsel %vm3920, %v1811, 0.0
        %v3931 = vadd.f32 %v3929, %v3930
        %v3932 = vsel %vm3920, %v1892, 0.0
        %v3933 = vadd.f32 %v3931, %v3932
        %v3934 = vsel %vm3920, %v1973, 0.0
        %v3935 = vadd.f32 %v3933, %v3934
        %v3936 = vsel %vm3920, %v2054, 0.0
        %v3937 = vadd.f32 %v3935, %v3936
        %v3938 = vsel %vm3920, %v2135, 0.0
        %v3939 = vadd.f32 %v3937, %v3938
        %v3940 = vsel %vm3920, %v2216, 0.0
        %v3941 = vadd.f32 %v3939, %v3940
        %v3942 = vsel %vm3920, %v2297, 0.0
        %v3943 = vadd.f32 %v3941, %v3942
        %v3944 = vsel %vm3920, %v2378, 0.0
        %v3945 = vadd.f32 %v3943, %v3944
        %v3946 = vsel %vm3920, %v2459, 0.0
        %v3947 = vadd.f32 %v3945, %v3946
        %v3948 = vsel %vm3920, %v2540, 0.0
        %v3949 = vadd.f32 %v3947, %v3948
        %v3950 = vsel %vm3920, %v2621, 0.0
        %v3951 = vadd.f32 %v3949, %v3950
        %v3952 = vsel %vm3920, %v2702, 0.0
        %v3953 = vadd.f32 %v3951, %v3952
        %v3954 = vsel %vm3920, %v2783, 0.0
        %v3955 = vadd.f32 %v3953, %v3954
        %v3956 = vsel %vm3920, %v2864, 0.0
        %v3957 = vadd.f32 %v3955, %v3956
        %v3958 = vsel %vm3920, %v2945, 0.0
        %v3959 = vadd.f32 %v3957, %v3958
        %v3960 = vsel %vm3920, %v3026, 0.0
        %v3961 = vadd.f32 %v3959, %v3960
        %v3962 = vsel %vm3920, %v3107, 0.0
        %v3963 = vadd.f32 %v3961, %v3962
        %v3964 = vsel %vm3920, %v3188, 0.0
        %v3965 = vadd.f32 %v3963, %v3964
        %v3966 = vsel %vm3920, %v3269, 0.0
        %v3967 = vadd.f32 %v3965, %v3966
        %v3968 = vsel %vm3920, %v3350, 0.0
        %v3969 = vadd.f32 %v3967, %v3968
        %v3970 = vsel %vm3920, %v3431, 0.0
        %v3971 = vadd.f32 %v3969, %v3970
        %v3972 = vsel %vm3920, %v3512, 0.0
        %v3973 = vadd.f32 %v3971, %v3972
        %v3974 = vsel %vm3920, %v3593, 0.0
        %v3975 = vadd.f32 %v3973, %v3974
        %v3976 = vsel %vm3920, %v3674, 0.0
        %v3977 = vadd.f32 %v3975, %v3976
        %v3978 = vsel %vm3920, %v3755, 0.0
        %v3979 = vadd.f32 %v3977, %v3978
        %v3980 = vsel %vm3920, %v3836, 0.0
        %v3981 = vadd.f32 %v3979, %v3980
        %v3982 = vsel %vm3920, %v3917, 0.0
        %v3983 = vadd.f32 %v3981, %v3982
        %v3984 = vld [vmem:[%s4] sm:$0x1]
        %v3985 = vadd.f32 %v3983, %v3984
        %3986 = vst [vmem:[%s216] sm:$0x1] %v3985
        %s3987 = sand.u32 %s137, 1
        %s3988 = scalar_lea.sflag [#allocation3], %s3987
        %s3989 = sand.u32 %s137, 1
        %s3990 = scalar_lea.vmem [#allocation2], %s3989
        // Predicated region
        $region41: #{forward.1} parent=39 // pred_check
          %p3991 = pneg %p147
        $region42: #{forward.1} parent=39 // pred_check_branch
          %3993 = sbr.rel (%p3991) target = $region44
        $region43: #{forward.1} parent=39 // pred_region
          %s3995 = ssub.s32 16, 16
          %3996 = vsyncadd %s3988, %s3995
          %s3997 = smul.addr %s19, 16
          %s3998 = scalar_lea.hbm %s5, %s3997
          %s4000 = sshll.u32 %s3990, 4
          %s4001 = int_to_ptr.vmem [resolvable:$true] %s4000
          %4003 = dma.vmem_to_hbm [thread:$0]  %s4001, 16, %s3998, %s3988
        $region44: #{forward.1} parent=39 // pred_fallthru
          _
      $region40: #{forward.1} parent=5 // pred_fallthru
        _
      %p4004 = scmp.le.s32.totalorder 2, %s14
      // Predicated region
      $region45: #{forward.1} parent=5 // pred_check
        %p4005 = pneg %p4004
      $region46: #{forward.1} parent=5 // pred_check_branch
        %4007 = sbr.rel (%p4005) target = $region48
      $region47: #{forward.1} parent=5 // pred_region
        %s4008 = ssub.s32 %s14, 2
        // Predicated region
        $region49: #{forward.1} parent=47 // pred_check
          %p4009 = pneg %p153
        $region50: #{forward.1} parent=47 // pred_check_branch
          %4011 = sbr.rel (%p4009) target = $region52
        $region51: #{forward.1} parent=47 // pred_region
          %s4012 = sand.u32 %s138, 1
          %s4013 = scalar_lea.sflag [#allocation3], %s4012
          %s4014 = sand.u32 %s138, 1
          %s4015 = scalar_lea.vmem [#allocation2], %s4014
          %4016 = dma.done %s4013, 16
        $region52: #{forward.1} parent=47 // pred_fallthru
          _
      $region48: #{forward.1} parent=5 // pred_fallthru
        _
    $region6: #{forward.1} parent=1 // loop_footer
      %s18 = sadd.s32 1, %s14
    $region7: #{forward.1} parent=1 // loop_footer_branch
      %13 = sbr.rel target = $region3
    $region8: #{forward.1} parent=1 // loop_exit
      _
    %4017 = vsyncpa [#allocation3], 1
    %s4018 = scalar_lea.sflag [#allocation3], 1
    %4019 = vsyncpa %s4018, 1

</llo_original>
